<compile_context>
chip_gen: v6e
topology: v6e:2x2x1
jax: 0.10.0
libtpu: 0.0.40
codegen_flags: <defaults>
</compile_context>

<pallas_src>
import numpy as np
import jax
import jax.numpy as jnp
from jax.experimental import pallas as pl
from jax.experimental.pallas import tpu as pltpu


def _cdiv(a, b):
    return -(-a // b)


def _tpu_flags():
    """Per-generation choices: bf16 elementwise tail + conv1-on-MXU only where the VPU
    has a bf16 path (v6e / v7x); f32 tail + VPU conv1 and a smaller row cap elsewhere."""
    try:
        kind = jax.devices()[0].device_kind.lower()
    except Exception:
        kind = ""
    newer = any(s in kind for s in ("v6", "v7", "7x"))
    ew_dtype = jnp.bfloat16 if newer else jnp.float32
    conv1_on_mxu = newer
    row_cap = 1024 if newer else 512
    return ew_dtype, conv1_on_mxu, row_cap


# ----------------------------- PCN encoder kernel -----------------------------

def _make_pcn_kernel(G, N, F, ew_dtype, conv1_on_mxu):
    R = G * N

    def kernel(pc_ref, w1_ref, b1_ref, w2_ref, b2_ref, w3p_ref, w3g_ref, b3_ref,
               w4_ref, b4_ref, out_ref):
        x = pc_ref[...].reshape(R, F)                                     # (R, F) f32

        # conv1 (F -> 128)
        w1 = w1_ref[...]
        if conv1_on_mxu:
            # v6e/v7x: VALU is the saturating slot, MXU has slack -> K-padded MXU matmul.
            h1 = jnp.dot(x.astype(w1.dtype), w1, preferred_element_type=jnp.float32)
        else:
            # v5e: MXU is the bottleneck -> F broadcast FMAs on the VPU.
            xf = x.astype(jnp.float32)
            w1f = w1.astype(jnp.float32)
            h1 = xf[:, 0:1] * w1f[0:1, :]
            for f in range(1, F):
                h1 = h1 + xf[:, f:f + 1] * w1f[f:f + 1, :]
        h1 = jnp.maximum(h1.astype(ew_dtype) + b1_ref[...], 0)           # (R, 128) ew

        # conv2 (128 -> 256): bf16 MXU operands, f32 accumulate, ew elementwise tail.
        w2 = w2_ref[...]
        h2 = jnp.dot(h1.astype(w2.dtype), w2, preferred_element_type=jnp.float32)
        h2 = jnp.maximum(h2.astype(ew_dtype) + b2_ref[...], 0)           # (R, 256) ew

        # per-cloud global max over points
        c2 = h2.shape[-1]
        g = jnp.max(h2.reshape(G, N, c2), axis=1)                        # (G, 256) ew

        # conv3 on cat([global, per-point]) == split-weight matmul; b3 folded into the
        # cheap (G, 512) global term so only one (R, 512) broadcast-add remains.
        # TODO(synk): when loading a real torch checkpoint, conv3's (C_out, C_in, 1) weight
        # must be transposed and split row-wise into w3g / w3p in the torch cat order.
        w3p = w3p_ref[...]
        w3g = w3g_ref[...]
        h3p = jnp.dot(h2.astype(w3p.dtype), w3p, preferred_element_type=jnp.float32)  # (R,512) f32
        g3 = jnp.dot(g.astype(w3g.dtype), w3g, preferred_element_type=jnp.float32)    # (G,512) f32
        gb = (g3 + b3_ref[...]).astype(ew_dtype)                         # (G, 512) ew
        c3 = h3p.shape[-1]
        h3 = jnp.maximum(h3p.reshape(G, N, c3).astype(ew_dtype) + gb[:, None, :], 0)  # (G,N,512)

        # conv4 (512 -> latent, zero-padded to 128 lanes).  Bias commutes with the
        # per-cloud max, so add it to the (G, 128) result instead of the (R, 128) one.
        w4 = w4_ref[...]
        h4 = jnp.dot(h3.reshape(R, c3).astype(w4.dtype), w4,
                     preferred_element_type=jnp.float32)                 # (R, 128p) f32
        out_ref[...] = jnp.max(h4.reshape(G, N, h4.shape[-1]), axis=1) + b4_ref[...]   # (G, 128p)

    return kernel


# ----------------------------- primitive MLP kernel -----------------------------

def _make_mlp_kernel(n_hidden):
    def kernel(*refs):
        prim_ref = refs[0]
        wrefs = refs[1:1 + 2 * (n_hidden + 1)]
        out_ref = refs[-1]
        h = prim_ref[...].astype(jnp.float32)
        for li in range(n_hidden):
            w = wrefs[2 * li][...]
            b = wrefs[2 * li + 1][...]
            h = jnp.maximum(jnp.dot(h, w, preferred_element_type=jnp.float32) + b, 0.0)
        out_ref[...] = jnp.dot(h, wrefs[-2][...],
                               preferred_element_type=jnp.float32) + wrefs[-1][...]
    return kernel


# ----------------------------- pallas_call wrappers -----------------------------

def _pad_cols(w, b, width):
    """Zero-pad a linear layer's output channels to `width` (lane-dense stores)."""
    pad = width - w.shape[1]
    if pad > 0:
        w = jnp.pad(w, ((0, 0), (0, pad)))
        b = jnp.pad(b, ((0, 0), (0, pad)))
    return w, b


def pcn_encode(pc, pcn, *, mxu_dtype=jnp.bfloat16, ew_dtype=jnp.float32,
               conv1_on_mxu=False, row_cap=512):
    """pc: (M, N, F) f32 point clouds -> (M, latent) f32 PCN latents."""
    M, N, F = pc.shape
    latent = pcn["w4"].shape[1]
    out_pad = max(128, _cdiv(latent, 128) * 128)

    # weight prep (constant-folded at compile time under jit with closed-over params)
    w1 = pcn["w1"].astype(mxu_dtype if conv1_on_mxu else jnp.float32)
    b1 = pcn["b1"].astype(ew_dtype)
    w2 = pcn["w2"].astype(mxu_dtype)
    b2 = pcn["b2"].astype(ew_dtype)
    w3p = pcn["w3p"].astype(mxu_dtype)
    w3g = pcn["w3g"].astype(mxu_dtype)
    b3 = pcn["b3"].astype(jnp.float32)
    w4p, b4p = _pad_cols(pcn["w4"], pcn["b4"], out_pad)
    w4p = w4p.astype(mxu_dtype)
    b4p = b4p.astype(jnp.float32)
    weights = [w1, b1, w2, b2, w3p, w3g, b3, w4p, b4p]

    # Rows per grid step: fill the MXU M dim and amortize per-step RHS pushes, but keep
    # the grid length >= 2 (and preferably even) so the "parallel" axis feeds both
    # v7x TensorCores.
    G = max(1, min(M, row_cap // max(N, 1)))
    if M >= 2:
        G = max(1, min(G, M // 2))
    nb = _cdiv(M, G)
    if nb > 1 and nb % 2 == 1:
        G = _cdiv(M, nb + 1)
        nb = _cdiv(M, G)
    M_pad = nb * G
    if M_pad != M:
        # padded clouds only pollute their own (discarded) output rows, never real ones
        pc = jnp.pad(pc, ((0, M_pad - M), (0, 0), (0, 0)))
    pc = pc.reshape(nb, G, N, F)

    in_specs = [pl.BlockSpec((None, G, N, F), lambda i: (i, 0, 0, 0))]
    for a in weights:
        # TODO(synk): pipeline_mode=pl.Buffered(1) on these grid-invariant weights would
        # reclaim ~1 MB of double-buffered VMEM (most useful on v7x's 64 MiB).
        in_specs.append(pl.BlockSpec(a.shape, lambda i, _nd=a.ndim: (0,) * _nd))
    out_specs = pl.BlockSpec((None, G, out_pad), lambda i: (i, 0, 0))
    out_shape = jax.ShapeDtypeStruct((nb, G, out_pad), jnp.float32)

    # explicit VMEM budget: raises v5e's 16 MiB scoped default, stays inside v7x's 64 MiB
    weight_bytes = sum(int(a.size) * a.dtype.itemsize for a in weights)
    act_bytes = G * N * (128 + 256 + 2 * 512 + out_pad) * 4
    vmem_limit = int(2 * (weight_bytes + G * N * F * 4 + G * out_pad * 4)
                     + act_bytes + (8 << 20))
    vmem_limit = max(32 << 20, min(vmem_limit, 48 << 20))

    hid, c2, c3 = pcn["w2"].shape[0], pcn["w2"].shape[1], pcn["w3p"].shape[1]
    flops = 2 * M_pad * N * (F * hid + hid * c2 + c2 * c3 + c3 * out_pad) + 2 * M_pad * c2 * c3
    bytes_accessed = int(pc.size * 4 + weight_bytes + M_pad * out_pad * 4)
    cost = pl.CostEstimate(flops=int(flops), transcendentals=0, bytes_accessed=bytes_accessed)

    kernel = _make_pcn_kernel(G, N, F, ew_dtype, conv1_on_mxu)
    blocks = pl.pallas_call(
        kernel,
        grid=(nb,),
        in_specs=in_specs,
        out_specs=out_specs,
        out_shape=out_shape,
        compiler_params=pltpu.CompilerParams(
            dimension_semantics=("parallel",), vmem_limit_bytes=vmem_limit),
        cost_estimate=cost,
    )(pc, *weights)
    return blocks.reshape(M_pad, out_pad)[:M, :latent]


def mlp_encode(prim, mlp):
    """prim: (B, P) f32 -> (B, out_dim) f32.  One-shot tiny pallas_call (kept OUT of the
    PCN grid: fusing it there duplicated O(nb*B) FLOPs and replicated HBM writeback)."""
    B, P = prim.shape
    out_dim = mlp[-1][0].shape[1]
    out_pad = max(128, _cdiv(out_dim, 128) * 128)
    flat = []
    for li, (w, b) in enumerate(mlp):
        if li == len(mlp) - 1:
            w, b = _pad_cols(w, b, out_pad)
        flat += [w.astype(jnp.float32), b.astype(jnp.float32)]

    in_specs = [pl.BlockSpec((B, P), lambda i: (0, 0))]
    for a in flat:
        in_specs.append(pl.BlockSpec(a.shape, lambda i, _nd=a.ndim: (0,) * _nd))

    out = pl.pallas_call(
        _make_mlp_kernel(len(mlp) - 1),
        grid=(1,),
        in_specs=in_specs,
        out_specs=pl.BlockSpec((B, out_pad), lambda i: (0, 0)),
        out_shape=jax.ShapeDtypeStruct((B, out_pad), jnp.float32),
        compiler_params=pltpu.CompilerParams(dimension_semantics=("arbitrary",)),
    )(prim, *flat)
    return out[:, :out_dim]


# ----------------------------- parameter init -----------------------------

def _linear_init(key, fan_in, fan_out):
    kw, kb = jax.random.split(key)
    lim = 1.0 / np.sqrt(fan_in)
    w = jax.random.uniform(kw, (fan_in, fan_out), jnp.float32, -lim, lim)
    b = jax.random.uniform(kb, (1, fan_out), jnp.float32, -lim, lim)
    return w, b


def init_params(key, feature_dim, latent_dim, primitive_dim, n_layers,
                mlp_hidden=256, mlp_out=10):
    k_pcn, k_mlp = jax.random.split(key)

    # PCN encoder (1x1 Conv1d weights stored as (C_in, C_out))
    ks = jax.random.split(k_pcn, 5)
    w1, b1 = _linear_init(ks[0], feature_dim, 128)
    w2, b2 = _linear_init(ks[1], 128, 256)
    w3g, _ = _linear_init(ks[2], 256, 512)   # rows acting on the broadcast global feature
    w3p, b3 = _linear_init(ks[3], 256, 512)  # rows acting on the per-point feature
    w4, b4 = _linear_init(ks[4], 512, latent_dim)
    pcn = dict(w1=w1, b1=b1, w2=w2, b2=b2, w3p=w3p, w3g=w3g, b3=b3, w4=w4, b4=b4)

    # primitive MLP: n_layers hidden (Linear+ReLU), then Linear(hidden -> 10)
    mlp = []
    km = jax.random.split(k_mlp, n_layers + 1)
    in_d = primitive_dim
    for li in range(n_layers):
        mlp.append(_linear_init(km[li], in_d, mlp_hidden))
        in_d = mlp_hidden
    mlp.append(_linear_init(km[n_layers], in_d, mlp_out))

    return {"pcn": pcn, "mlp": mlp}


# ----------------------------- full forward -----------------------------

def latent_policy_encoder_forward(obs, t, params, n_particles, feature_dim,
                                  *, mxu_dtype=jnp.bfloat16, ew_dtype=jnp.float32,
                                  conv1_on_mxu=False, row_cap=512):
    """Batched (obs.ndim == 2) forward pass of LatentPolicyEncoder."""
    B = obs.shape[0]
    F, N = feature_dim, n_particles
    # cur / prev occupy contiguous halves of obs[:, :2*F*N], each stored feature-major
    # (matches torch .reshape(B, F, -1)); a single reshape yields (cur, prev) interleaved.
    pc = obs[:, :2 * F * N].reshape(B * 2, F, N).transpose(0, 2, 1).astype(jnp.float32)  # (2B,N,F)
    prim = obs[:, 2 * F * N:].astype(jnp.float32)                                        # (B, P)

    pcn_latent = pcn_encode(pc, params["pcn"], mxu_dtype=mxu_dtype, ew_dtype=ew_dtype,
                            conv1_on_mxu=conv1_on_mxu, row_cap=row_cap)   # (2B, L)
    prim_hidden = mlp_encode(prim, params["mlp"])                         # (B, 10)

    pcn_latent = pcn_latent.reshape(B, 2, -1)
    cur_h, prev_h = pcn_latent[:, 0, :], pcn_latent[:, 1, :]
    latent = jnp.concatenate([prim_hidden, cur_h, prev_h], axis=1)        # (B, 10 + 2*latent)
    # TODO(synk): PyTorch returns latent.double(); TPU has no native f64, cast is host-side.
    return latent, t


# ----------------------------- plain-XLA reference (correctness check) -----------------------------

def _reference_forward(obs, params, n_particles, feature_dim, *, mxu_dtype=jnp.bfloat16,
                       ew_dtype=jnp.float32, conv1_on_mxu=False):
    B = obs.shape[0]
    F, N = feature_dim, n_particles
    pc = obs[:, :2 * F * N].reshape(B * 2, F, N).transpose(0, 2, 1).astype(jnp.float32)
    prim = obs[:, 2 * F * N:].astype(jnp.float32)
    p = params["pcn"]
    mm = lambda a, w: jnp.einsum('mnc,cd->mnd', a.astype(mxu_dtype), w.astype(mxu_dtype),
                                 preferred_element_type=jnp.float32)
    if conv1_on_mxu:
        h1 = mm(pc, p["w1"])
    else:
        h1 = jnp.einsum('mnf,fc->mnc', pc, p["w1"], precision=jax.lax.Precision.HIGHEST)
    h1 = jnp.maximum(h1.astype(ew_dtype) + p["b1"].astype(ew_dtype), 0)
    h2 = jnp.maximum(mm(h1, p["w2"]).astype(ew_dtype) + p["b2"].astype(ew_dtype), 0)
    g = jnp.max(h2, axis=1, keepdims=True)
    h3p = mm(h2, p["w3p"])
    gb = (mm(g, p["w3g"]) + p["b3"]).astype(ew_dtype)
    h3 = jnp.maximum(h3p.astype(ew_dtype) + gb, 0)
    h4 = mm(h3, p["w4"])
    lat = (jnp.max(h4, axis=1) + p["b4"]).reshape(B, 2, -1)
    cur_h, prev_h = lat[:, 0], lat[:, 1]
    h = prim
    for li, (w, b) in enumerate(params["mlp"]):
        h = jnp.dot(h, w, precision=jax.lax.Precision.HIGHEST) + b
        if li < len(params["mlp"]) - 1:
            h = jnp.maximum(h, 0.0)
    return jnp.concatenate([h, cur_h, prev_h], axis=1)


# ----------------------------- demo -----------------------------

if __name__ == "__main__":
    n_particles = 64
    n_layers = 2
    feature_dim = 3
    hidden_dim = 32       # module arg; unused by forward (the module's MLP hidden is fixed at 256)
    latent_dim = 32
    primitive_dim = 14
    batch = 2

    obs_dim = 2 * feature_dim * n_particles + primitive_dim   # 398

    key = jax.random.PRNGKey(0)
    k_obs, k_params = jax.random.split(key)
    obs = jax.random.normal(k_obs, (batch, obs_dim), jnp.float32)
    params = init_params(k_params, feature_dim, latent_dim, primitive_dim, n_layers)
    t = jnp.float32(3.0)

    ew_dtype, conv1_on_mxu, row_cap = _tpu_flags()

    fwd = jax.jit(lambda o, tt: latent_policy_encoder_forward(
        o, tt, params, n_particles, feature_dim,
        ew_dtype=ew_dtype, conv1_on_mxu=conv1_on_mxu, row_cap=row_cap))
    latent, t_out = fwd(obs, t)
    jax.block_until_ready(latent)

    # plain-XLA reference with the same MXU / elementwise dtype choices
    ref = jax.jit(lambda o: _reference_forward(
        o, params, n_particles, feature_dim,
        ew_dtype=ew_dtype, conv1_on_mxu=conv1_on_mxu))(obs)
    jax.block_until_ready(ref)

    # Mirror the `.double()` cast on the host (output dtype float64).
    latent64 = np.asarray(latent, dtype=np.float64)

    expected_out_dim = latent_dim * 2 + 10
    assert latent64.shape == (batch, expected_out_dim), latent64.shape
    assert latent64.dtype == np.float64
    assert np.all(np.isfinite(latent64))
    assert float(t_out) == 3.0
    max_err = float(np.max(np.abs(np.asarray(ref, np.float64) - latent64)))
    assert max_err < 5e-2, f"max abs err vs reference: {max_err}"

    print("KERNEL_OK")
</pallas_src>

<mosaic_0001>
module attributes {stable_mosaic.version = 11 : i64} {
  func.func @kernel(%arg0: i32, %arg1: memref<1x2x64x3xf32, #tpu.memory_space<vmem>>, %arg2: memref<3x128xf32, #tpu.memory_space<vmem>>, %arg3: memref<1x128xf32, #tpu.memory_space<vmem>>, %arg4: memref<128x256xbf16, #tpu.memory_space<vmem>>, %arg5: memref<1x256xf32, #tpu.memory_space<vmem>>, %arg6: memref<256x512xbf16, #tpu.memory_space<vmem>>, %arg7: memref<256x512xbf16, #tpu.memory_space<vmem>>, %arg8: memref<1x512xf32, #tpu.memory_space<vmem>>, %arg9: memref<512x128xbf16, #tpu.memory_space<vmem>>, %arg10: memref<1x128xf32, #tpu.memory_space<vmem>>, %arg11: memref<1x2x128xf32, #tpu.memory_space<vmem>>) attributes {dimension_semantics = [#tpu.dimension_semantics<parallel>], iteration_bounds = array<i64: 2>, scalar_prefetch = 0 : i64, scratch_operands = 0 : i64, tpu.core_type = #tpu.core_type<tc>, window_params = [{transform_indices = @transform_0, window_bounds = array<i64: 1, 2, 64, 3>}, {pipeline_mode = #tpu.pipeline_mode<synchronous>, transform_indices = @transform_1, window_bounds = array<i64: 3, 128>}, {pipeline_mode = #tpu.pipeline_mode<synchronous>, transform_indices = @transform_2, window_bounds = array<i64: 1, 128>}, {pipeline_mode = #tpu.pipeline_mode<synchronous>, transform_indices = @transform_3, window_bounds = array<i64: 128, 256>}, {pipeline_mode = #tpu.pipeline_mode<synchronous>, transform_indices = @transform_4, window_bounds = array<i64: 1, 256>}, {pipeline_mode = #tpu.pipeline_mode<synchronous>, transform_indices = @transform_5, window_bounds = array<i64: 256, 512>}, {pipeline_mode = #tpu.pipeline_mode<synchronous>, transform_indices = @transform_6, window_bounds = array<i64: 256, 512>}, {pipeline_mode = #tpu.pipeline_mode<synchronous>, transform_indices = @transform_7, window_bounds = array<i64: 1, 512>}, {pipeline_mode = #tpu.pipeline_mode<synchronous>, transform_indices = @transform_8, window_bounds = array<i64: 512, 128>}, {pipeline_mode = #tpu.pipeline_mode<synchronous>, transform_indices = @transform_9, window_bounds = array<i64: 1, 128>}, {transform_indices = @transform_10, window_bounds = array<i64: 1, 2, 128>}]} {
    %c0 = arith.constant 0 : index
    %c0_0 = arith.constant 0 : index
    %c0_1 = arith.constant 0 : index
    %c0_2 = arith.constant 0 : index
    %0 = vector.load %arg1[%c0, %c0_0, %c0_1, %c0_2] : memref<1x2x64x3xf32, #tpu.memory_space<vmem>>, vector<1x2x64x3xf32>
    %1 = vector.shape_cast %0 : vector<1x2x64x3xf32> to vector<2x64x3xf32>
    %2 = vector.shape_cast %1 : vector<2x64x3xf32> to vector<128x3xf32>
    %c0_3 = arith.constant 0 : index
    %c0_4 = arith.constant 0 : index
    %3 = vector.load %arg2[%c0_3, %c0_4] : memref<3x128xf32, #tpu.memory_space<vmem>>, vector<3x128xf32>
    %4 = vector.extract_strided_slice %2 {offsets = [0, 0], sizes = [128, 1], strides = [1, 1]} : vector<128x3xf32> to vector<128x1xf32>
    %5 = vector.extract_strided_slice %3 {offsets = [0, 0], sizes = [1, 128], strides = [1, 1]} : vector<3x128xf32> to vector<1x128xf32>
    %6 = vector.broadcast %4 : vector<128x1xf32> to vector<128x128xf32>
    %7 = vector.broadcast %5 : vector<1x128xf32> to vector<128x128xf32>
    %8 = arith.mulf %6, %7 : vector<128x128xf32>
    %9 = vector.extract_strided_slice %2 {offsets = [0, 1], sizes = [128, 1], strides = [1, 1]} : vector<128x3xf32> to vector<128x1xf32>
    %10 = vector.extract_strided_slice %3 {offsets = [1, 0], sizes = [1, 128], strides = [1, 1]} : vector<3x128xf32> to vector<1x128xf32>
    %11 = vector.broadcast %9 : vector<128x1xf32> to vector<128x128xf32>
    %12 = vector.broadcast %10 : vector<1x128xf32> to vector<128x128xf32>
    %13 = arith.mulf %11, %12 : vector<128x128xf32>
    %14 = arith.addf %8, %13 : vector<128x128xf32>
    %15 = vector.extract_strided_slice %2 {offsets = [0, 2], sizes = [128, 1], strides = [1, 1]} : vector<128x3xf32> to vector<128x1xf32>
    %16 = vector.extract_strided_slice %3 {offsets = [2, 0], sizes = [1, 128], strides = [1, 1]} : vector<3x128xf32> to vector<1x128xf32>
    %17 = vector.broadcast %15 : vector<128x1xf32> to vector<128x128xf32>
    %18 = vector.broadcast %16 : vector<1x128xf32> to vector<128x128xf32>
    %19 = arith.mulf %17, %18 : vector<128x128xf32>
    %20 = arith.addf %14, %19 : vector<128x128xf32>
    %c0_5 = arith.constant 0 : index
    %c0_6 = arith.constant 0 : index
    %21 = vector.load %arg3[%c0_5, %c0_6] : memref<1x128xf32, #tpu.memory_space<vmem>>, vector<1x128xf32>
    %22 = vector.broadcast %21 : vector<1x128xf32> to vector<128x128xf32>
    %23 = arith.addf %20, %22 : vector<128x128xf32>
    %cst = arith.constant 0.000000e+00 : f32
    %24 = vector.broadcast %cst : f32 to vector<128x128xf32>
    %25 = arith.maximumf %23, %24 : vector<128x128xf32>
    %c0_7 = arith.constant 0 : index
    %c0_8 = arith.constant 0 : index
    %26 = vector.load %arg4[%c0_7, %c0_8] : memref<128x256xbf16, #tpu.memory_space<vmem>>, vector<128x256xbf16>
    %27 = arith.truncf %25 : vector<128x128xf32> to vector<128x128xbf16>
    %cst_9 = arith.constant dense<0.000000e+00> : vector<128x256xf32>
    %28 = tpu.matmul %27, %26, %cst_9 {dimension_numbers = #tpu.dot_dimension_numbers<[1], [0], [0], [1], [0, 0, 1, 1], [], []>} : vector<128x128xbf16>, vector<128x256xbf16>, vector<128x256xf32> -> vector<128x256xf32>
    %c0_10 = arith.constant 0 : index
    %c0_11 = arith.constant 0 : index
    %29 = vector.load %arg5[%c0_10, %c0_11] : memref<1x256xf32, #tpu.memory_space<vmem>>, vector<1x256xf32>
    %30 = vector.broadcast %29 : vector<1x256xf32> to vector<128x256xf32>
    %31 = arith.addf %28, %30 : vector<128x256xf32>
    %cst_12 = arith.constant 0.000000e+00 : f32
    %32 = vector.broadcast %cst_12 : f32 to vector<128x256xf32>
    %33 = arith.maximumf %31, %32 : vector<128x256xf32>
    %34 = vector.shape_cast %33 : vector<128x256xf32> to vector<2x64x256xf32>
    %cst_13 = arith.constant dense<0xFF800000> : vector<2x256xf32>
    %35 = vector.multi_reduction <maximumf>, %34, %cst_13 [1] : vector<2x64x256xf32> to vector<2x256xf32>
    %c0_14 = arith.constant 0 : index
    %c0_15 = arith.constant 0 : index
    %36 = vector.load %arg6[%c0_14, %c0_15] : memref<256x512xbf16, #tpu.memory_space<vmem>>, vector<256x512xbf16>
    %c0_16 = arith.constant 0 : index
    %c0_17 = arith.constant 0 : index
    %37 = vector.load %arg7[%c0_16, %c0_17] : memref<256x512xbf16, #tpu.memory_space<vmem>>, vector<256x512xbf16>
    %38 = arith.truncf %33 : vector<128x256xf32> to vector<128x256xbf16>
    %cst_18 = arith.constant dense<0.000000e+00> : vector<128x512xf32>
    %39 = tpu.matmul %38, %36, %cst_18 {dimension_numbers = #tpu.dot_dimension_numbers<[1], [0], [0], [1], [0, 0, 1, 1], [], []>} : vector<128x256xbf16>, vector<256x512xbf16>, vector<128x512xf32> -> vector<128x512xf32>
    %40 = arith.truncf %35 : vector<2x256xf32> to vector<2x256xbf16>
    %cst_19 = arith.constant dense<0.000000e+00> : vector<2x512xf32>
    %41 = tpu.matmul %40, %37, %cst_19 {dimension_numbers = #tpu.dot_dimension_numbers<[1], [0], [0], [1], [0, 0, 1, 1], [], []>} : vector<2x256xbf16>, vector<256x512xbf16>, vector<2x512xf32> -> vector<2x512xf32>
    %c0_20 = arith.constant 0 : index
    %c0_21 = arith.constant 0 : index
    %42 = vector.load %arg8[%c0_20, %c0_21] : memref<1x512xf32, #tpu.memory_space<vmem>>, vector<1x512xf32>
    %43 = vector.broadcast %42 : vector<1x512xf32> to vector<2x512xf32>
    %44 = arith.addf %41, %43 : vector<2x512xf32>
    %45 = vector.shape_cast %39 : vector<128x512xf32> to vector<2x64x512xf32>
    %46 = vector.shape_cast %44 : vector<2x512xf32> to vector<2x1x512xf32>
    %47 = vector.broadcast %46 : vector<2x1x512xf32> to vector<2x64x512xf32>
    %48 = arith.addf %45, %47 : vector<2x64x512xf32>
    %cst_22 = arith.constant 0.000000e+00 : f32
    %49 = vector.broadcast %cst_22 : f32 to vector<2x64x512xf32>
    %50 = arith.maximumf %48, %49 : vector<2x64x512xf32>
    %c0_23 = arith.constant 0 : index
    %c0_24 = arith.constant 0 : index
    %51 = vector.load %arg9[%c0_23, %c0_24] : memref<512x128xbf16, #tpu.memory_space<vmem>>, vector<512x128xbf16>
    %52 = vector.shape_cast %50 : vector<2x64x512xf32> to vector<128x512xf32>
    %53 = arith.truncf %52 : vector<128x512xf32> to vector<128x512xbf16>
    %cst_25 = arith.constant dense<0.000000e+00> : vector<128x128xf32>
    %54 = tpu.matmul %53, %51, %cst_25 {dimension_numbers = #tpu.dot_dimension_numbers<[1], [0], [0], [1], [0, 0, 1, 1], [], []>} : vector<128x512xbf16>, vector<512x128xbf16>, vector<128x128xf32> -> vector<128x128xf32>
    %55 = vector.shape_cast %54 : vector<128x128xf32> to vector<2x64x128xf32>
    %cst_26 = arith.constant dense<0xFF800000> : vector<2x128xf32>
    %56 = vector.multi_reduction <maximumf>, %55, %cst_26 [1] : vector<2x64x128xf32> to vector<2x128xf32>
    %c0_27 = arith.constant 0 : index
    %c0_28 = arith.constant 0 : index
    %57 = vector.load %arg10[%c0_27, %c0_28] : memref<1x128xf32, #tpu.memory_space<vmem>>, vector<1x128xf32>
    %58 = vector.broadcast %57 : vector<1x128xf32> to vector<2x128xf32>
    %59 = arith.addf %56, %58 : vector<2x128xf32>
    %c0_29 = arith.constant 0 : index
    %c0_30 = arith.constant 0 : index
    %c0_31 = arith.constant 0 : index
    %60 = vector.load %arg11[%c0_29, %c0_30, %c0_31] : memref<1x2x128xf32, #tpu.memory_space<vmem>>, vector<1x2x128xf32>
    %61 = vector.shape_cast %60 : vector<1x2x128xf32> to vector<2x128xf32>
    %62 = vector.shape_cast %59 : vector<2x128xf32> to vector<1x2x128xf32>
    tpu.vector_store %arg11[%c0_29, %c0_30, %c0_31], %62 {strides = array<i32>} : memref<1x2x128xf32, #tpu.memory_space<vmem>>, vector<1x2x128xf32>,
    return
  }
  func.func @transform_0(%arg0: i32) -> (i32, i32, i32, i32) {
    %c0_i32 = arith.constant 0 : i32
    %c0_i32_0 = arith.constant 0 : i32
    %c0_i32_1 = arith.constant 0 : i32
    %c0_i32_2 = arith.constant 0 : i32
    return %arg0, %c0_i32, %c0_i32_0, %c0_i32_1 : i32, i32, i32, i32
  }
  func.func @transform_1(%arg0: i32) -> (i32, i32) {
    %c0_i32 = arith.constant 0 : i32
    %c0_i32_0 = arith.constant 0 : i32
    %c0_i32_1 = arith.constant 0 : i32
    return %c0_i32, %c0_i32_0 : i32, i32
  }
  func.func @transform_2(%arg0: i32) -> (i32, i32) {
    %c0_i32 = arith.constant 0 : i32
    %c0_i32_0 = arith.constant 0 : i32
    %c0_i32_1 = arith.constant 0 : i32
    return %c0_i32, %c0_i32_0 : i32, i32
  }
  func.func @transform_3(%arg0: i32) -> (i32, i32) {
    %c0_i32 = arith.constant 0 : i32
    %c0_i32_0 = arith.constant 0 : i32
    %c0_i32_1 = arith.constant 0 : i32
    return %c0_i32, %c0_i32_0 : i32, i32
  }
  func.func @transform_4(%arg0: i32) -> (i32, i32) {
    %c0_i32 = arith.constant 0 : i32
    %c0_i32_0 = arith.constant 0 : i32
    %c0_i32_1 = arith.constant 0 : i32
    return %c0_i32, %c0_i32_0 : i32, i32
  }
  func.func @transform_5(%arg0: i32) -> (i32, i32) {
    %c0_i32 = arith.constant 0 : i32
    %c0_i32_0 = arith.constant 0 : i32
    %c0_i32_1 = arith.constant 0 : i32
    return %c0_i32, %c0_i32_0 : i32, i32
  }
  func.func @transform_6(%arg0: i32) -> (i32, i32) {
    %c0_i32 = arith.constant 0 : i32
    %c0_i32_0 = arith.constant 0 : i32
    %c0_i32_1 = arith.constant 0 : i32
    return %c0_i32, %c0_i32_0 : i32, i32
  }
  func.func @transform_7(%arg0: i32) -> (i32, i32) {
    %c0_i32 = arith.constant 0 : i32
    %c0_i32_0 = arith.constant 0 : i32
    %c0_i32_1 = arith.constant 0 : i32
    return %c0_i32, %c0_i32_0 : i32, i32
  }
  func.func @transform_8(%arg0: i32) -> (i32, i32) {
    %c0_i32 = arith.constant 0 : i32
    %c0_i32_0 = arith.constant 0 : i32
    %c0_i32_1 = arith.constant 0 : i32
    return %c0_i32, %c0_i32_0 : i32, i32
  }
  func.func @transform_9(%arg0: i32) -> (i32, i32) {
    %c0_i32 = arith.constant 0 : i32
    %c0_i32_0 = arith.constant 0 : i32
    %c0_i32_1 = arith.constant 0 : i32
    return %c0_i32, %c0_i32_0 : i32, i32
  }
  func.func @transform_10(%arg0: i32) -> (i32, i32, i32) {
    %c0_i32 = arith.constant 0 : i32
    %c0_i32_0 = arith.constant 0 : i32
    %c0_i32_1 = arith.constant 0 : i32
    return %arg0, %c0_i32, %c0_i32_0 : i32, i32, i32
  }
}

module attributes {stable_mosaic.version = 11 : i64} {
  func.func @kernel(%arg0: i32, %arg1: memref<2x14xf32, #tpu.memory_space<vmem>>, %arg2: memref<14x256xf32, #tpu.memory_space<vmem>>, %arg3: memref<1x256xf32, #tpu.memory_space<vmem>>, %arg4: memref<256x256xf32, #tpu.memory_space<vmem>>, %arg5: memref<1x256xf32, #tpu.memory_space<vmem>>, %arg6: memref<256x128xf32, #tpu.memory_space<vmem>>, %arg7: memref<1x128xf32, #tpu.memory_space<vmem>>, %arg8: memref<2x128xf32, #tpu.memory_space<vmem>>) attributes {dimension_semantics = [#tpu.dimension_semantics<arbitrary>], iteration_bounds = array<i64: 1>, scalar_prefetch = 0 : i64, scratch_operands = 0 : i64, tpu.core_type = #tpu.core_type<tc>, window_params = [{pipeline_mode = #tpu.pipeline_mode<synchronous>, transform_indices = @transform_0, window_bounds = array<i64: 2, 14>}, {pipeline_mode = #tpu.pipeline_mode<synchronous>, transform_indices = @transform_1, window_bounds = array<i64: 14, 256>}, {pipeline_mode = #tpu.pipeline_mode<synchronous>, transform_indices = @transform_2, window_bounds = array<i64: 1, 256>}, {pipeline_mode = #tpu.pipeline_mode<synchronous>, transform_indices = @transform_3, window_bounds = array<i64: 256, 256>}, {pipeline_mode = #tpu.pipeline_mode<synchronous>, transform_indices = @transform_4, window_bounds = array<i64: 1, 256>}, {pipeline_mode = #tpu.pipeline_mode<synchronous>, transform_indices = @transform_5, window_bounds = array<i64: 256, 128>}, {pipeline_mode = #tpu.pipeline_mode<synchronous>, transform_indices = @transform_6, window_bounds = array<i64: 1, 128>}, {pipeline_mode = #tpu.pipeline_mode<synchronous>, transform_indices = @transform_7, window_bounds = array<i64: 2, 128>}]} {
    %c0 = arith.constant 0 : index
    %c0_0 = arith.constant 0 : index
    %0 = vector.load %arg1[%c0, %c0_0] : memref<2x14xf32, #tpu.memory_space<vmem>>, vector<2x14xf32>
    %c0_1 = arith.constant 0 : index
    %c0_2 = arith.constant 0 : index
    %1 = vector.load %arg2[%c0_1, %c0_2] : memref<14x256xf32, #tpu.memory_space<vmem>>, vector<14x256xf32>
    %c0_3 = arith.constant 0 : index
    %c0_4 = arith.constant 0 : index
    %2 = vector.load %arg3[%c0_3, %c0_4] : memref<1x256xf32, #tpu.memory_space<vmem>>, vector<1x256xf32>
    %cst = arith.constant dense<0.000000e+00> : vector<2x256xf32>
    %3 = tpu.matmul %0, %1, %cst {dimension_numbers = #tpu.dot_dimension_numbers<[1], [0], [0], [1], [0, 0, 1, 1], [], []>} : vector<2x14xf32>, vector<14x256xf32>, vector<2x256xf32> -> vector<2x256xf32>
    %4 = vector.broadcast %2 : vector<1x256xf32> to vector<2x256xf32>
    %5 = arith.addf %3, %4 : vector<2x256xf32>
    %cst_5 = arith.constant 0.000000e+00 : f32
    %6 = vector.broadcast %cst_5 : f32 to vector<2x256xf32>
    %7 = arith.maximumf %5, %6 : vector<2x256xf32>
    %c0_6 = arith.constant 0 : index
    %c0_7 = arith.constant 0 : index
    %8 = vector.load %arg4[%c0_6, %c0_7] : memref<256x256xf32, #tpu.memory_space<vmem>>, vector<256x256xf32>
    %c0_8 = arith.constant 0 : index
    %c0_9 = arith.constant 0 : index
    %9 = vector.load %arg5[%c0_8, %c0_9] : memref<1x256xf32, #tpu.memory_space<vmem>>, vector<1x256xf32>
    %cst_10 = arith.constant dense<0.000000e+00> : vector<2x256xf32>
    %10 = tpu.matmul %7, %8, %cst_10 {dimension_numbers = #tpu.dot_dimension_numbers<[1], [0], [0], [1], [0, 0, 1, 1], [], []>} : vector<2x256xf32>, vector<256x256xf32>, vector<2x256xf32> -> vector<2x256xf32>
    %11 = vector.broadcast %9 : vector<1x256xf32> to vector<2x256xf32>
    %12 = arith.addf %10, %11 : vector<2x256xf32>
    %cst_11 = arith.constant 0.000000e+00 : f32
    %13 = vector.broadcast %cst_11 : f32 to vector<2x256xf32>
    %14 = arith.maximumf %12, %13 : vector<2x256xf32>
    %c0_12 = arith.constant 0 : index
    %c0_13 = arith.constant 0 : index
    %15 = vector.load %arg6[%c0_12, %c0_13] : memref<256x128xf32, #tpu.memory_space<vmem>>, vector<256x128xf32>
    %cst_14 = arith.constant dense<0.000000e+00> : vector<2x128xf32>
    %16 = tpu.matmul %14, %15, %cst_14 {dimension_numbers = #tpu.dot_dimension_numbers<[1], [0], [0], [1], [0, 0, 1, 1], [], []>} : vector<2x256xf32>, vector<256x128xf32>, vector<2x128xf32> -> vector<2x128xf32>
    %c0_15 = arith.constant 0 : index
    %c0_16 = arith.constant 0 : index
    %17 = vector.load %arg7[%c0_15, %c0_16] : memref<1x128xf32, #tpu.memory_space<vmem>>, vector<1x128xf32>
    %18 = vector.broadcast %17 : vector<1x128xf32> to vector<2x128xf32>
    %19 = arith.addf %16, %18 : vector<2x128xf32>
    %c0_17 = arith.constant 0 : index
    %c0_18 = arith.constant 0 : index
    %20 = vector.load %arg8[%c0_17, %c0_18] : memref<2x128xf32, #tpu.memory_space<vmem>>, vector<2x128xf32>
    tpu.vector_store %arg8[%c0_17, %c0_18], %19 {strides = array<i32>} : memref<2x128xf32, #tpu.memory_space<vmem>>, vector<2x128xf32>,
    return
  }
  func.func @transform_0(%arg0: i32) -> (i32, i32) {
    %c0_i32 = arith.constant 0 : i32
    %c0_i32_0 = arith.constant 0 : i32
    %c0_i32_1 = arith.constant 0 : i32
    return %c0_i32, %c0_i32_0 : i32, i32
  }
  func.func @transform_1(%arg0: i32) -> (i32, i32) {
    %c0_i32 = arith.constant 0 : i32
    %c0_i32_0 = arith.constant 0 : i32
    %c0_i32_1 = arith.constant 0 : i32
    return %c0_i32, %c0_i32_0 : i32, i32
  }
  func.func @transform_2(%arg0: i32) -> (i32, i32) {
    %c0_i32 = arith.constant 0 : i32
    %c0_i32_0 = arith.constant 0 : i32
    %c0_i32_1 = arith.constant 0 : i32
    return %c0_i32, %c0_i32_0 : i32, i32
  }
  func.func @transform_3(%arg0: i32) -> (i32, i32) {
    %c0_i32 = arith.constant 0 : i32
    %c0_i32_0 = arith.constant 0 : i32
    %c0_i32_1 = arith.constant 0 : i32
    return %c0_i32, %c0_i32_0 : i32, i32
  }
  func.func @transform_4(%arg0: i32) -> (i32, i32) {
    %c0_i32 = arith.constant 0 : i32
    %c0_i32_0 = arith.constant 0 : i32
    %c0_i32_1 = arith.constant 0 : i32
    return %c0_i32, %c0_i32_0 : i32, i32
  }
  func.func @transform_5(%arg0: i32) -> (i32, i32) {
    %c0_i32 = arith.constant 0 : i32
    %c0_i32_0 = arith.constant 0 : i32
    %c0_i32_1 = arith.constant 0 : i32
    return %c0_i32, %c0_i32_0 : i32, i32
  }
  func.func @transform_6(%arg0: i32) -> (i32, i32) {
    %c0_i32 = arith.constant 0 : i32
    %c0_i32_0 = arith.constant 0 : i32
    %c0_i32_1 = arith.constant 0 : i32
    return %c0_i32, %c0_i32_0 : i32, i32
  }
  func.func @transform_7(%arg0: i32) -> (i32, i32) {
    %c0_i32 = arith.constant 0 : i32
    %c0_i32_0 = arith.constant 0 : i32
    %c0_i32_1 = arith.constant 0 : i32
    return %c0_i32, %c0_i32_0 : i32, i32
  }
}

</mosaic_0001>

<llo_original>
// kernel: _lambda_.3
$region0: #{_lambda_.3}
  #allocation0 [shape = 'u32[]', space=smem, size = 0x4, offset = 0x4, fixed_abs, tag = 'smem constant byte address 0x4 - core index']
  #allocation1 [shape = 'u32[144,128]{1,0:T(1,128)}', space=vmem, size = 0x12000, scoped, tag = 'internal scratch']
  %s0 = inlined_call_operand.vmem [shape: f32[2,14], index: 0, kind: input, shape index: {}]
  %s1 = inlined_call_operand.vmem [shape: f32[14,256], index: 1, kind: input, shape index: {}]
  %s2 = inlined_call_operand.vmem [shape: f32[1,256], index: 2, kind: input, shape index: {}]
  %s3 = inlined_call_operand.vmem [shape: f32[256,256], index: 3, kind: input, shape index: {}]
  %s4 = inlined_call_operand.vmem [shape: f32[1,256], index: 4, kind: input, shape index: {}]
  %s5 = inlined_call_operand.vmem [shape: f32[256,128], index: 5, kind: input, shape index: {}]
  %s6 = inlined_call_operand.vmem [shape: f32[1,128], index: 6, kind: input, shape index: {}]
  %s7 = inlined_call_operand.vmem [shape: f32[2,128], index: 7, kind: output, shape index: {}]
  %s8 = sld [smem:[#allocation0]]
  $region38: #{_lambda_.3} parent=0
    _
  %s10 = ssub.s32 1, %s8
  %s11 = scalar_select 0, %s10, %s8
  // Predicated region
  $region2: #{_lambda_.3} parent=0 // pred_check
    _
  $region3: #{_lambda_.3} parent=0 // pred_check_branch
    %13 = sbr.rel (0) target = $region5
  $region4: #{_lambda_.3} parent=0 // pred_region
    _
  $region5: #{_lambda_.3} parent=0 // pred_fallthru
    _
  // Predicated region
  $region6: #{_lambda_.3} parent=0 // pred_check
    _
  $region7: #{_lambda_.3} parent=0 // pred_check_branch
    %15 = sbr.rel (0) target = $region9
  $region8: #{_lambda_.3} parent=0 // pred_region
    _
  $region9: #{_lambda_.3} parent=0 // pred_fallthru
    _
  // Predicated region
  $region10: #{_lambda_.3} parent=0 // pred_check
    _
  $region11: #{_lambda_.3} parent=0 // pred_check_branch
    %17 = sbr.rel (0) target = $region13
  $region12: #{_lambda_.3} parent=0 // pred_region
    _
  $region13: #{_lambda_.3} parent=0 // pred_fallthru
    _
  // Predicated region
  $region14: #{_lambda_.3} parent=0 // pred_check
    _
  $region15: #{_lambda_.3} parent=0 // pred_check_branch
    %19 = sbr.rel (0) target = $region17
  $region16: #{_lambda_.3} parent=0 // pred_region
    _
  $region17: #{_lambda_.3} parent=0 // pred_fallthru
    _
  // Predicated region
  $region18: #{_lambda_.3} parent=0 // pred_check
    _
  $region19: #{_lambda_.3} parent=0 // pred_check_branch
    %21 = sbr.rel (0) target = $region21
  $region20: #{_lambda_.3} parent=0 // pred_region
    _
  $region21: #{_lambda_.3} parent=0 // pred_fallthru
    _
  // Predicated region
  $region22: #{_lambda_.3} parent=0 // pred_check
    _
  $region23: #{_lambda_.3} parent=0 // pred_check_branch
    %23 = sbr.rel (0) target = $region25
  $region24: #{_lambda_.3} parent=0 // pred_region
    _
  $region25: #{_lambda_.3} parent=0 // pred_fallthru
    _
  // Predicated region
  $region26: #{_lambda_.3} parent=0 // pred_check
    _
  $region27: #{_lambda_.3} parent=0 // pred_check_branch
    %25 = sbr.rel (0) target = $region29
  $region28: #{_lambda_.3} parent=0 // pred_region
    _
  $region29: #{_lambda_.3} parent=0 // pred_fallthru
    _
  %v26 = vld [vmem:[%s0] sm:$0x3]
  %v27 = vld [vmem:[%s1] sm:$0xff]
  %v28 = vld [vmem:[%s1 + $0x8] sm:$0xff]
  %v29 = vld [vmem:[%s1 + $0x10] sm:$0x3f]
  %v30 = vld [vmem:[%s1 + $0x18] sm:$0x3f]
  %v31 = vld [vmem:[%s2] sm:$0x3]
  %v33 = vlaneseq
  %v34 = vshrl.u32 %v33, 7
  %v35 = vsub.s32 0, %v34
  %v36 = vrot.slane %v31, %v35
  %v37 = vlaneseq
  %v38 = vshrl.u32 %v37, 7
  %v39 = vsub.s32 1, %v38
  %v40 = vrot.slane %v31, %v39
  %vm43 = vcmask 113664
  %v45 = vsel %vm43, %v26, 0
  %vm47 = vcmask 1045504
  %v49 = vsel %vm47, %v29, 0
  %v52 = vsel %vm47, %v30, 0
  %54 = vmatprep.subr.mxu0 0.0
  %55 = vmatpush1.msra.mxu0 0.0
  %56 = vmatprep.subr.mxu0 0.0
  %57 = vmatpush1.msra.mxu0 0.0
  %58 = vmatprep.subr.mxu0 0.0
  %59 = vmatpush1.msra.mxu0 0.0
  %60 = vmatprep.subr.mxu0 0.0
  %61 = vmatpush1.msra.mxu0 0.0
  %62 = vmatprep.subr.mxu0 0.0
  %63 = vmatpush1.msra.mxu0 0.0
  %64 = vmatprep.subr.mxu0 0.0
  %65 = vmatpush1.msra.mxu0 0.0
  %66 = vmatprep.subr.mxu0 0.0
  %67 = vmatpush1.msra.mxu0 0.0
  %68 = vmatprep.subr.mxu0 0.0
  %69 = vmatpush1.msra.mxu0 0.0
  %70 = vmatprep.subr.mxu0 0.0
  %71 = vmatpush1.msra.mxu0 0.0
  %72 = vmatprep.subr.mxu0 0.0
  %73 = vmatpush1.msra.mxu0 0.0
  %74 = vmatprep.subr.mxu0 0.0
  %75 = vmatpush1.msra.mxu0 0.0
  %76 = vmatprep.subr.mxu0 0.0
  %77 = vmatpush1.msra.mxu0 0.0
  %78 = vmatprep.subr.mxu0 0.0
  %79 = vmatpush1.msra.mxu0 0.0
  %80 = vmatprep.subr.mxu0 0.0
  %81 = vmatpush1.msra.mxu0 0.0
  %82 = vmatprep.subr.mxu0 %v52
  %83 = vmatpush1.msra.mxu0 %v49
  %84 = vmatprep.subr.mxu0 %v28
  %85 = vmatpush1.msra.mxu0 %v27
  %86 = vmatprep.subr.mxu0 0.0
  %87 = vmatpush2.msra.mxu0 0.0
  %88 = vmatprep.subr.mxu0 0.0
  %89 = vmatpush2.msra.mxu0 0.0
  %90 = vmatprep.subr.mxu0 0.0
  %91 = vmatpush2.msra.mxu0 0.0
  %92 = vmatprep.subr.mxu0 0.0
  %93 = vmatpush2.msra.mxu0 0.0
  %94 = vmatprep.subr.mxu0 0.0
  %95 = vmatpush2.msra.mxu0 0.0
  %96 = vmatprep.subr.mxu0 0.0
  %97 = vmatpush2.msra.mxu0 0.0
  %98 = vmatprep.subr.mxu0 0.0
  %99 = vmatpush2.msra.mxu0 0.0
  %100 = vmatprep.subr.mxu0 0.0
  %101 = vmatpush2.msra.mxu0 0.0
  %102 = vmatprep.subr.mxu0 0.0
  %103 = vmatpush2.msra.mxu0 0.0
  %104 = vmatprep.subr.mxu0 0.0
  %105 = vmatpush2.msra.mxu0 0.0
  %106 = vmatprep.subr.mxu0 0.0
  %107 = vmatpush2.msra.mxu0 0.0
  %108 = vmatprep.subr.mxu0 0.0
  %109 = vmatpush2.msra.mxu0 0.0
  %110 = vmatprep.subr.mxu0 0.0
  %111 = vmatpush2.msra.mxu0 0.0
  %112 = vmatprep.subr.mxu0 0.0
  %113 = vmatpush2.msra.mxu0 0.0
  %114 = vmatprep.subr.mxu0 0.0
  %115 = vmatpush2.msra.mxu0 0.0
  %116 = vmatprep.subr.mxu0 0.0
  %117 = vmatpush2.msra.mxu0 0.0
  %118 = vmatprep.mubr.f32.mxu0 0.0
  %119 = vmatmul.mubr.f32.gmra.mxu0 %v45
  %v120 = vpop.f32.mrf.mxu0
  %v121 = vadd.f32 %v36, %v120
  %v122 = vpop.f32.mrf.mxu0
  %v123 = vadd.f32 %v40, %v122
  %124 = vdwg.mxu0
  %v125 = vmax.f32 %v121, 0.0
  %v126 = vmax.f32 %v123, 0.0
  %v127 = vld [vmem:[%s3] sm:$0xff]
  %v128 = vld [vmem:[%s3 + $0x8] sm:$0xff]
  %v129 = vld [vmem:[%s3 + $0x10] sm:$0xff]
  %v130 = vld [vmem:[%s3 + $0x18] sm:$0xff]
  %v131 = vld [vmem:[%s3 + $0x20] sm:$0xff]
  %v132 = vld [vmem:[%s3 + $0x28] sm:$0xff]
  %v133 = vld [vmem:[%s3 + $0x30] sm:$0xff]
  %v134 = vld [vmem:[%s3 + $0x38] sm:$0xff]
  %v135 = vld [vmem:[%s3 + $0x40] sm:$0xff]
  %v136 = vld [vmem:[%s3 + $0x48] sm:$0xff]
  %v137 = vld [vmem:[%s3 + $0x50] sm:$0xff]
  %v138 = vld [vmem:[%s3 + $0x58] sm:$0xff]
  %v139 = vld [vmem:[%s3 + $0x60] sm:$0xff]
  %v140 = vld [vmem:[%s3 + $0x68] sm:$0xff]
  %v141 = vld [vmem:[%s3 + $0x70] sm:$0xff]
  %v142 = vld [vmem:[%s3 + $0x78] sm:$0xff]
  %v143 = vld [vmem:[%s3 + $0x80] sm:$0xff]
  %v144 = vld [vmem:[%s3 + $0x88] sm:$0xff]
  %v145 = vld [vmem:[%s3 + $0x90] sm:$0xff]
  %v146 = vld [vmem:[%s3 + $0x98] sm:$0xff]
  %v147 = vld [vmem:[%s3 + $0xa0] sm:$0xff]
  %v148 = vld [vmem:[%s3 + $0xa8] sm:$0xff]
  %v149 = vld [vmem:[%s3 + $0xb0] sm:$0xff]
  %v150 = vld [vmem:[%s3 + $0xb8] sm:$0xff]
  %v151 = vld [vmem:[%s3 + $0xc0] sm:$0xff]
  %v152 = vld [vmem:[%s3 + $0xc8] sm:$0xff]
  %v153 = vld [vmem:[%s3 + $0xd0] sm:$0xff]
  %v154 = vld [vmem:[%s3 + $0xd8] sm:$0xff]
  %v155 = vld [vmem:[%s3 + $0xe0] sm:$0xff]
  %v156 = vld [vmem:[%s3 + $0xe8] sm:$0xff]
  %v157 = vld [vmem:[%s3 + $0xf0] sm:$0xff]
  %v158 = vld [vmem:[%s3 + $0xf8] sm:$0xff]
  %v159 = vld [vmem:[%s3 + $0x100] sm:$0xff]
  %v160 = vld [vmem:[%s3 + $0x108] sm:$0xff]
  %v161 = vld [vmem:[%s3 + $0x110] sm:$0xff]
  %v162 = vld [vmem:[%s3 + $0x118] sm:$0xff]
  %v163 = vld [vmem:[%s3 + $0x120] sm:$0xff]
  %v164 = vld [vmem:[%s3 + $0x128] sm:$0xff]
  %v165 = vld [vmem:[%s3 + $0x130] sm:$0xff]
  %v166 = vld [vmem:[%s3 + $0x138] sm:$0xff]
  %v167 = vld [vmem:[%s3 + $0x140] sm:$0xff]
  %v168 = vld [vmem:[%s3 + $0x148] sm:$0xff]
  %v169 = vld [vmem:[%s3 + $0x150] sm:$0xff]
  %v170 = vld [vmem:[%s3 + $0x158] sm:$0xff]
  %v171 = vld [vmem:[%s3 + $0x160] sm:$0xff]
  %v172 = vld [vmem:[%s3 + $0x168] sm:$0xff]
  %v173 = vld [vmem:[%s3 + $0x170] sm:$0xff]
  %v174 = vld [vmem:[%s3 + $0x178] sm:$0xff]
  %v175 = vld [vmem:[%s3 + $0x180] sm:$0xff]
  %v176 = vld [vmem:[%s3 + $0x188] sm:$0xff]
  %v177 = vld [vmem:[%s3 + $0x190] sm:$0xff]
  %v178 = vld [vmem:[%s3 + $0x198] sm:$0xff]
  %v179 = vld [vmem:[%s3 + $0x1a0] sm:$0xff]
  %v180 = vld [vmem:[%s3 + $0x1a8] sm:$0xff]
  %v181 = vld [vmem:[%s3 + $0x1b0] sm:$0xff]
  %v182 = vld [vmem:[%s3 + $0x1b8] sm:$0xff]
  %v183 = vld [vmem:[%s3 + $0x1c0] sm:$0xff]
  %v184 = vld [vmem:[%s3 + $0x1c8] sm:$0xff]
  %v185 = vld [vmem:[%s3 + $0x1d0] sm:$0xff]
  %v186 = vld [vmem:[%s3 + $0x1d8] sm:$0xff]
  %v187 = vld [vmem:[%s3 + $0x1e0] sm:$0xff]
  %v188 = vld [vmem:[%s3 + $0x1e8] sm:$0xff]
  %v189 = vld [vmem:[%s3 + $0x1f0] sm:$0xff]
  %v190 = vld [vmem:[%s3 + $0x1f8] sm:$0xff]
  %v191 = vld [vmem:[%s4] sm:$0x3]
  %v193 = vlaneseq
  %v194 = vshrl.u32 %v193, 7
  %v195 = vsub.s32 0, %v194
  %v196 = vrot.slane %v191, %v195
  %v197 = vlaneseq
  %v198 = vshrl.u32 %v197, 7
  %v199 = vsub.s32 1, %v198
  %v200 = vrot.slane %v191, %v199
  %203 = vmatprep.subr.mxu0 %v158
  %204 = vmatpush1.msra.mxu0 %v157
  %205 = vmatprep.subr.mxu0 %v156
  %206 = vmatpush1.msra.mxu0 %v155
  %207 = vmatprep.subr.mxu0 %v154
  %208 = vmatpush1.msra.mxu0 %v153
  %209 = vmatprep.subr.mxu0 %v152
  %210 = vmatpush1.msra.mxu0 %v151
  %211 = vmatprep.subr.mxu0 %v150
  %212 = vmatpush1.msra.mxu0 %v149
  %213 = vmatprep.subr.mxu0 %v148
  %214 = vmatpush1.msra.mxu0 %v147
  %215 = vmatprep.subr.mxu0 %v146
  %216 = vmatpush1.msra.mxu0 %v145
  %217 = vmatprep.subr.mxu0 %v144
  %218 = vmatpush1.msra.mxu0 %v143
  %219 = vmatprep.subr.mxu0 %v142
  %220 = vmatpush1.msra.mxu0 %v141
  %221 = vmatprep.subr.mxu0 %v140
  %222 = vmatpush1.msra.mxu0 %v139
  %223 = vmatprep.subr.mxu0 %v138
  %224 = vmatpush1.msra.mxu0 %v137
  %225 = vmatprep.subr.mxu0 %v136
  %226 = vmatpush1.msra.mxu0 %v135
  %227 = vmatprep.subr.mxu0 %v134
  %228 = vmatpush1.msra.mxu0 %v133
  %229 = vmatprep.subr.mxu0 %v132
  %230 = vmatpush1.msra.mxu0 %v131
  %231 = vmatprep.subr.mxu0 %v130
  %232 = vmatpush1.msra.mxu0 %v129
  %233 = vmatprep.subr.mxu0 %v128
  %234 = vmatpush1.msra.mxu0 %v127
  %235 = vmatprep.subr.mxu0 %v190
  %236 = vmatpush2.msra.mxu0 %v189
  %237 = vmatprep.subr.mxu0 %v188
  %238 = vmatpush2.msra.mxu0 %v187
  %239 = vmatprep.subr.mxu0 %v186
  %240 = vmatpush2.msra.mxu0 %v185
  %241 = vmatprep.subr.mxu0 %v184
  %242 = vmatpush2.msra.mxu0 %v183
  %243 = vmatprep.subr.mxu0 %v182
  %244 = vmatpush2.msra.mxu0 %v181
  %245 = vmatprep.subr.mxu0 %v180
  %246 = vmatpush2.msra.mxu0 %v179
  %247 = vmatprep.subr.mxu0 %v178
  %248 = vmatpush2.msra.mxu0 %v177
  %249 = vmatprep.subr.mxu0 %v176
  %250 = vmatpush2.msra.mxu0 %v175
  %251 = vmatprep.subr.mxu0 %v174
  %252 = vmatpush2.msra.mxu0 %v173
  %253 = vmatprep.subr.mxu0 %v172
  %254 = vmatpush2.msra.mxu0 %v171
  %255 = vmatprep.subr.mxu0 %v170
  %256 = vmatpush2.msra.mxu0 %v169
  %257 = vmatprep.subr.mxu0 %v168
  %258 = vmatpush2.msra.mxu0 %v167
  %259 = vmatprep.subr.mxu0 %v166
  %260 = vmatpush2.msra.mxu0 %v165
  %261 = vmatprep.subr.mxu0 %v164
  %262 = vmatpush2.msra.mxu0 %v163
  %263 = vmatprep.subr.mxu0 %v162
  %264 = vmatpush2.msra.mxu0 %v161
  %265 = vmatprep.subr.mxu0 %v160
  %266 = vmatpush2.msra.mxu0 %v159
  %267 = vmatprep.mubr.f32.mxu0 %v126
  %268 = vmatmul.mubr.f32.gmra.mxu0 %v125
  %v269 = vpop.f32.mrf.mxu0
  %v270 = vadd.f32 %v196, %v269
  %v271 = vpop.f32.mrf.mxu0
  %v272 = vadd.f32 %v200, %v271
  %273 = vdwg.mxu0
  %v274 = vmax.f32 %v270, 0.0
  %v275 = vmax.f32 %v272, 0.0
  %v276 = vld [vmem:[%s5] sm:$0xff]
  %v277 = vld [vmem:[%s5 + $0x8] sm:$0xff]
  %v278 = vld [vmem:[%s5 + $0x10] sm:$0xff]
  %v279 = vld [vmem:[%s5 + $0x18] sm:$0xff]
  %v280 = vld [vmem:[%s5 + $0x20] sm:$0xff]
  %v281 = vld [vmem:[%s5 + $0x28] sm:$0xff]
  %v282 = vld [vmem:[%s5 + $0x30] sm:$0xff]
  %v283 = vld [vmem:[%s5 + $0x38] sm:$0xff]
  %v284 = vld [vmem:[%s5 + $0x40] sm:$0xff]
  %v285 = vld [vmem:[%s5 + $0x48] sm:$0xff]
  %v286 = vld [vmem:[%s5 + $0x50] sm:$0xff]
  %v287 = vld [vmem:[%s5 + $0x58] sm:$0xff]
  %v288 = vld [vmem:[%s5 + $0x60] sm:$0xff]
  %v289 = vld [vmem:[%s5 + $0x68] sm:$0xff]
  %v290 = vld [vmem:[%s5 + $0x70] sm:$0xff]
  %v291 = vld [vmem:[%s5 + $0x78] sm:$0xff]
  %v292 = vld [vmem:[%s5 + $0x80] sm:$0xff]
  %v293 = vld [vmem:[%s5 + $0x88] sm:$0xff]
  %v294 = vld [vmem:[%s5 + $0x90] sm:$0xff]
  %v295 = vld [vmem:[%s5 + $0x98] sm:$0xff]
  %v296 = vld [vmem:[%s5 + $0xa0] sm:$0xff]
  %v297 = vld [vmem:[%s5 + $0xa8] sm:$0xff]
  %v298 = vld [vmem:[%s5 + $0xb0] sm:$0xff]
  %v299 = vld [vmem:[%s5 + $0xb8] sm:$0xff]
  %v300 = vld [vmem:[%s5 + $0xc0] sm:$0xff]
  %v301 = vld [vmem:[%s5 + $0xc8] sm:$0xff]
  %v302 = vld [vmem:[%s5 + $0xd0] sm:$0xff]
  %v303 = vld [vmem:[%s5 + $0xd8] sm:$0xff]
  %v304 = vld [vmem:[%s5 + $0xe0] sm:$0xff]
  %v305 = vld [vmem:[%s5 + $0xe8] sm:$0xff]
  %v306 = vld [vmem:[%s5 + $0xf0] sm:$0xff]
  %v307 = vld [vmem:[%s5 + $0xf8] sm:$0xff]
  %v308 = vld [vmem:[%s6] sm:$0x1]
  %v310 = vlaneseq
  %v311 = vshrl.u32 %v310, 7
  %v312 = vsub.s32 0, %v311
  %v313 = vrot.slane %v308, %v312
  %315 = vmatprep.subr.mxu0 0.0
  %316 = vmatpush1.msra.mxu0 %v291
  %317 = vmatprep.subr.mxu0 0.0
  %318 = vmatpush1.msra.mxu0 %v290
  %319 = vmatprep.subr.mxu0 0.0
  %320 = vmatpush1.msra.mxu0 %v289
  %321 = vmatprep.subr.mxu0 0.0
  %322 = vmatpush1.msra.mxu0 %v288
  %323 = vmatprep.subr.mxu0 0.0
  %324 = vmatpush1.msra.mxu0 %v287
  %325 = vmatprep.subr.mxu0 0.0
  %326 = vmatpush1.msra.mxu0 %v286
  %327 = vmatprep.subr.mxu0 0.0
  %328 = vmatpush1.msra.mxu0 %v285
  %329 = vmatprep.subr.mxu0 0.0
  %330 = vmatpush1.msra.mxu0 %v284
  %331 = vmatprep.subr.mxu0 0.0
  %332 = vmatpush1.msra.mxu0 %v283
  %333 = vmatprep.subr.mxu0 0.0
  %334 = vmatpush1.msra.mxu0 %v282
  %335 = vmatprep.subr.mxu0 0.0
  %336 = vmatpush1.msra.mxu0 %v281
  %337 = vmatprep.subr.mxu0 0.0
  %338 = vmatpush1.msra.mxu0 %v280
  %339 = vmatprep.subr.mxu0 0.0
  %340 = vmatpush1.msra.mxu0 %v279
  %341 = vmatprep.subr.mxu0 0.0
  %342 = vmatpush1.msra.mxu0 %v278
  %343 = vmatprep.subr.mxu0 0.0
  %344 = vmatpush1.msra.mxu0 %v277
  %345 = vmatprep.subr.mxu0 0.0
  %346 = vmatpush1.msra.mxu0 %v276
  %347 = vmatprep.subr.mxu0 0.0
  %348 = vmatpush2.msra.mxu0 %v307
  %349 = vmatprep.subr.mxu0 0.0
  %350 = vmatpush2.msra.mxu0 %v306
  %351 = vmatprep.subr.mxu0 0.0
  %352 = vmatpush2.msra.mxu0 %v305
  %353 = vmatprep.subr.mxu0 0.0
  %354 = vmatpush2.msra.mxu0 %v304
  %355 = vmatprep.subr.mxu0 0.0
  %356 = vmatpush2.msra.mxu0 %v303
  %357 = vmatprep.subr.mxu0 0.0
  %358 = vmatpush2.msra.mxu0 %v302
  %359 = vmatprep.subr.mxu0 0.0
  %360 = vmatpush2.msra.mxu0 %v301
  %361 = vmatprep.subr.mxu0 0.0
  %362 = vmatpush2.msra.mxu0 %v300
  %363 = vmatprep.subr.mxu0 0.0
  %364 = vmatpush2.msra.mxu0 %v299
  %365 = vmatprep.subr.mxu0 0.0
  %366 = vmatpush2.msra.mxu0 %v298
  %367 = vmatprep.subr.mxu0 0.0
  %368 = vmatpush2.msra.mxu0 %v297
  %369 = vmatprep.subr.mxu0 0.0
  %370 = vmatpush2.msra.mxu0 %v296
  %371 = vmatprep.subr.mxu0 0.0
  %372 = vmatpush2.msra.mxu0 %v295
  %373 = vmatprep.subr.mxu0 0.0
  %374 = vmatpush2.msra.mxu0 %v294
  %375 = vmatprep.subr.mxu0 0.0
  %376 = vmatpush2.msra.mxu0 %v293
  %377 = vmatprep.subr.mxu0 0.0
  %378 = vmatpush2.msra.mxu0 %v292
  %379 = vmatprep.mubr.f32.mxu0 %v275
  %380 = vmatmul.mubr.f32.gmra.mxu0 %v274
  %v381 = vpop.f32.mrf.mxu0
  %v382 = vadd.f32 %v313, %v381
  %v383 = vpop.f32.mrf.mxu0
  %384 = vdwg.mxu0
  %385 = vst [vmem:[%s7] sm:$0x3] %v382
  // Predicated region
  $region30: #{_lambda_.3} parent=0 // pred_check
    _
  $region31: #{_lambda_.3} parent=0 // pred_check_branch
    %387 = sbr.rel (0) target = $region33
  $region32: #{_lambda_.3} parent=0 // pred_region
    _
  $region33: #{_lambda_.3} parent=0 // pred_fallthru
    _
  // Predicated region
  $region34: #{_lambda_.3} parent=0 // pred_check
    _
  $region35: #{_lambda_.3} parent=0 // pred_check_branch
    %389 = sbr.rel (0) target = $region37
  $region36: #{_lambda_.3} parent=0 // pred_region
    _
  $region37: #{_lambda_.3} parent=0 // pred_fallthru
    _

// kernel: _lambda_.2
$region0: #{_lambda_.2}
  #allocation0 [shape = 'u32[]', space=smem, size = 0x4, offset = 0x4, fixed_abs, tag = 'smem constant byte address 0x4 - core index']
  #allocation1 [shape = 'u32[144,128]{1,0:T(1,128)}', space=vmem, size = 0x12000, scoped, tag = 'internal scratch']
  %s0 = inlined_call_operand.vmem [shape: f32[2,2,64,3], index: 0, kind: input, shape index: {}]
  %s1 = inlined_call_operand.vmem [shape: f32[3,128], index: 1, kind: input, shape index: {}]
  %s2 = inlined_call_operand.vmem [shape: f32[1,128], index: 2, kind: input, shape index: {}]
  %s3 = inlined_call_operand.hbm [shape: bf16[128,256], index: 3, kind: input, shape index: {}]
  %s4 = inlined_call_operand.vmem [shape: f32[1,256], index: 4, kind: input, shape index: {}]
  %s5 = inlined_call_operand.hbm [shape: bf16[256,512], index: 5, kind: input, shape index: {}]
  %s6 = inlined_call_operand.hbm [shape: bf16[256,512], index: 6, kind: input, shape index: {}]
  %s7 = inlined_call_operand.vmem [shape: f32[1,512], index: 7, kind: input, shape index: {}]
  %s8 = inlined_call_operand.vmem [shape: bf16[512,128], index: 8, kind: input, shape index: {}]
  %s9 = inlined_call_operand.vmem [shape: f32[1,128], index: 9, kind: input, shape index: {}]
  %s10 = inlined_call_operand.vmem [shape: f32[2,2,128], index: 10, kind: output, shape index: {}]
  %s11 = sld [smem:[#allocation0]]
  $region85: #{_lambda_.2} parent=0
    _
  %s13 = ssub.s32 1, %s11
  %s14 = scalar_select 0, %s13, %s11
  $region1: #{_lambda_.2} parent=0
    #allocation2 [shape = 'u8[65536]{0}', space=vmem, size = 0x10000, scoped, tag = 'input window, operand 3, single buffered']
    #allocation3 [shape = 's32[2]{0}', space=sflag, size = 0x8, scoped, tag = 'scoped memory for _lambda_.2']
    #allocation4 [shape = 'u8[262144]{0}', space=vmem, size = 0x40000, scoped, tag = 'input window, operand 5, single buffered']
    #allocation5 [shape = 's32[1]{0}', space=sflag, size = 0x4, scoped, tag = 'scoped memory for _lambda_.2']
    #allocation6 [shape = 'u8[262144]{0}', space=vmem, size = 0x40000, scoped, tag = 'input window, operand 6, single buffered']
    %15 = vsyncpa [#allocation3], 0
    %16 = vsyncpa [#allocation5], 0
    loop: start=0, step=1, limit=4
    $region2: #{_lambda_.2} parent=1 // loop_pre_header
      _
    $region3: #{_lambda_.2} parent=1 // loop_header
      %s18 = sphi 0, %s22
      %p19 = scmp.ge.s32.totalorder %s18, 4
      %s28 = sphi 0, %s30
      %s31 = sphi 0, %s28
      %s32 = sphi 0, %s31
      %s48 = sphi 0, %s32
      %s52 = sphi 0, %s52
      %s54 = sphi 0, %s52
      %s55 = sphi 0, %s54
      %s69 = sphi 0, %s55
      %s73 = sphi 0, %s73
      %s75 = sphi 0, %s73
      %s76 = sphi 0, %s75
      %s90 = sphi 0, %s76
      %s94 = sphi 0, %s94
      %s96 = sphi 0, %s94
      %s97 = sphi 0, %s96
      %s111 = sphi 0, %s97
      %s115 = sphi 0, %s115
      %s117 = sphi 0, %s115
      %s118 = sphi 0, %s117
      %s132 = sphi 0, %s118
      %s136 = sphi 0, %s136
      %s138 = sphi 0, %s136
      %s139 = sphi 0, %s138
      %s153 = sphi 0, %s139
      %s157 = sphi 0, %s157
      %s159 = sphi 0, %s157
      %s160 = sphi 0, %s159
      %s174 = sphi 0, %s160
      %s178 = sphi 0, %s178
      %s180 = sphi 0, %s178
      %s181 = sphi 0, %s180
      %s195 = sphi 0, %s181
      %s199 = sphi 0, %s199
      %s201 = sphi 0, %s199
      %s202 = sphi 0, %s201
      %s216 = sphi 0, %s202
      %s220 = sphi 0, %s220
      %s222 = sphi 0, %s220
      %s223 = sphi 0, %s222
      %s237 = sphi 0, %s223
      %s243 = sphi 0, %s245
      %s246 = sphi 0, %s243
      %s247 = sphi 0, %s246
      %s263 = sphi 0, %s247
    $region4: #{_lambda_.2} parent=1 // loop_header_branch
      %21 = sbr.rel (%p19) target = $region8
    $region5: #{_lambda_.2} parent=1 // loop_body
      %s23 = ssub.s32 %s18, 1
      %s24 = ssub.s32 %s18, 2
      %s25 = sadd.s32 %s18, 1
      %s26 = ssub.s32 %s18, %s25
      %p27 = scmp.eq.s32.totalorder %s26, 0
      %s29 = sadd.s32 %s28, 1
      %s30 = scalar_select %p27, %s28, %s29
      %p33 = pneg %p27
      %p34 = scmp.eq.s32.totalorder %s18, 1
      %p35 = por %p33, %p34
      %p36 = scmp.ne.s32.totalorder %s28, %s31
      %p37 = scmp.eq.s32.totalorder %s18, 0
      %p38 = por %p36, %p37
      %p39 = scmp.ne.s32.totalorder %s28, %s31
      %p40 = scmp.eq.s32.totalorder %s23, 1
      %p41 = por %p39, %p40
      %p42 = scmp.ne.s32.totalorder %s31, %s32
      %p43 = scmp.eq.s32.totalorder %s23, 0
      %p44 = por %p42, %p43
      %p45 = scmp.ne.s32.totalorder %s31, %s32
      %p46 = scmp.eq.s32.totalorder %s24, 1
      %p47 = por %p45, %p46
      %p49 = scmp.ne.s32.totalorder %s32, %s48
      %p50 = scmp.eq.s32.totalorder %s24, 0
      %p51 = por %p49, %p50
      %s53 = sadd.s32 %s52, 1
      %p56 = scmp.eq.s32.totalorder %s18, 1
      %p57 = scmp.ne.s32.totalorder %s52, %s54
      %p58 = scmp.eq.s32.totalorder %s18, 0
      %p59 = por %p57, %p58
      %p60 = scmp.ne.s32.totalorder %s52, %s54
      %p61 = scmp.eq.s32.totalorder %s23, 1
      %p62 = por %p60, %p61
      %p63 = scmp.ne.s32.totalorder %s54, %s55
      %p64 = scmp.eq.s32.totalorder %s23, 0
      %p65 = por %p63, %p64
      %p66 = scmp.ne.s32.totalorder %s54, %s55
      %p67 = scmp.eq.s32.totalorder %s24, 1
      %p68 = por %p66, %p67
      %p70 = scmp.ne.s32.totalorder %s55, %s69
      %p71 = scmp.eq.s32.totalorder %s24, 0
      %p72 = por %p70, %p71
      %s74 = sadd.s32 %s73, 1
      %p77 = scmp.eq.s32.totalorder %s18, 1
      %p78 = scmp.ne.s32.totalorder %s73, %s75
      %p79 = scmp.eq.s32.totalorder %s18, 0
      %p80 = por %p78, %p79
      %p81 = scmp.ne.s32.totalorder %s73, %s75
      %p82 = scmp.eq.s32.totalorder %s23, 1
      %p83 = por %p81, %p82
      %p84 = scmp.ne.s32.totalorder %s75, %s76
      %p85 = scmp.eq.s32.totalorder %s23, 0
      %p86 = por %p84, %p85
      %p87 = scmp.ne.s32.totalorder %s75, %s76
      %p88 = scmp.eq.s32.totalorder %s24, 1
      %p89 = por %p87, %p88
      %p91 = scmp.ne.s32.totalorder %s76, %s90
      %p92 = scmp.eq.s32.totalorder %s24, 0
      %p93 = por %p91, %p92
      %s95 = sadd.s32 %s94, 1
      %p98 = scmp.eq.s32.totalorder %s18, 1
      %p99 = scmp.ne.s32.totalorder %s94, %s96
      %p100 = scmp.eq.s32.totalorder %s18, 0
      %p101 = por %p99, %p100
      %p102 = scmp.ne.s32.totalorder %s94, %s96
      %p103 = scmp.eq.s32.totalorder %s23, 1
      %p104 = por %p102, %p103
      %p105 = scmp.ne.s32.totalorder %s96, %s97
      %p106 = scmp.eq.s32.totalorder %s23, 0
      %p107 = por %p105, %p106
      %p108 = scmp.ne.s32.totalorder %s96, %s97
      %p109 = scmp.eq.s32.totalorder %s24, 1
      %p110 = por %p108, %p109
      %p112 = scmp.ne.s32.totalorder %s97, %s111
      %p113 = scmp.eq.s32.totalorder %s24, 0
      %p114 = por %p112, %p113
      %s116 = sadd.s32 %s115, 1
      %p119 = scmp.eq.s32.totalorder %s18, 1
      %p120 = scmp.ne.s32.totalorder %s115, %s117
      %p121 = scmp.eq.s32.totalorder %s18, 0
      %p122 = por %p120, %p121
      %p123 = scmp.ne.s32.totalorder %s115, %s117
      %p124 = scmp.eq.s32.totalorder %s23, 1
      %p125 = por %p123, %p124
      %p126 = scmp.ne.s32.totalorder %s117, %s118
      %p127 = scmp.eq.s32.totalorder %s23, 0
      %p128 = por %p126, %p127
      %p129 = scmp.ne.s32.totalorder %s117, %s118
      %p130 = scmp.eq.s32.totalorder %s24, 1
      %p131 = por %p129, %p130
      %p133 = scmp.ne.s32.totalorder %s118, %s132
      %p134 = scmp.eq.s32.totalorder %s24, 0
      %p135 = por %p133, %p134
      %s137 = sadd.s32 %s136, 1
      %p140 = scmp.eq.s32.totalorder %s18, 1
      %p141 = scmp.ne.s32.totalorder %s136, %s138
      %p142 = scmp.eq.s32.totalorder %s18, 0
      %p143 = por %p141, %p142
      %p144 = scmp.ne.s32.totalorder %s136, %s138
      %p145 = scmp.eq.s32.totalorder %s23, 1
      %p146 = por %p144, %p145
      %p147 = scmp.ne.s32.totalorder %s138, %s139
      %p148 = scmp.eq.s32.totalorder %s23, 0
      %p149 = por %p147, %p148
      %p150 = scmp.ne.s32.totalorder %s138, %s139
      %p151 = scmp.eq.s32.totalorder %s24, 1
      %p152 = por %p150, %p151
      %p154 = scmp.ne.s32.totalorder %s139, %s153
      %p155 = scmp.eq.s32.totalorder %s24, 0
      %p156 = por %p154, %p155
      %s158 = sadd.s32 %s157, 1
      %p161 = scmp.eq.s32.totalorder %s18, 1
      %p162 = scmp.ne.s32.totalorder %s157, %s159
      %p163 = scmp.eq.s32.totalorder %s18, 0
      %p164 = por %p162, %p163
      %p165 = scmp.ne.s32.totalorder %s157, %s159
      %p166 = scmp.eq.s32.totalorder %s23, 1
      %p167 = por %p165, %p166
      %p168 = scmp.ne.s32.totalorder %s159, %s160
      %p169 = scmp.eq.s32.totalorder %s23, 0
      %p170 = por %p168, %p169
      %p171 = scmp.ne.s32.totalorder %s159, %s160
      %p172 = scmp.eq.s32.totalorder %s24, 1
      %p173 = por %p171, %p172
      %p175 = scmp.ne.s32.totalorder %s160, %s174
      %p176 = scmp.eq.s32.totalorder %s24, 0
      %p177 = por %p175, %p176
      %s179 = sadd.s32 %s178, 1
      %p182 = scmp.eq.s32.totalorder %s18, 1
      %p183 = scmp.ne.s32.totalorder %s178, %s180
      %p184 = scmp.eq.s32.totalorder %s18, 0
      %p185 = por %p183, %p184
      %p186 = scmp.ne.s32.totalorder %s178, %s180
      %p187 = scmp.eq.s32.totalorder %s23, 1
      %p188 = por %p186, %p187
      %p189 = scmp.ne.s32.totalorder %s180, %s181
      %p190 = scmp.eq.s32.totalorder %s23, 0
      %p191 = por %p189, %p190
      %p192 = scmp.ne.s32.totalorder %s180, %s181
      %p193 = scmp.eq.s32.totalorder %s24, 1
      %p194 = por %p192, %p193
      %p196 = scmp.ne.s32.totalorder %s181, %s195
      %p197 = scmp.eq.s32.totalorder %s24, 0
      %p198 = por %p196, %p197
      %s200 = sadd.s32 %s199, 1
      %p203 = scmp.eq.s32.totalorder %s18, 1
      %p204 = scmp.ne.s32.totalorder %s199, %s201
      %p205 = scmp.eq.s32.totalorder %s18, 0
      %p206 = por %p204, %p205
      %p207 = scmp.ne.s32.totalorder %s199, %s201
      %p208 = scmp.eq.s32.totalorder %s23, 1
      %p209 = por %p207, %p208
      %p210 = scmp.ne.s32.totalorder %s201, %s202
      %p211 = scmp.eq.s32.totalorder %s23, 0
      %p212 = por %p210, %p211
      %p213 = scmp.ne.s32.totalorder %s201, %s202
      %p214 = scmp.eq.s32.totalorder %s24, 1
      %p215 = por %p213, %p214
      %p217 = scmp.ne.s32.totalorder %s202, %s216
      %p218 = scmp.eq.s32.totalorder %s24, 0
      %p219 = por %p217, %p218
      %s221 = sadd.s32 %s220, 1
      %p224 = scmp.eq.s32.totalorder %s18, 1
      %p225 = scmp.ne.s32.totalorder %s220, %s222
      %p226 = scmp.eq.s32.totalorder %s18, 0
      %p227 = por %p225, %p226
      %p228 = scmp.ne.s32.totalorder %s220, %s222
      %p229 = scmp.eq.s32.totalorder %s23, 1
      %p230 = por %p228, %p229
      %p231 = scmp.ne.s32.totalorder %s222, %s223
      %p232 = scmp.eq.s32.totalorder %s23, 0
      %p233 = por %p231, %p232
      %p234 = scmp.ne.s32.totalorder %s222, %s223
      %p235 = scmp.eq.s32.totalorder %s24, 1
      %p236 = por %p234, %p235
      %p238 = scmp.ne.s32.totalorder %s223, %s237
      %p239 = scmp.eq.s32.totalorder %s24, 0
      %p240 = por %p238, %p239
      %s241 = ssub.s32 %s18, %s25
      %p242 = scmp.eq.s32.totalorder %s241, 0
      %s244 = sadd.s32 %s243, 1
      %s245 = scalar_select %p242, %s243, %s244
      %p248 = pneg %p242
      %p249 = scmp.eq.s32.totalorder %s18, 1
      %p250 = por %p248, %p249
      %p251 = scmp.ne.s32.totalorder %s243, %s246
      %p252 = scmp.eq.s32.totalorder %s18, 0
      %p253 = por %p251, %p252
      %p254 = scmp.ne.s32.totalorder %s243, %s246
      %p255 = scmp.eq.s32.totalorder %s23, 1
      %p256 = por %p254, %p255
      %p257 = scmp.ne.s32.totalorder %s246, %s247
      %p258 = scmp.eq.s32.totalorder %s23, 0
      %p259 = por %p257, %p258
      %p260 = scmp.ne.s32.totalorder %s246, %s247
      %p261 = scmp.eq.s32.totalorder %s24, 1
      %p262 = por %p260, %p261
      %p264 = scmp.ne.s32.totalorder %s247, %s263
      %p265 = scmp.eq.s32.totalorder %s24, 0
      %p266 = por %p264, %p265
      %p267 = scmp.le.s32.totalorder 1, %s18
      %p268 = scmp.lt.s32.totalorder %s18, 3
      %p269 = pnand %p267, %p268
      %p270 = pneg %p269
      // Predicated region
      $region9: #{_lambda_.2} parent=5 // pred_check
        _
      $region10: #{_lambda_.2} parent=5 // pred_check_branch
        %272 = sbr.rel (%p269) target = $region12
      $region11: #{_lambda_.2} parent=5 // pred_region
        %s273 = ssub.s32 %s18, 1
        // Predicated region
        $region13: #{_lambda_.2} parent=11 // pred_check
          %p274 = pneg %p65
        $region14: #{_lambda_.2} parent=11 // pred_check_branch
          %276 = sbr.rel (%p274) target = $region16
        $region15: #{_lambda_.2} parent=11 // pred_region
          _
        $region16: #{_lambda_.2} parent=11 // pred_fallthru
          _
        // Predicated region
        $region17: #{_lambda_.2} parent=11 // pred_check
          %p277 = pneg %p86
        $region18: #{_lambda_.2} parent=11 // pred_check_branch
          %279 = sbr.rel (%p277) target = $region20
        $region19: #{_lambda_.2} parent=11 // pred_region
          _
        $region20: #{_lambda_.2} parent=11 // pred_fallthru
          _
        // Predicated region
        $region21: #{_lambda_.2} parent=11 // pred_check
          %p280 = pneg %p107
        $region22: #{_lambda_.2} parent=11 // pred_check_branch
          %282 = sbr.rel (%p280) target = $region24
        $region23: #{_lambda_.2} parent=11 // pred_region
          %s284 = ssub.s32 2048, 2048
          %285 = vsyncadd [#allocation3], %s284
          %s286 = sshll.u32 [#allocation2], 4
          %s287 = int_to_ptr.vmem [resolvable:$true] %s286
          %292 = dma.hbm_to_vmem [thread:$0]  %s3, 2048, %s287, [#allocation3], 128, 128, 8
        $region24: #{_lambda_.2} parent=11 // pred_fallthru
          _
        // Predicated region
        $region25: #{_lambda_.2} parent=11 // pred_check
          %p293 = pneg %p128
        $region26: #{_lambda_.2} parent=11 // pred_check_branch
          %295 = sbr.rel (%p293) target = $region28
        $region27: #{_lambda_.2} parent=11 // pred_region
          _
        $region28: #{_lambda_.2} parent=11 // pred_fallthru
          _
        // Predicated region
        $region29: #{_lambda_.2} parent=11 // pred_check
          %p296 = pneg %p149
        $region30: #{_lambda_.2} parent=11 // pred_check_branch
          %298 = sbr.rel (%p296) target = $region32
        $region31: #{_lambda_.2} parent=11 // pred_region
          %s300 = ssub.s32 8192, 8192
          %301 = vsyncadd [#allocation5], %s300
          %s302 = sshll.u32 [#allocation4], 4
          %s303 = int_to_ptr.vmem [resolvable:$true] %s302
          %308 = dma.hbm_to_vmem [thread:$0]  %s5, 8192, %s303, [#allocation5], 256, 256, 16
        $region32: #{_lambda_.2} parent=11 // pred_fallthru
          _
        // Predicated region
        $region33: #{_lambda_.2} parent=11 // pred_check
          %p309 = pneg %p170
        $region34: #{_lambda_.2} parent=11 // pred_check_branch
          %311 = sbr.rel (%p309) target = $region36
        $region35: #{_lambda_.2} parent=11 // pred_region
          %s313 = ssub.s32 8192, 8192
          %314 = vsyncadd [#allocation5], %s313
          %s315 = sshll.u32 [#allocation6], 4
          %s316 = int_to_ptr.vmem [resolvable:$true] %s315
          %321 = dma.hbm_to_vmem [thread:$0]  %s6, 8192, %s316, [#allocation5], 256, 256, 16
        $region36: #{_lambda_.2} parent=11 // pred_fallthru
          _
        // Predicated region
        $region37: #{_lambda_.2} parent=11 // pred_check
          %p322 = pneg %p191
        $region38: #{_lambda_.2} parent=11 // pred_check_branch
          %324 = sbr.rel (%p322) target = $region40
        $region39: #{_lambda_.2} parent=11 // pred_region
          _
        $region40: #{_lambda_.2} parent=11 // pred_fallthru
          _
        // Predicated region
        $region41: #{_lambda_.2} parent=11 // pred_check
          %p325 = pneg %p212
        $region42: #{_lambda_.2} parent=11 // pred_check_branch
          %327 = sbr.rel (%p325) target = $region44
        $region43: #{_lambda_.2} parent=11 // pred_region
          _
        $region44: #{_lambda_.2} parent=11 // pred_fallthru
          _
        // Predicated region
        $region45: #{_lambda_.2} parent=11 // pred_check
          %p328 = pneg %p233
        $region46: #{_lambda_.2} parent=11 // pred_check_branch
          %330 = sbr.rel (%p328) target = $region48
        $region47: #{_lambda_.2} parent=11 // pred_region
          _
        $region48: #{_lambda_.2} parent=11 // pred_fallthru
          _
      $region12: #{_lambda_.2} parent=5 // pred_fallthru
        _
      %p331 = scmp.lt.s32.totalorder %s18, 2
      // Predicated region
      $region49: #{_lambda_.2} parent=5 // pred_check
        %p332 = pneg %p331
      $region50: #{_lambda_.2} parent=5 // pred_check_branch
        %334 = sbr.rel (%p332) target = $region52
      $region51: #{_lambda_.2} parent=5 // pred_region
        // Predicated region
        $region53: #{_lambda_.2} parent=51 // pred_check
          %p335 = pneg %p38
        $region54: #{_lambda_.2} parent=51 // pred_check_branch
          %337 = sbr.rel (%p335) target = $region56
        $region55: #{_lambda_.2} parent=51 // pred_region
          %p338 = scmp.lt.s32.totalorder %s18, 1
          %s339 = scalar_select %p338, %s18, 1
          %s340 = smul.addr %s339, 16
          %s341 = smul.addr %s340, 8
          %s342 = scalar_lea.vmem %s0, %s341
        $region56: #{_lambda_.2} parent=51 // pred_fallthru
          _
      $region52: #{_lambda_.2} parent=5 // pred_fallthru
        _
      %p343 = scmp.le.s32.totalorder 1, %s18
      %p344 = scmp.lt.s32.totalorder %s18, 3
      %p345 = pnand %p343, %p344
      %p346 = pneg %p345
      // Predicated region
      $region57: #{_lambda_.2} parent=5 // pred_check
        _
      $region58: #{_lambda_.2} parent=5 // pred_check_branch
        %348 = sbr.rel (%p345) target = $region60
      $region59: #{_lambda_.2} parent=5 // pred_region
        %s349 = ssub.s32 %s18, 1
        // Predicated region
        $region61: #{_lambda_.2} parent=59 // pred_check
          %p350 = pneg %p107
        $region62: #{_lambda_.2} parent=59 // pred_check_branch
          %352 = sbr.rel (%p350) target = $region64
        $region63: #{_lambda_.2} parent=59 // pred_region
          %353 = dma.done [#allocation3], 2048
        $region64: #{_lambda_.2} parent=59 // pred_fallthru
          _
        // Predicated region
        $region65: #{_lambda_.2} parent=59 // pred_check
          %p354 = pneg %p149
        $region66: #{_lambda_.2} parent=59 // pred_check_branch
          %356 = sbr.rel (%p354) target = $region68
        $region67: #{_lambda_.2} parent=59 // pred_region
          %357 = dma.done [#allocation5], 8192
        $region68: #{_lambda_.2} parent=59 // pred_fallthru
          _
        // Predicated region
        $region69: #{_lambda_.2} parent=59 // pred_check
          %p358 = pneg %p170
        $region70: #{_lambda_.2} parent=59 // pred_check_branch
          %360 = sbr.rel (%p358) target = $region72
        $region71: #{_lambda_.2} parent=59 // pred_region
          %361 = dma.done [#allocation5], 8192
        $region72: #{_lambda_.2} parent=59 // pred_fallthru
          _
        %p362 = scmp.lt.s32.totalorder %s23, 1
        %s363 = scalar_select %p362, %s23, 1
        %s364 = smul.addr %s363, 16
        %s365 = smul.addr %s364, 8
        %s366 = scalar_lea.vmem %s0, %s365
        %p367 = pneg %p44
        %p368 = pneg %p41
        %p369 = pneg %p65
        %p370 = pneg %p62
        %p371 = pneg %p86
        %p372 = pneg %p83
        %p373 = pneg %p107
        %p374 = pneg %p104
        %p375 = pneg %p128
        %p376 = pneg %p125
        %p377 = pneg %p149
        %p378 = pneg %p146
        %p379 = pneg %p170
        %p380 = pneg %p167
        %p381 = pneg %p191
        %p382 = pneg %p188
        %p383 = pneg %p212
        %p384 = pneg %p209
        %p385 = pneg %p233
        %p386 = pneg %p230
        %p387 = pneg %p259
        %p388 = pneg %p256
        %p389 = scmp.lt.s32.totalorder %s23, 1
        %s390 = scalar_select %p389, %s23, 1
        %s391 = smul.addr %s390, 2
        %s392 = scalar_lea.vmem %s10, %s391
        %p393 = scmp.lt.s32.totalorder %s23, 1
        %s394 = scalar_select %p393, %s23, 1
        %s395 = smul.addr %s394, 16
        %s396 = smul.addr %s395, 8
        %s397 = scalar_lea.vmem %s0, %s396
        %p398 = scmp.lt.s32.totalorder %s23, 1
        %s399 = scalar_select %p398, %s23, 1
        %s400 = smul.addr %s399, 2
        %s401 = scalar_lea.vmem %s10, %s400
        %v403 = vld [vmem:[%s397] sm:$0xff]
        %v404 = vld [vmem:[%s397 + $0x8] sm:$0xff]
        %v405 = vld [vmem:[%s397 + $0x10] sm:$0xff]
        %v406 = vld [vmem:[%s397 + $0x18] sm:$0xff]
        %v407 = vld [vmem:[%s397 + $0x20] sm:$0xff]
        %v408 = vld [vmem:[%s397 + $0x28] sm:$0xff]
        %v409 = vld [vmem:[%s397 + $0x30] sm:$0xff]
        %v410 = vld [vmem:[%s397 + $0x38] sm:$0xff]
        %v411 = vld [vmem:[%s397 + $0x40] sm:$0xff]
        %v412 = vld [vmem:[%s397 + $0x48] sm:$0xff]
        %v413 = vld [vmem:[%s397 + $0x50] sm:$0xff]
        %v414 = vld [vmem:[%s397 + $0x58] sm:$0xff]
        %v415 = vld [vmem:[%s397 + $0x60] sm:$0xff]
        %v416 = vld [vmem:[%s397 + $0x68] sm:$0xff]
        %v417 = vld [vmem:[%s397 + $0x70] sm:$0xff]
        %v418 = vld [vmem:[%s397 + $0x78] sm:$0xff]
        %v419 = vld [vmem:[%s1] sm:$0x7]
        %421 = vset.pattern.permute.xlu0 0
        %422 = vperm.xlu0 %421, %v403
        %v423 = vpop.permute.xlu0 %422
        %426 = vset.pattern.permute.xlu0 0
        %427 = vperm.xlu0 %426, %v404
        %v428 = vpop.permute.xlu0 %427
        %431 = vset.pattern.permute.xlu0 0
        %432 = vperm.xlu0 %431, %v405
        %v433 = vpop.permute.xlu0 %432
        %436 = vset.pattern.permute.xlu0 0
        %437 = vperm.xlu0 %436, %v406
        %v438 = vpop.permute.xlu0 %437
        %441 = vset.pattern.permute.xlu0 0
        %442 = vperm.xlu0 %441, %v407
        %v443 = vpop.permute.xlu0 %442
        %446 = vset.pattern.permute.xlu0 0
        %447 = vperm.xlu0 %446, %v408
        %v448 = vpop.permute.xlu0 %447
        %451 = vset.pattern.permute.xlu0 0
        %452 = vperm.xlu0 %451, %v409
        %v453 = vpop.permute.xlu0 %452
        %456 = vset.pattern.permute.xlu0 0
        %457 = vperm.xlu0 %456, %v410
        %v458 = vpop.permute.xlu0 %457
        %461 = vset.pattern.permute.xlu0 0
        %462 = vperm.xlu0 %461, %v411
        %v463 = vpop.permute.xlu0 %462
        %466 = vset.pattern.permute.xlu0 0
        %467 = vperm.xlu0 %466, %v412
        %v468 = vpop.permute.xlu0 %467
        %471 = vset.pattern.permute.xlu0 0
        %472 = vperm.xlu0 %471, %v413
        %v473 = vpop.permute.xlu0 %472
        %476 = vset.pattern.permute.xlu0 0
        %477 = vperm.xlu0 %476, %v414
        %v478 = vpop.permute.xlu0 %477
        %481 = vset.pattern.permute.xlu0 0
        %482 = vperm.xlu0 %481, %v415
        %v483 = vpop.permute.xlu0 %482
        %486 = vset.pattern.permute.xlu0 0
        %487 = vperm.xlu0 %486, %v416
        %v488 = vpop.permute.xlu0 %487
        %491 = vset.pattern.permute.xlu0 0
        %492 = vperm.xlu0 %491, %v417
        %v493 = vpop.permute.xlu0 %492
        %496 = vset.pattern.permute.xlu0 0
        %497 = vperm.xlu0 %496, %v418
        %v498 = vpop.permute.xlu0 %497
        %v500 = vlaneseq
        %v501 = vshrl.u32 %v500, 7
        %v502 = vsub.s32 0, %v501
        %v503 = vrot.slane %v419, %v502
        %v504 = vmul.f32 %v423, %v503
        %v505 = vmul.f32 %v428, %v503
        %v506 = vmul.f32 %v433, %v503
        %v507 = vmul.f32 %v438, %v503
        %v508 = vmul.f32 %v443, %v503
        %v509 = vmul.f32 %v448, %v503
        %v510 = vmul.f32 %v453, %v503
        %v511 = vmul.f32 %v458, %v503
        %v512 = vmul.f32 %v463, %v503
        %v513 = vmul.f32 %v468, %v503
        %v514 = vmul.f32 %v473, %v503
        %v515 = vmul.f32 %v478, %v503
        %v516 = vmul.f32 %v483, %v503
        %v517 = vmul.f32 %v488, %v503
        %v518 = vmul.f32 %v493, %v503
        %v519 = vmul.f32 %v498, %v503
        %520 = vset.pattern.permute.xlu0 1
        %521 = vperm.xlu0 %520, %v403
        %v522 = vpop.permute.xlu0 %521
        %524 = vset.pattern.permute.xlu0 1
        %525 = vperm.xlu0 %524, %v404
        %v526 = vpop.permute.xlu0 %525
        %528 = vset.pattern.permute.xlu0 1
        %529 = vperm.xlu0 %528, %v405
        %v530 = vpop.permute.xlu0 %529
        %532 = vset.pattern.permute.xlu0 1
        %533 = vperm.xlu0 %532, %v406
        %v534 = vpop.permute.xlu0 %533
        %536 = vset.pattern.permute.xlu0 1
        %537 = vperm.xlu0 %536, %v407
        %v538 = vpop.permute.xlu0 %537
        %540 = vset.pattern.permute.xlu0 1
        %541 = vperm.xlu0 %540, %v408
        %v542 = vpop.permute.xlu0 %541
        %544 = vset.pattern.permute.xlu0 1
        %545 = vperm.xlu0 %544, %v409
        %v546 = vpop.permute.xlu0 %545
        %548 = vset.pattern.permute.xlu0 1
        %549 = vperm.xlu0 %548, %v410
        %v550 = vpop.permute.xlu0 %549
        %552 = vset.pattern.permute.xlu0 1
        %553 = vperm.xlu0 %552, %v411
        %v554 = vpop.permute.xlu0 %553
        %556 = vset.pattern.permute.xlu0 1
        %557 = vperm.xlu0 %556, %v412
        %v558 = vpop.permute.xlu0 %557
        %560 = vset.pattern.permute.xlu0 1
        %561 = vperm.xlu0 %560, %v413
        %v562 = vpop.permute.xlu0 %561
        %564 = vset.pattern.permute.xlu0 1
        %565 = vperm.xlu0 %564, %v414
        %v566 = vpop.permute.xlu0 %565
        %568 = vset.pattern.permute.xlu0 1
        %569 = vperm.xlu0 %568, %v415
        %v570 = vpop.permute.xlu0 %569
        %572 = vset.pattern.permute.xlu0 1
        %573 = vperm.xlu0 %572, %v416
        %v574 = vpop.permute.xlu0 %573
        %576 = vset.pattern.permute.xlu0 1
        %577 = vperm.xlu0 %576, %v417
        %v578 = vpop.permute.xlu0 %577
        %580 = vset.pattern.permute.xlu0 1
        %581 = vperm.xlu0 %580, %v418
        %v582 = vpop.permute.xlu0 %581
        %v584 = vlaneseq
        %v585 = vshrl.u32 %v584, 7
        %v586 = vsub.s32 1, %v585
        %v587 = vrot.slane %v419, %v586
        %v588 = vmul.f32 %v522, %v587
        %v589 = vmul.f32 %v526, %v587
        %v590 = vmul.f32 %v530, %v587
        %v591 = vmul.f32 %v534, %v587
        %v592 = vmul.f32 %v538, %v587
        %v593 = vmul.f32 %v542, %v587
        %v594 = vmul.f32 %v546, %v587
        %v595 = vmul.f32 %v550, %v587
        %v596 = vmul.f32 %v554, %v587
        %v597 = vmul.f32 %v558, %v587
        %v598 = vmul.f32 %v562, %v587
        %v599 = vmul.f32 %v566, %v587
        %v600 = vmul.f32 %v570, %v587
        %v601 = vmul.f32 %v574, %v587
        %v602 = vmul.f32 %v578, %v587
        %v603 = vmul.f32 %v582, %v587
        %v604 = vadd.f32 %v504, %v588
        %v605 = vadd.f32 %v505, %v589
        %v606 = vadd.f32 %v506, %v590
        %v607 = vadd.f32 %v507, %v591
        %v608 = vadd.f32 %v508, %v592
        %v609 = vadd.f32 %v509, %v593
        %v610 = vadd.f32 %v510, %v594
        %v611 = vadd.f32 %v511, %v595
        %v612 = vadd.f32 %v512, %v596
        %v613 = vadd.f32 %v513, %v597
        %v614 = vadd.f32 %v514, %v598
        %v615 = vadd.f32 %v515, %v599
        %v616 = vadd.f32 %v516, %v600
        %v617 = vadd.f32 %v517, %v601
        %v618 = vadd.f32 %v518, %v602
        %v619 = vadd.f32 %v519, %v603
        %620 = vset.pattern.permute.xlu0 2
        %621 = vperm.xlu0 %620, %v403
        %v622 = vpop.permute.xlu0 %621
        %624 = vset.pattern.permute.xlu0 2
        %625 = vperm.xlu0 %624, %v404
        %v626 = vpop.permute.xlu0 %625
        %628 = vset.pattern.permute.xlu0 2
        %629 = vperm.xlu0 %628, %v405
        %v630 = vpop.permute.xlu0 %629
        %632 = vset.pattern.permute.xlu0 2
        %633 = vperm.xlu0 %632, %v406
        %v634 = vpop.permute.xlu0 %633
        %636 = vset.pattern.permute.xlu0 2
        %637 = vperm.xlu0 %636, %v407
        %v638 = vpop.permute.xlu0 %637
        %640 = vset.pattern.permute.xlu0 2
        %641 = vperm.xlu0 %640, %v408
        %v642 = vpop.permute.xlu0 %641
        %644 = vset.pattern.permute.xlu0 2
        %645 = vperm.xlu0 %644, %v409
        %v646 = vpop.permute.xlu0 %645
        %648 = vset.pattern.permute.xlu0 2
        %649 = vperm.xlu0 %648, %v410
        %v650 = vpop.permute.xlu0 %649
        %652 = vset.pattern.permute.xlu0 2
        %653 = vperm.xlu0 %652, %v411
        %v654 = vpop.permute.xlu0 %653
        %656 = vset.pattern.permute.xlu0 2
        %657 = vperm.xlu0 %656, %v412
        %v658 = vpop.permute.xlu0 %657
        %660 = vset.pattern.permute.xlu0 2
        %661 = vperm.xlu0 %660, %v413
        %v662 = vpop.permute.xlu0 %661
        %664 = vset.pattern.permute.xlu0 2
        %665 = vperm.xlu0 %664, %v414
        %v666 = vpop.permute.xlu0 %665
        %668 = vset.pattern.permute.xlu0 2
        %669 = vperm.xlu0 %668, %v415
        %v670 = vpop.permute.xlu0 %669
        %672 = vset.pattern.permute.xlu0 2
        %673 = vperm.xlu0 %672, %v416
        %v674 = vpop.permute.xlu0 %673
        %676 = vset.pattern.permute.xlu0 2
        %677 = vperm.xlu0 %676, %v417
        %v678 = vpop.permute.xlu0 %677
        %680 = vset.pattern.permute.xlu0 2
        %681 = vperm.xlu0 %680, %v418
        %v682 = vpop.permute.xlu0 %681
        %v684 = vlaneseq
        %v685 = vshrl.u32 %v684, 7
        %v686 = vsub.s32 2, %v685
        %v687 = vrot.slane %v419, %v686
        %v688 = vmul.f32 %v622, %v687
        %v689 = vmul.f32 %v626, %v687
        %v690 = vmul.f32 %v630, %v687
        %v691 = vmul.f32 %v634, %v687
        %v692 = vmul.f32 %v638, %v687
        %v693 = vmul.f32 %v642, %v687
        %v694 = vmul.f32 %v646, %v687
        %v695 = vmul.f32 %v650, %v687
        %v696 = vmul.f32 %v654, %v687
        %v697 = vmul.f32 %v658, %v687
        %v698 = vmul.f32 %v662, %v687
        %v699 = vmul.f32 %v666, %v687
        %v700 = vmul.f32 %v670, %v687
        %v701 = vmul.f32 %v674, %v687
        %v702 = vmul.f32 %v678, %v687
        %v703 = vmul.f32 %v682, %v687
        %v704 = vadd.f32 %v604, %v688
        %v705 = vadd.f32 %v605, %v689
        %v706 = vadd.f32 %v606, %v690
        %v707 = vadd.f32 %v607, %v691
        %v708 = vadd.f32 %v608, %v692
        %v709 = vadd.f32 %v609, %v693
        %v710 = vadd.f32 %v610, %v694
        %v711 = vadd.f32 %v611, %v695
        %v712 = vadd.f32 %v612, %v696
        %v713 = vadd.f32 %v613, %v697
        %v714 = vadd.f32 %v614, %v698
        %v715 = vadd.f32 %v615, %v699
        %v716 = vadd.f32 %v616, %v700
        %v717 = vadd.f32 %v617, %v701
        %v718 = vadd.f32 %v618, %v702
        %v719 = vadd.f32 %v619, %v703
        %v720 = vld [vmem:[%s2] sm:$0x1]
        %v722 = vlaneseq
        %v723 = vshrl.u32 %v722, 7
        %v724 = vsub.s32 0, %v723
        %v725 = vrot.slane %v720, %v724
        %v727 = vadd.f32 %v704, %v725
        %v728 = vadd.f32 %v705, %v725
        %v729 = vadd.f32 %v706, %v725
        %v730 = vadd.f32 %v707, %v725
        %v731 = vadd.f32 %v708, %v725
        %v732 = vadd.f32 %v709, %v725
        %v733 = vadd.f32 %v710, %v725
        %v734 = vadd.f32 %v711, %v725
        %v735 = vadd.f32 %v712, %v725
        %v736 = vadd.f32 %v713, %v725
        %v737 = vadd.f32 %v714, %v725
        %v738 = vadd.f32 %v715, %v725
        %v739 = vadd.f32 %v716, %v725
        %v740 = vadd.f32 %v717, %v725
        %v741 = vadd.f32 %v718, %v725
        %v742 = vadd.f32 %v719, %v725
        %v743 = vmax.f32 %v727, 0.0
        %v744 = vmax.f32 %v728, 0.0
        %v745 = vmax.f32 %v729, 0.0
        %v746 = vmax.f32 %v730, 0.0
        %v747 = vmax.f32 %v731, 0.0
        %v748 = vmax.f32 %v732, 0.0
        %v749 = vmax.f32 %v733, 0.0
        %v750 = vmax.f32 %v734, 0.0
        %v751 = vmax.f32 %v735, 0.0
        %v752 = vmax.f32 %v736, 0.0
        %v753 = vmax.f32 %v737, 0.0
        %v754 = vmax.f32 %v738, 0.0
        %v755 = vmax.f32 %v739, 0.0
        %v756 = vmax.f32 %v740, 0.0
        %v757 = vmax.f32 %v741, 0.0
        %v758 = vmax.f32 %v742, 0.0
        %v759 = vld [vmem:[#allocation2] sm:$0xff]
        %v760 = vld [vmem:[#allocation2 + $0x8] sm:$0xff]
        %v761 = vld [vmem:[#allocation2 + $0x10] sm:$0xff]
        %v762 = vld [vmem:[#allocation2 + $0x18] sm:$0xff]
        %v763 = vld [vmem:[#allocation2 + $0x20] sm:$0xff]
        %v764 = vld [vmem:[#allocation2 + $0x28] sm:$0xff]
        %v765 = vld [vmem:[#allocation2 + $0x30] sm:$0xff]
        %v766 = vld [vmem:[#allocation2 + $0x38] sm:$0xff]
        %v767 = vld [vmem:[#allocation2 + $0x40] sm:$0xff]
        %v768 = vld [vmem:[#allocation2 + $0x48] sm:$0xff]
        %v769 = vld [vmem:[#allocation2 + $0x50] sm:$0xff]
        %v770 = vld [vmem:[#allocation2 + $0x58] sm:$0xff]
        %v771 = vld [vmem:[#allocation2 + $0x60] sm:$0xff]
        %v772 = vld [vmem:[#allocation2 + $0x68] sm:$0xff]
        %v773 = vld [vmem:[#allocation2 + $0x70] sm:$0xff]
        %v774 = vld [vmem:[#allocation2 + $0x78] sm:$0xff]
        %v775 = vpack.c.bf16 %v744, %v743
        %v776 = vpack.c.bf16 %v746, %v745
        %v777 = vpack.c.bf16 %v748, %v747
        %v778 = vpack.c.bf16 %v750, %v749
        %v779 = vpack.c.bf16 %v752, %v751
        %v780 = vpack.c.bf16 %v754, %v753
        %v781 = vpack.c.bf16 %v756, %v755
        %v782 = vpack.c.bf16 %v758, %v757
        %v783 = vld [vmem:[%s4] sm:$0x3]
        %v785 = vlaneseq
        %v786 = vshrl.u32 %v785, 7
        %v787 = vsub.s32 0, %v786
        %v788 = vrot.slane %v783, %v787
        %v789 = vlaneseq
        %v790 = vshrl.u32 %v789, 7
        %v791 = vsub.s32 1, %v790
        %v792 = vrot.slane %v783, %v791
        %v811 = vunpack.c.l.b16 %v759
        %v812 = vunpack.c.h.b16 %v759
        %v813 = vunpack.c.l.b16 %v760
        %v814 = vunpack.c.h.b16 %v760
        %v815 = vunpack.c.l.b16 %v761
        %v816 = vunpack.c.h.b16 %v761
        %v817 = vunpack.c.l.b16 %v762
        %v818 = vunpack.c.h.b16 %v762
        %v819 = vunpack.c.l.b16 %v763
        %v820 = vunpack.c.h.b16 %v763
        %v821 = vunpack.c.l.b16 %v764
        %v822 = vunpack.c.h.b16 %v764
        %v823 = vunpack.c.l.b16 %v765
        %v824 = vunpack.c.h.b16 %v765
        %v825 = vunpack.c.l.b16 %v766
        %v826 = vunpack.c.h.b16 %v766
        %v827 = vunpack.c.l.b16 %v767
        %v828 = vunpack.c.h.b16 %v767
        %v829 = vunpack.c.l.b16 %v768
        %v830 = vunpack.c.h.b16 %v768
        %v831 = vunpack.c.l.b16 %v769
        %v832 = vunpack.c.h.b16 %v769
        %v833 = vunpack.c.l.b16 %v770
        %v834 = vunpack.c.h.b16 %v770
        %v835 = vunpack.c.l.b16 %v771
        %v836 = vunpack.c.h.b16 %v771
        %v837 = vunpack.c.l.b16 %v772
        %v838 = vunpack.c.h.b16 %v772
        %v839 = vunpack.c.l.b16 %v773
        %v840 = vunpack.c.h.b16 %v773
        %v841 = vunpack.c.l.b16 %v774
        %v842 = vunpack.c.h.b16 %v774
        %v843 = vpack.c.b16 %v813, %v811
        %v844 = vpack.c.b16 %v814, %v812
        %v845 = vpack.c.b16 %v817, %v815
        %v846 = vpack.c.b16 %v818, %v816
        %v847 = vpack.c.b16 %v821, %v819
        %v848 = vpack.c.b16 %v822, %v820
        %v849 = vpack.c.b16 %v825, %v823
        %v850 = vpack.c.b16 %v826, %v824
        %v851 = vpack.c.b16 %v829, %v827
        %v852 = vpack.c.b16 %v830, %v828
        %v853 = vpack.c.b16 %v833, %v831
        %v854 = vpack.c.b16 %v834, %v832
        %v855 = vpack.c.b16 %v837, %v835
        %v856 = vpack.c.b16 %v838, %v836
        %v857 = vpack.c.b16 %v841, %v839
        %v858 = vpack.c.b16 %v842, %v840
        %875 = vmatprep.subr.bf16.mxu0 %v858
        %876 = vmatpush1.bf16.msra.mxu0 %v857
        %877 = vmatprep.subr.bf16.mxu0 %v856
        %878 = vmatpush1.bf16.msra.mxu0 %v855
        %879 = vmatprep.subr.bf16.mxu0 %v854
        %880 = vmatpush1.bf16.msra.mxu0 %v853
        %881 = vmatprep.subr.bf16.mxu0 %v852
        %882 = vmatpush1.bf16.msra.mxu0 %v851
        %883 = vmatprep.subr.bf16.mxu0 %v850
        %884 = vmatpush1.bf16.msra.mxu0 %v849
        %885 = vmatprep.subr.bf16.mxu0 %v848
        %886 = vmatpush1.bf16.msra.mxu0 %v847
        %887 = vmatprep.subr.bf16.mxu0 %v846
        %888 = vmatpush1.bf16.msra.mxu0 %v845
        %889 = vmatprep.subr.bf16.mxu0 %v844
        %890 = vmatpush1.bf16.msra.mxu0 %v843
        %891 = vmatprep.subr.bf16.mxu0 0
        %892 = vmatpush2.bf16.msra.mxu0 0
        %893 = vmatprep.subr.bf16.mxu0 0
        %894 = vmatpush2.bf16.msra.mxu0 0
        %895 = vmatprep.subr.bf16.mxu0 0
        %896 = vmatpush2.bf16.msra.mxu0 0
        %897 = vmatprep.subr.bf16.mxu0 0
        %898 = vmatpush2.bf16.msra.mxu0 0
        %899 = vmatprep.subr.bf16.mxu0 0
        %900 = vmatpush2.bf16.msra.mxu0 0
        %901 = vmatprep.subr.bf16.mxu0 0
        %902 = vmatpush2.bf16.msra.mxu0 0
        %903 = vmatprep.subr.bf16.mxu0 0
        %904 = vmatpush2.bf16.msra.mxu0 0
        %905 = vmatprep.subr.bf16.mxu0 0
        %906 = vmatpush2.bf16.msra.mxu0 0
        %907 = vmatprep.mubr.bf16.mxu0 0
        %908 = vmatmul.mubr.bf16.gmra.mxu0 %v775
        %v909 = vpop.f32.mrf.mxu0
        %v910 = vadd.f32 %v788, %v909
        %v911 = vpop.f32.mrf.mxu0
        %v912 = vadd.f32 %v792, %v911
        %v913 = vpop.f32.mrf.mxu0
        %v914 = vadd.f32 %v788, %v913
        %v915 = vpop.f32.mrf.mxu0
        %v916 = vadd.f32 %v792, %v915
        %917 = vmatprep.mubr.bf16.mxu0 0
        %918 = vmatmul.mubr.bf16.gmra.mxu0 %v776
        %v919 = vpop.f32.mrf.mxu0
        %v920 = vadd.f32 %v788, %v919
        %v921 = vpop.f32.mrf.mxu0
        %v922 = vadd.f32 %v792, %v921
        %v923 = vpop.f32.mrf.mxu0
        %v924 = vadd.f32 %v788, %v923
        %v925 = vpop.f32.mrf.mxu0
        %v926 = vadd.f32 %v792, %v925
        %927 = vmatprep.mubr.bf16.mxu0 0
        %928 = vmatmul.mubr.bf16.gmra.mxu0 %v777
        %v929 = vpop.f32.mrf.mxu0
        %v930 = vadd.f32 %v788, %v929
        %v931 = vpop.f32.mrf.mxu0
        %v932 = vadd.f32 %v792, %v931
        %v933 = vpop.f32.mrf.mxu0
        %v934 = vadd.f32 %v788, %v933
        %v935 = vpop.f32.mrf.mxu0
        %v936 = vadd.f32 %v792, %v935
        %937 = vmatprep.mubr.bf16.mxu0 0
        %938 = vmatmul.mubr.bf16.gmra.mxu0 %v778
        %v939 = vpop.f32.mrf.mxu0
        %v940 = vadd.f32 %v788, %v939
        %v941 = vpop.f32.mrf.mxu0
        %v942 = vadd.f32 %v792, %v941
        %v943 = vpop.f32.mrf.mxu0
        %v944 = vadd.f32 %v788, %v943
        %v945 = vpop.f32.mrf.mxu0
        %v946 = vadd.f32 %v792, %v945
        %947 = vmatprep.mubr.bf16.mxu0 0
        %948 = vmatmul.mubr.bf16.gmra.mxu0 %v779
        %v949 = vpop.f32.mrf.mxu0
        %v950 = vadd.f32 %v788, %v949
        %v951 = vpop.f32.mrf.mxu0
        %v952 = vadd.f32 %v792, %v951
        %v953 = vpop.f32.mrf.mxu0
        %v954 = vadd.f32 %v788, %v953
        %v955 = vpop.f32.mrf.mxu0
        %v956 = vadd.f32 %v792, %v955
        %957 = vmatprep.mubr.bf16.mxu0 0
        %958 = vmatmul.mubr.bf16.gmra.mxu0 %v780
        %v959 = vpop.f32.mrf.mxu0
        %v960 = vadd.f32 %v788, %v959
        %v961 = vpop.f32.mrf.mxu0
        %v962 = vadd.f32 %v792, %v961
        %v963 = vpop.f32.mrf.mxu0
        %v964 = vadd.f32 %v788, %v963
        %v965 = vpop.f32.mrf.mxu0
        %v966 = vadd.f32 %v792, %v965
        %967 = vmatprep.mubr.bf16.mxu0 0
        %968 = vmatmul.mubr.bf16.gmra.mxu0 %v781
        %v969 = vpop.f32.mrf.mxu0
        %v970 = vadd.f32 %v788, %v969
        %v971 = vpop.f32.mrf.mxu0
        %v972 = vadd.f32 %v792, %v971
        %v973 = vpop.f32.mrf.mxu0
        %v974 = vadd.f32 %v788, %v973
        %v975 = vpop.f32.mrf.mxu0
        %v976 = vadd.f32 %v792, %v975
        %977 = vmatprep.mubr.bf16.mxu0 0
        %978 = vmatmul.mubr.bf16.gmra.mxu0 %v782
        %v979 = vpop.f32.mrf.mxu0
        %v980 = vadd.f32 %v788, %v979
        %v981 = vpop.f32.mrf.mxu0
        %v982 = vadd.f32 %v792, %v981
        %v983 = vpop.f32.mrf.mxu0
        %v984 = vadd.f32 %v788, %v983
        %v985 = vpop.f32.mrf.mxu0
        %v986 = vadd.f32 %v792, %v985
        %987 = vdwg.mxu0
        %v988 = vmax.f32 %v910, 0.0
        %v989 = vmax.f32 %v912, 0.0
        %v990 = vmax.f32 %v914, 0.0
        %v991 = vmax.f32 %v916, 0.0
        %v992 = vmax.f32 %v920, 0.0
        %v993 = vmax.f32 %v922, 0.0
        %v994 = vmax.f32 %v924, 0.0
        %v995 = vmax.f32 %v926, 0.0
        %v996 = vmax.f32 %v930, 0.0
        %v997 = vmax.f32 %v932, 0.0
        %v998 = vmax.f32 %v934, 0.0
        %v999 = vmax.f32 %v936, 0.0
        %v1000 = vmax.f32 %v940, 0.0
        %v1001 = vmax.f32 %v942, 0.0
        %v1002 = vmax.f32 %v944, 0.0
        %v1003 = vmax.f32 %v946, 0.0
        %v1004 = vmax.f32 %v950, 0.0
        %v1005 = vmax.f32 %v952, 0.0
        %v1006 = vmax.f32 %v954, 0.0
        %v1007 = vmax.f32 %v956, 0.0
        %v1008 = vmax.f32 %v960, 0.0
        %v1009 = vmax.f32 %v962, 0.0
        %v1010 = vmax.f32 %v964, 0.0
        %v1011 = vmax.f32 %v966, 0.0
        %v1012 = vmax.f32 %v970, 0.0
        %v1013 = vmax.f32 %v972, 0.0
        %v1014 = vmax.f32 %v974, 0.0
        %v1015 = vmax.f32 %v976, 0.0
        %v1016 = vmax.f32 %v980, 0.0
        %v1017 = vmax.f32 %v982, 0.0
        %v1018 = vmax.f32 %v984, 0.0
        %v1019 = vmax.f32 %v986, 0.0
        %v1020 = vmax.f32 %v988, %v990
        %v1021 = vmax.f32 %v1020, %v992
        %v1022 = vmax.f32 %v1021, %v994
        %v1023 = vmax.f32 %v1022, %v996
        %v1024 = vmax.f32 %v1023, %v998
        %v1025 = vmax.f32 %v1024, %v1000
        %v1026 = vmax.f32 %v1025, %v1002
        %v1027 = vrot.slane %v1026, 4
        %v1028 = vmax.f32 %v1026, %v1027
        %v1029 = vrot.slane %v1028, 2
        %v1030 = vmax.f32 %v1028, %v1029
        %v1031 = vrot.slane %v1030, 1
        %v1032 = vmax.f32 %v1030, %v1031
        %v1033 = vmax.f32 %v989, %v991
        %v1034 = vmax.f32 %v1033, %v993
        %v1035 = vmax.f32 %v1034, %v995
        %v1036 = vmax.f32 %v1035, %v997
        %v1037 = vmax.f32 %v1036, %v999
        %v1038 = vmax.f32 %v1037, %v1001
        %v1039 = vmax.f32 %v1038, %v1003
        %v1040 = vrot.slane %v1039, 4
        %v1041 = vmax.f32 %v1039, %v1040
        %v1042 = vrot.slane %v1041, 2
        %v1043 = vmax.f32 %v1041, %v1042
        %v1044 = vrot.slane %v1043, 1
        %v1045 = vmax.f32 %v1043, %v1044
        %v1046 = vmax.f32 %v1004, %v1006
        %v1047 = vmax.f32 %v1046, %v1008
        %v1048 = vmax.f32 %v1047, %v1010
        %v1049 = vmax.f32 %v1048, %v1012
        %v1050 = vmax.f32 %v1049, %v1014
        %v1051 = vmax.f32 %v1050, %v1016
        %v1052 = vmax.f32 %v1051, %v1018
        %v1053 = vrot.slane %v1052, 4
        %v1054 = vmax.f32 %v1052, %v1053
        %v1055 = vrot.slane %v1054, 2
        %v1056 = vmax.f32 %v1054, %v1055
        %v1057 = vrot.slane %v1056, 1
        %v1058 = vmax.f32 %v1056, %v1057
        %v1059 = vmax.f32 %v1005, %v1007
        %v1060 = vmax.f32 %v1059, %v1009
        %v1061 = vmax.f32 %v1060, %v1011
        %v1062 = vmax.f32 %v1061, %v1013
        %v1063 = vmax.f32 %v1062, %v1015
        %v1064 = vmax.f32 %v1063, %v1017
        %v1065 = vmax.f32 %v1064, %v1019
        %v1066 = vrot.slane %v1065, 4
        %v1067 = vmax.f32 %v1065, %v1066
        %v1068 = vrot.slane %v1067, 2
        %v1069 = vmax.f32 %v1067, %v1068
        %v1070 = vrot.slane %v1069, 1
        %v1071 = vmax.f32 %v1069, %v1070
        %v1072 = vld [vmem:[#allocation4] sm:$0xff]
        %v1073 = vld [vmem:[#allocation4 + $0x8] sm:$0xff]
        %v1074 = vld [vmem:[#allocation4 + $0x10] sm:$0xff]
        %v1075 = vld [vmem:[#allocation4 + $0x18] sm:$0xff]
        %v1076 = vld [vmem:[#allocation4 + $0x20] sm:$0xff]
        %v1077 = vld [vmem:[#allocation4 + $0x28] sm:$0xff]
        %v1078 = vld [vmem:[#allocation4 + $0x30] sm:$0xff]
        %v1079 = vld [vmem:[#allocation4 + $0x38] sm:$0xff]
        %v1080 = vld [vmem:[#allocation4 + $0x40] sm:$0xff]
        %v1081 = vld [vmem:[#allocation4 + $0x48] sm:$0xff]
        %v1082 = vld [vmem:[#allocation4 + $0x50] sm:$0xff]
        %v1083 = vld [vmem:[#allocation4 + $0x58] sm:$0xff]
        %v1084 = vld [vmem:[#allocation4 + $0x60] sm:$0xff]
        %v1085 = vld [vmem:[#allocation4 + $0x68] sm:$0xff]
        %v1086 = vld [vmem:[#allocation4 + $0x70] sm:$0xff]
        %v1087 = vld [vmem:[#allocation4 + $0x78] sm:$0xff]
        %v1088 = vld [vmem:[#allocation4 + $0x80] sm:$0xff]
        %v1089 = vld [vmem:[#allocation4 + $0x88] sm:$0xff]
        %v1090 = vld [vmem:[#allocation4 + $0x90] sm:$0xff]
        %v1091 = vld [vmem:[#allocation4 + $0x98] sm:$0xff]
        %v1092 = vld [vmem:[#allocation4 + $0xa0] sm:$0xff]
        %v1093 = vld [vmem:[#allocation4 + $0xa8] sm:$0xff]
        %v1094 = vld [vmem:[#allocation4 + $0xb0] sm:$0xff]
        %v1095 = vld [vmem:[#allocation4 + $0xb8] sm:$0xff]
        %v1096 = vld [vmem:[#allocation4 + $0xc0] sm:$0xff]
        %v1097 = vld [vmem:[#allocation4 + $0xc8] sm:$0xff]
        %v1098 = vld [vmem:[#allocation4 + $0xd0] sm:$0xff]
        %v1099 = vld [vmem:[#allocation4 + $0xd8] sm:$0xff]
        %v1100 = vld [vmem:[#allocation4 + $0xe0] sm:$0xff]
        %v1101 = vld [vmem:[#allocation4 + $0xe8] sm:$0xff]
        %v1102 = vld [vmem:[#allocation4 + $0xf0] sm:$0xff]
        %v1103 = vld [vmem:[#allocation4 + $0xf8] sm:$0xff]
        %v1104 = vld [vmem:[#allocation4 + $0x100] sm:$0xff]
        %v1105 = vld [vmem:[#allocation4 + $0x108] sm:$0xff]
        %v1106 = vld [vmem:[#allocation4 + $0x110] sm:$0xff]
        %v1107 = vld [vmem:[#allocation4 + $0x118] sm:$0xff]
        %v1108 = vld [vmem:[#allocation4 + $0x120] sm:$0xff]
        %v1109 = vld [vmem:[#allocation4 + $0x128] sm:$0xff]
        %v1110 = vld [vmem:[#allocation4 + $0x130] sm:$0xff]
        %v1111 = vld [vmem:[#allocation4 + $0x138] sm:$0xff]
        %v1112 = vld [vmem:[#allocation4 + $0x140] sm:$0xff]
        %v1113 = vld [vmem:[#allocation4 + $0x148] sm:$0xff]
        %v1114 = vld [vmem:[#allocation4 + $0x150] sm:$0xff]
        %v1115 = vld [vmem:[#allocation4 + $0x158] sm:$0xff]
        %v1116 = vld [vmem:[#allocation4 + $0x160] sm:$0xff]
        %v1117 = vld [vmem:[#allocation4 + $0x168] sm:$0xff]
        %v1118 = vld [vmem:[#allocation4 + $0x170] sm:$0xff]
        %v1119 = vld [vmem:[#allocation4 + $0x178] sm:$0xff]
        %v1120 = vld [vmem:[#allocation4 + $0x180] sm:$0xff]
        %v1121 = vld [vmem:[#allocation4 + $0x188] sm:$0xff]
        %v1122 = vld [vmem:[#allocation4 + $0x190] sm:$0xff]
        %v1123 = vld [vmem:[#allocation4 + $0x198] sm:$0xff]
        %v1124 = vld [vmem:[#allocation4 + $0x1a0] sm:$0xff]
        %v1125 = vld [vmem:[#allocation4 + $0x1a8] sm:$0xff]
        %v1126 = vld [vmem:[#allocation4 + $0x1b0] sm:$0xff]
        %v1127 = vld [vmem:[#allocation4 + $0x1b8] sm:$0xff]
        %v1128 = vld [vmem:[#allocation4 + $0x1c0] sm:$0xff]
        %v1129 = vld [vmem:[#allocation4 + $0x1c8] sm:$0xff]
        %v1130 = vld [vmem:[#allocation4 + $0x1d0] sm:$0xff]
        %v1131 = vld [vmem:[#allocation4 + $0x1d8] sm:$0xff]
        %v1132 = vld [vmem:[#allocation4 + $0x1e0] sm:$0xff]
        %v1133 = vld [vmem:[#allocation4 + $0x1e8] sm:$0xff]
        %v1134 = vld [vmem:[#allocation4 + $0x1f0] sm:$0xff]
        %v1135 = vld [vmem:[#allocation4 + $0x1f8] sm:$0xff]
        %v1136 = vld [vmem:[#allocation6] sm:$0xff]
        %v1137 = vld [vmem:[#allocation6 + $0x8] sm:$0xff]
        %v1138 = vld [vmem:[#allocation6 + $0x10] sm:$0xff]
        %v1139 = vld [vmem:[#allocation6 + $0x18] sm:$0xff]
        %v1140 = vld [vmem:[#allocation6 + $0x20] sm:$0xff]
        %v1141 = vld [vmem:[#allocation6 + $0x28] sm:$0xff]
        %v1142 = vld [vmem:[#allocation6 + $0x30] sm:$0xff]
        %v1143 = vld [vmem:[#allocation6 + $0x38] sm:$0xff]
        %v1144 = vld [vmem:[#allocation6 + $0x40] sm:$0xff]
        %v1145 = vld [vmem:[#allocation6 + $0x48] sm:$0xff]
        %v1146 = vld [vmem:[#allocation6 + $0x50] sm:$0xff]
        %v1147 = vld [vmem:[#allocation6 + $0x58] sm:$0xff]
        %v1148 = vld [vmem:[#allocation6 + $0x60] sm:$0xff]
        %v1149 = vld [vmem:[#allocation6 + $0x68] sm:$0xff]
        %v1150 = vld [vmem:[#allocation6 + $0x70] sm:$0xff]
        %v1151 = vld [vmem:[#allocation6 + $0x78] sm:$0xff]
        %v1152 = vld [vmem:[#allocation6 + $0x80] sm:$0xff]
        %v1153 = vld [vmem:[#allocation6 + $0x88] sm:$0xff]
        %v1154 = vld [vmem:[#allocation6 + $0x90] sm:$0xff]
        %v1155 = vld [vmem:[#allocation6 + $0x98] sm:$0xff]
        %v1156 = vld [vmem:[#allocation6 + $0xa0] sm:$0xff]
        %v1157 = vld [vmem:[#allocation6 + $0xa8] sm:$0xff]
        %v1158 = vld [vmem:[#allocation6 + $0xb0] sm:$0xff]
        %v1159 = vld [vmem:[#allocation6 + $0xb8] sm:$0xff]
        %v1160 = vld [vmem:[#allocation6 + $0xc0] sm:$0xff]
        %v1161 = vld [vmem:[#allocation6 + $0xc8] sm:$0xff]
        %v1162 = vld [vmem:[#allocation6 + $0xd0] sm:$0xff]
        %v1163 = vld [vmem:[#allocation6 + $0xd8] sm:$0xff]
        %v1164 = vld [vmem:[#allocation6 + $0xe0] sm:$0xff]
        %v1165 = vld [vmem:[#allocation6 + $0xe8] sm:$0xff]
        %v1166 = vld [vmem:[#allocation6 + $0xf0] sm:$0xff]
        %v1167 = vld [vmem:[#allocation6 + $0xf8] sm:$0xff]
        %v1168 = vld [vmem:[#allocation6 + $0x100] sm:$0xff]
        %v1169 = vld [vmem:[#allocation6 + $0x108] sm:$0xff]
        %v1170 = vld [vmem:[#allocation6 + $0x110] sm:$0xff]
        %v1171 = vld [vmem:[#allocation6 + $0x118] sm:$0xff]
        %v1172 = vld [vmem:[#allocation6 + $0x120] sm:$0xff]
        %v1173 = vld [vmem:[#allocation6 + $0x128] sm:$0xff]
        %v1174 = vld [vmem:[#allocation6 + $0x130] sm:$0xff]
        %v1175 = vld [vmem:[#allocation6 + $0x138] sm:$0xff]
        %v1176 = vld [vmem:[#allocation6 + $0x140] sm:$0xff]
        %v1177 = vld [vmem:[#allocation6 + $0x148] sm:$0xff]
        %v1178 = vld [vmem:[#allocation6 + $0x150] sm:$0xff]
        %v1179 = vld [vmem:[#allocation6 + $0x158] sm:$0xff]
        %v1180 = vld [vmem:[#allocation6 + $0x160] sm:$0xff]
        %v1181 = vld [vmem:[#allocation6 + $0x168] sm:$0xff]
        %v1182 = vld [vmem:[#allocation6 + $0x170] sm:$0xff]
        %v1183 = vld [vmem:[#allocation6 + $0x178] sm:$0xff]
        %v1184 = vld [vmem:[#allocation6 + $0x180] sm:$0xff]
        %v1185 = vld [vmem:[#allocation6 + $0x188] sm:$0xff]
        %v1186 = vld [vmem:[#allocation6 + $0x190] sm:$0xff]
        %v1187 = vld [vmem:[#allocation6 + $0x198] sm:$0xff]
        %v1188 = vld [vmem:[#allocation6 + $0x1a0] sm:$0xff]
        %v1189 = vld [vmem:[#allocation6 + $0x1a8] sm:$0xff]
        %v1190 = vld [vmem:[#allocation6 + $0x1b0] sm:$0xff]
        %v1191 = vld [vmem:[#allocation6 + $0x1b8] sm:$0xff]
        %v1192 = vld [vmem:[#allocation6 + $0x1c0] sm:$0xff]
        %v1193 = vld [vmem:[#allocation6 + $0x1c8] sm:$0xff]
        %v1194 = vld [vmem:[#allocation6 + $0x1d0] sm:$0xff]
        %v1195 = vld [vmem:[#allocation6 + $0x1d8] sm:$0xff]
        %v1196 = vld [vmem:[#allocation6 + $0x1e0] sm:$0xff]
        %v1197 = vld [vmem:[#allocation6 + $0x1e8] sm:$0xff]
        %v1198 = vld [vmem:[#allocation6 + $0x1f0] sm:$0xff]
        %v1199 = vld [vmem:[#allocation6 + $0x1f8] sm:$0xff]
        %v1200 = vpack.c.bf16 %v990, %v988
        %v1201 = vpack.c.bf16 %v991, %v989
        %v1202 = vpack.c.bf16 %v994, %v992
        %v1203 = vpack.c.bf16 %v995, %v993
        %v1204 = vpack.c.bf16 %v998, %v996
        %v1205 = vpack.c.bf16 %v999, %v997
        %v1206 = vpack.c.bf16 %v1002, %v1000
        %v1207 = vpack.c.bf16 %v1003, %v1001
        %v1208 = vpack.c.bf16 %v1006, %v1004
        %v1209 = vpack.c.bf16 %v1007, %v1005
        %v1210 = vpack.c.bf16 %v1010, %v1008
        %v1211 = vpack.c.bf16 %v1011, %v1009
        %v1212 = vpack.c.bf16 %v1014, %v1012
        %v1213 = vpack.c.bf16 %v1015, %v1013
        %v1214 = vpack.c.bf16 %v1018, %v1016
        %v1215 = vpack.c.bf16 %v1019, %v1017
        %v1280 = vunpack.c.l.b16 %v1072
        %v1281 = vunpack.c.h.b16 %v1072
        %v1282 = vunpack.c.l.b16 %v1073
        %v1283 = vunpack.c.h.b16 %v1073
        %v1284 = vunpack.c.l.b16 %v1074
        %v1285 = vunpack.c.h.b16 %v1074
        %v1286 = vunpack.c.l.b16 %v1075
        %v1287 = vunpack.c.h.b16 %v1075
        %v1288 = vunpack.c.l.b16 %v1076
        %v1289 = vunpack.c.h.b16 %v1076
        %v1290 = vunpack.c.l.b16 %v1077
        %v1291 = vunpack.c.h.b16 %v1077
        %v1292 = vunpack.c.l.b16 %v1078
        %v1293 = vunpack.c.h.b16 %v1078
        %v1294 = vunpack.c.l.b16 %v1079
        %v1295 = vunpack.c.h.b16 %v1079
        %v1296 = vunpack.c.l.b16 %v1080
        %v1297 = vunpack.c.h.b16 %v1080
        %v1298 = vunpack.c.l.b16 %v1081
        %v1299 = vunpack.c.h.b16 %v1081
        %v1300 = vunpack.c.l.b16 %v1082
        %v1301 = vunpack.c.h.b16 %v1082
        %v1302 = vunpack.c.l.b16 %v1083
        %v1303 = vunpack.c.h.b16 %v1083
        %v1304 = vunpack.c.l.b16 %v1084
        %v1305 = vunpack.c.h.b16 %v1084
        %v1306 = vunpack.c.l.b16 %v1085
        %v1307 = vunpack.c.h.b16 %v1085
        %v1308 = vunpack.c.l.b16 %v1086
        %v1309 = vunpack.c.h.b16 %v1086
        %v1310 = vunpack.c.l.b16 %v1087
        %v1311 = vunpack.c.h.b16 %v1087
        %v1312 = vunpack.c.l.b16 %v1088
        %v1313 = vunpack.c.h.b16 %v1088
        %v1314 = vunpack.c.l.b16 %v1089
        %v1315 = vunpack.c.h.b16 %v1089
        %v1316 = vunpack.c.l.b16 %v1090
        %v1317 = vunpack.c.h.b16 %v1090
        %v1318 = vunpack.c.l.b16 %v1091
        %v1319 = vunpack.c.h.b16 %v1091
        %v1320 = vunpack.c.l.b16 %v1092
        %v1321 = vunpack.c.h.b16 %v1092
        %v1322 = vunpack.c.l.b16 %v1093
        %v1323 = vunpack.c.h.b16 %v1093
        %v1324 = vunpack.c.l.b16 %v1094
        %v1325 = vunpack.c.h.b16 %v1094
        %v1326 = vunpack.c.l.b16 %v1095
        %v1327 = vunpack.c.h.b16 %v1095
        %v1328 = vunpack.c.l.b16 %v1096
        %v1329 = vunpack.c.h.b16 %v1096
        %v1330 = vunpack.c.l.b16 %v1097
        %v1331 = vunpack.c.h.b16 %v1097
        %v1332 = vunpack.c.l.b16 %v1098
        %v1333 = vunpack.c.h.b16 %v1098
        %v1334 = vunpack.c.l.b16 %v1099
        %v1335 = vunpack.c.h.b16 %v1099
        %v1336 = vunpack.c.l.b16 %v1100
        %v1337 = vunpack.c.h.b16 %v1100
        %v1338 = vunpack.c.l.b16 %v1101
        %v1339 = vunpack.c.h.b16 %v1101
        %v1340 = vunpack.c.l.b16 %v1102
        %v1341 = vunpack.c.h.b16 %v1102
        %v1342 = vunpack.c.l.b16 %v1103
        %v1343 = vunpack.c.h.b16 %v1103
        %v1344 = vunpack.c.l.b16 %v1104
        %v1345 = vunpack.c.h.b16 %v1104
        %v1346 = vunpack.c.l.b16 %v1105
        %v1347 = vunpack.c.h.b16 %v1105
        %v1348 = vunpack.c.l.b16 %v1106
        %v1349 = vunpack.c.h.b16 %v1106
        %v1350 = vunpack.c.l.b16 %v1107
        %v1351 = vunpack.c.h.b16 %v1107
        %v1352 = vunpack.c.l.b16 %v1108
        %v1353 = vunpack.c.h.b16 %v1108
        %v1354 = vunpack.c.l.b16 %v1109
        %v1355 = vunpack.c.h.b16 %v1109
        %v1356 = vunpack.c.l.b16 %v1110
        %v1357 = vunpack.c.h.b16 %v1110
        %v1358 = vunpack.c.l.b16 %v1111
        %v1359 = vunpack.c.h.b16 %v1111
        %v1360 = vunpack.c.l.b16 %v1112
        %v1361 = vunpack.c.h.b16 %v1112
        %v1362 = vunpack.c.l.b16 %v1113
        %v1363 = vunpack.c.h.b16 %v1113
        %v1364 = vunpack.c.l.b16 %v1114
        %v1365 = vunpack.c.h.b16 %v1114
        %v1366 = vunpack.c.l.b16 %v1115
        %v1367 = vunpack.c.h.b16 %v1115
        %v1368 = vunpack.c.l.b16 %v1116
        %v1369 = vunpack.c.h.b16 %v1116
        %v1370 = vunpack.c.l.b16 %v1117
        %v1371 = vunpack.c.h.b16 %v1117
        %v1372 = vunpack.c.l.b16 %v1118
        %v1373 = vunpack.c.h.b16 %v1118
        %v1374 = vunpack.c.l.b16 %v1119
        %v1375 = vunpack.c.h.b16 %v1119
        %v1376 = vunpack.c.l.b16 %v1120
        %v1377 = vunpack.c.h.b16 %v1120
        %v1378 = vunpack.c.l.b16 %v1121
        %v1379 = vunpack.c.h.b16 %v1121
        %v1380 = vunpack.c.l.b16 %v1122
        %v1381 = vunpack.c.h.b16 %v1122
        %v1382 = vunpack.c.l.b16 %v1123
        %v1383 = vunpack.c.h.b16 %v1123
        %v1384 = vunpack.c.l.b16 %v1124
        %v1385 = vunpack.c.h.b16 %v1124
        %v1386 = vunpack.c.l.b16 %v1125
        %v1387 = vunpack.c.h.b16 %v1125
        %v1388 = vunpack.c.l.b16 %v1126
        %v1389 = vunpack.c.h.b16 %v1126
        %v1390 = vunpack.c.l.b16 %v1127
        %v1391 = vunpack.c.h.b16 %v1127
        %v1392 = vunpack.c.l.b16 %v1128
        %v1393 = vunpack.c.h.b16 %v1128
        %v1394 = vunpack.c.l.b16 %v1129
        %v1395 = vunpack.c.h.b16 %v1129
        %v1396 = vunpack.c.l.b16 %v1130
        %v1397 = vunpack.c.h.b16 %v1130
        %v1398 = vunpack.c.l.b16 %v1131
        %v1399 = vunpack.c.h.b16 %v1131
        %v1400 = vunpack.c.l.b16 %v1132
        %v1401 = vunpack.c.h.b16 %v1132
        %v1402 = vunpack.c.l.b16 %v1133
        %v1403 = vunpack.c.h.b16 %v1133
        %v1404 = vunpack.c.l.b16 %v1134
        %v1405 = vunpack.c.h.b16 %v1134
        %v1406 = vunpack.c.l.b16 %v1135
        %v1407 = vunpack.c.h.b16 %v1135
        %v1408 = vpack.c.b16 %v1284, %v1280
        %v1409 = vpack.c.b16 %v1285, %v1281
        %v1410 = vpack.c.b16 %v1286, %v1282
        %v1411 = vpack.c.b16 %v1287, %v1283
        %v1412 = vpack.c.b16 %v1292, %v1288
        %v1413 = vpack.c.b16 %v1293, %v1289
        %v1414 = vpack.c.b16 %v1294, %v1290
        %v1415 = vpack.c.b16 %v1295, %v1291
        %v1416 = vpack.c.b16 %v1300, %v1296
        %v1417 = vpack.c.b16 %v1301, %v1297
        %v1418 = vpack.c.b16 %v1302, %v1298
        %v1419 = vpack.c.b16 %v1303, %v1299
        %v1420 = vpack.c.b16 %v1308, %v1304
        %v1421 = vpack.c.b16 %v1309, %v1305
        %v1422 = vpack.c.b16 %v1310, %v1306
        %v1423 = vpack.c.b16 %v1311, %v1307
        %v1424 = vpack.c.b16 %v1316, %v1312
        %v1425 = vpack.c.b16 %v1317, %v1313
        %v1426 = vpack.c.b16 %v1318, %v1314
        %v1427 = vpack.c.b16 %v1319, %v1315
        %v1428 = vpack.c.b16 %v1324, %v1320
        %v1429 = vpack.c.b16 %v1325, %v1321
        %v1430 = vpack.c.b16 %v1326, %v1322
        %v1431 = vpack.c.b16 %v1327, %v1323
        %v1432 = vpack.c.b16 %v1332, %v1328
        %v1433 = vpack.c.b16 %v1333, %v1329
        %v1434 = vpack.c.b16 %v1334, %v1330
        %v1435 = vpack.c.b16 %v1335, %v1331
        %v1436 = vpack.c.b16 %v1340, %v1336
        %v1437 = vpack.c.b16 %v1341, %v1337
        %v1438 = vpack.c.b16 %v1342, %v1338
        %v1439 = vpack.c.b16 %v1343, %v1339
        %v1440 = vpack.c.b16 %v1348, %v1344
        %v1441 = vpack.c.b16 %v1349, %v1345
        %v1442 = vpack.c.b16 %v1350, %v1346
        %v1443 = vpack.c.b16 %v1351, %v1347
        %v1444 = vpack.c.b16 %v1356, %v1352
        %v1445 = vpack.c.b16 %v1357, %v1353
        %v1446 = vpack.c.b16 %v1358, %v1354
        %v1447 = vpack.c.b16 %v1359, %v1355
        %v1448 = vpack.c.b16 %v1364, %v1360
        %v1449 = vpack.c.b16 %v1365, %v1361
        %v1450 = vpack.c.b16 %v1366, %v1362
        %v1451 = vpack.c.b16 %v1367, %v1363
        %v1452 = vpack.c.b16 %v1372, %v1368
        %v1453 = vpack.c.b16 %v1373, %v1369
        %v1454 = vpack.c.b16 %v1374, %v1370
        %v1455 = vpack.c.b16 %v1375, %v1371
        %v1456 = vpack.c.b16 %v1380, %v1376
        %v1457 = vpack.c.b16 %v1381, %v1377
        %v1458 = vpack.c.b16 %v1382, %v1378
        %v1459 = vpack.c.b16 %v1383, %v1379
        %v1460 = vpack.c.b16 %v1388, %v1384
        %v1461 = vpack.c.b16 %v1389, %v1385
        %v1462 = vpack.c.b16 %v1390, %v1386
        %v1463 = vpack.c.b16 %v1391, %v1387
        %v1464 = vpack.c.b16 %v1396, %v1392
        %v1465 = vpack.c.b16 %v1397, %v1393
        %v1466 = vpack.c.b16 %v1398, %v1394
        %v1467 = vpack.c.b16 %v1399, %v1395
        %v1468 = vpack.c.b16 %v1404, %v1400
        %v1469 = vpack.c.b16 %v1405, %v1401
        %v1470 = vpack.c.b16 %v1406, %v1402
        %v1471 = vpack.c.b16 %v1407, %v1403
        %1536 = vmatprep.subr.bf16.mxu0 %v1437
        %1537 = vmatpush1.bf16.msra.mxu0 %v1436
        %1538 = vmatprep.subr.bf16.mxu0 %v1433
        %1539 = vmatpush1.bf16.msra.mxu0 %v1432
        %1540 = vmatprep.subr.bf16.mxu0 %v1429
        %1541 = vmatpush1.bf16.msra.mxu0 %v1428
        %1542 = vmatprep.subr.bf16.mxu0 %v1425
        %1543 = vmatpush1.bf16.msra.mxu0 %v1424
        %1544 = vmatprep.subr.bf16.mxu0 %v1421
        %1545 = vmatpush1.bf16.msra.mxu0 %v1420
        %1546 = vmatprep.subr.bf16.mxu0 %v1417
        %1547 = vmatpush1.bf16.msra.mxu0 %v1416
        %1548 = vmatprep.subr.bf16.mxu0 %v1413
        %1549 = vmatpush1.bf16.msra.mxu0 %v1412
        %1550 = vmatprep.subr.bf16.mxu0 %v1409
        %1551 = vmatpush1.bf16.msra.mxu0 %v1408
        %1552 = vmatprep.subr.bf16.mxu0 %v1469
        %1553 = vmatpush2.bf16.msra.mxu0 %v1468
        %1554 = vmatprep.subr.bf16.mxu0 %v1465
        %1555 = vmatpush2.bf16.msra.mxu0 %v1464
        %1556 = vmatprep.subr.bf16.mxu0 %v1461
        %1557 = vmatpush2.bf16.msra.mxu0 %v1460
        %1558 = vmatprep.subr.bf16.mxu0 %v1457
        %1559 = vmatpush2.bf16.msra.mxu0 %v1456
        %1560 = vmatprep.subr.bf16.mxu0 %v1453
        %1561 = vmatpush2.bf16.msra.mxu0 %v1452
        %1562 = vmatprep.subr.bf16.mxu0 %v1449
        %1563 = vmatpush2.bf16.msra.mxu0 %v1448
        %1564 = vmatprep.subr.bf16.mxu0 %v1445
        %1565 = vmatpush2.bf16.msra.mxu0 %v1444
        %1566 = vmatprep.subr.bf16.mxu0 %v1441
        %1567 = vmatpush2.bf16.msra.mxu0 %v1440
        %1568 = vmatprep.mubr.bf16.mxu0 %v1201
        %1569 = vmatmul.mubr.bf16.gmra.mxu0 %v1200
        %v1570 = vpop.f32.mrf.mxu0
        %v1571 = vadd.f32 0.0, %v1570
        %v1572 = vpop.f32.mrf.mxu0
        %v1573 = vadd.f32 0.0, %v1572
        %v1574 = vpop.f32.mrf.mxu0
        %v1575 = vadd.f32 0.0, %v1574
        %v1576 = vpop.f32.mrf.mxu0
        %v1577 = vadd.f32 0.0, %v1576
        %1578 = vmatprep.mubr.bf16.mxu0 %v1203
        %1579 = vmatmul.mubr.bf16.gmra.mxu0 %v1202
        %v1580 = vpop.f32.mrf.mxu0
        %v1581 = vadd.f32 0.0, %v1580
        %v1582 = vpop.f32.mrf.mxu0
        %v1583 = vadd.f32 0.0, %v1582
        %v1584 = vpop.f32.mrf.mxu0
        %v1585 = vadd.f32 0.0, %v1584
        %v1586 = vpop.f32.mrf.mxu0
        %v1587 = vadd.f32 0.0, %v1586
        %1588 = vmatprep.mubr.bf16.mxu0 %v1205
        %1589 = vmatmul.mubr.bf16.gmra.mxu0 %v1204
        %v1590 = vpop.f32.mrf.mxu0
        %v1591 = vadd.f32 0.0, %v1590
        %v1592 = vpop.f32.mrf.mxu0
        %v1593 = vadd.f32 0.0, %v1592
        %v1594 = vpop.f32.mrf.mxu0
        %v1595 = vadd.f32 0.0, %v1594
        %v1596 = vpop.f32.mrf.mxu0
        %v1597 = vadd.f32 0.0, %v1596
        %1598 = vmatprep.mubr.bf16.mxu0 %v1207
        %1599 = vmatmul.mubr.bf16.gmra.mxu0 %v1206
        %v1600 = vpop.f32.mrf.mxu0
        %v1601 = vadd.f32 0.0, %v1600
        %v1602 = vpop.f32.mrf.mxu0
        %v1603 = vadd.f32 0.0, %v1602
        %v1604 = vpop.f32.mrf.mxu0
        %v1605 = vadd.f32 0.0, %v1604
        %v1606 = vpop.f32.mrf.mxu0
        %v1607 = vadd.f32 0.0, %v1606
        %1608 = vmatprep.mubr.bf16.mxu0 %v1209
        %1609 = vmatmul.mubr.bf16.gmra.mxu0 %v1208
        %v1610 = vpop.f32.mrf.mxu0
        %v1611 = vadd.f32 0.0, %v1610
        %v1612 = vpop.f32.mrf.mxu0
        %v1613 = vadd.f32 0.0, %v1612
        %v1614 = vpop.f32.mrf.mxu0
        %v1615 = vadd.f32 0.0, %v1614
        %v1616 = vpop.f32.mrf.mxu0
        %v1617 = vadd.f32 0.0, %v1616
        %1618 = vmatprep.mubr.bf16.mxu0 %v1211
        %1619 = vmatmul.mubr.bf16.gmra.mxu0 %v1210
        %v1620 = vpop.f32.mrf.mxu0
        %v1621 = vadd.f32 0.0, %v1620
        %v1622 = vpop.f32.mrf.mxu0
        %v1623 = vadd.f32 0.0, %v1622
        %v1624 = vpop.f32.mrf.mxu0
        %v1625 = vadd.f32 0.0, %v1624
        %v1626 = vpop.f32.mrf.mxu0
        %v1627 = vadd.f32 0.0, %v1626
        %1628 = vmatprep.mubr.bf16.mxu0 %v1213
        %1629 = vmatmul.mubr.bf16.gmra.mxu0 %v1212
        %v1630 = vpop.f32.mrf.mxu0
        %v1631 = vadd.f32 0.0, %v1630
        %v1632 = vpop.f32.mrf.mxu0
        %v1633 = vadd.f32 0.0, %v1632
        %v1634 = vpop.f32.mrf.mxu0
        %v1635 = vadd.f32 0.0, %v1634
        %v1636 = vpop.f32.mrf.mxu0
        %v1637 = vadd.f32 0.0, %v1636
        %1638 = vmatprep.mubr.bf16.mxu0 %v1215
        %1639 = vmatmul.mubr.bf16.gmra.mxu0 %v1214
        %v1640 = vpop.f32.mrf.mxu0
        %v1641 = vadd.f32 0.0, %v1640
        %v1642 = vpop.f32.mrf.mxu0
        %v1643 = vadd.f32 0.0, %v1642
        %v1644 = vpop.f32.mrf.mxu0
        %v1645 = vadd.f32 0.0, %v1644
        %v1646 = vpop.f32.mrf.mxu0
        %v1647 = vadd.f32 0.0, %v1646
        %1648 = vdwg.mxu0
        %1649 = vmatprep.subr.bf16.mxu0 %v1439
        %1650 = vmatpush1.bf16.msra.mxu0 %v1438
        %1651 = vmatprep.subr.bf16.mxu0 %v1435
        %1652 = vmatpush1.bf16.msra.mxu0 %v1434
        %1653 = vmatprep.subr.bf16.mxu0 %v1431
        %1654 = vmatpush1.bf16.msra.mxu0 %v1430
        %1655 = vmatprep.subr.bf16.mxu0 %v1427
        %1656 = vmatpush1.bf16.msra.mxu0 %v1426
        %1657 = vmatprep.subr.bf16.mxu0 %v1423
        %1658 = vmatpush1.bf16.msra.mxu0 %v1422
        %1659 = vmatprep.subr.bf16.mxu0 %v1419
        %1660 = vmatpush1.bf16.msra.mxu0 %v1418
        %1661 = vmatprep.subr.bf16.mxu0 %v1415
        %1662 = vmatpush1.bf16.msra.mxu0 %v1414
        %1663 = vmatprep.subr.bf16.mxu0 %v1411
        %1664 = vmatpush1.bf16.msra.mxu0 %v1410
        %1665 = vmatprep.subr.bf16.mxu0 %v1471
        %1666 = vmatpush2.bf16.msra.mxu0 %v1470
        %1667 = vmatprep.subr.bf16.mxu0 %v1467
        %1668 = vmatpush2.bf16.msra.mxu0 %v1466
        %1669 = vmatprep.subr.bf16.mxu0 %v1463
        %1670 = vmatpush2.bf16.msra.mxu0 %v1462
        %1671 = vmatprep.subr.bf16.mxu0 %v1459
        %1672 = vmatpush2.bf16.msra.mxu0 %v1458
        %1673 = vmatprep.subr.bf16.mxu0 %v1455
        %1674 = vmatpush2.bf16.msra.mxu0 %v1454
        %1675 = vmatprep.subr.bf16.mxu0 %v1451
        %1676 = vmatpush2.bf16.msra.mxu0 %v1450
        %1677 = vmatprep.subr.bf16.mxu0 %v1447
        %1678 = vmatpush2.bf16.msra.mxu0 %v1446
        %1679 = vmatprep.subr.bf16.mxu0 %v1443
        %1680 = vmatpush2.bf16.msra.mxu0 %v1442
        %1681 = vmatprep.mubr.bf16.mxu0 %v1201
        %1682 = vmatmul.mubr.bf16.gmra.mxu0 %v1200
        %v1683 = vpop.f32.mrf.mxu0
        %v1684 = vadd.f32 0.0, %v1683
        %v1685 = vpop.f32.mrf.mxu0
        %v1686 = vadd.f32 0.0, %v1685
        %v1687 = vpop.f32.mrf.mxu0
        %v1688 = vadd.f32 0.0, %v1687
        %v1689 = vpop.f32.mrf.mxu0
        %v1690 = vadd.f32 0.0, %v1689
        %1691 = vmatprep.mubr.bf16.mxu0 %v1203
        %1692 = vmatmul.mubr.bf16.gmra.mxu0 %v1202
        %v1693 = vpop.f32.mrf.mxu0
        %v1694 = vadd.f32 0.0, %v1693
        %v1695 = vpop.f32.mrf.mxu0
        %v1696 = vadd.f32 0.0, %v1695
        %v1697 = vpop.f32.mrf.mxu0
        %v1698 = vadd.f32 0.0, %v1697
        %v1699 = vpop.f32.mrf.mxu0
        %v1700 = vadd.f32 0.0, %v1699
        %1701 = vmatprep.mubr.bf16.mxu0 %v1205
        %1702 = vmatmul.mubr.bf16.gmra.mxu0 %v1204
        %v1703 = vpop.f32.mrf.mxu0
        %v1704 = vadd.f32 0.0, %v1703
        %v1705 = vpop.f32.mrf.mxu0
        %v1706 = vadd.f32 0.0, %v1705
        %v1707 = vpop.f32.mrf.mxu0
        %v1708 = vadd.f32 0.0, %v1707
        %v1709 = vpop.f32.mrf.mxu0
        %v1710 = vadd.f32 0.0, %v1709
        %1711 = vmatprep.mubr.bf16.mxu0 %v1207
        %1712 = vmatmul.mubr.bf16.gmra.mxu0 %v1206
        %v1713 = vpop.f32.mrf.mxu0
        %v1714 = vadd.f32 0.0, %v1713
        %v1715 = vpop.f32.mrf.mxu0
        %v1716 = vadd.f32 0.0, %v1715
        %v1717 = vpop.f32.mrf.mxu0
        %v1718 = vadd.f32 0.0, %v1717
        %v1719 = vpop.f32.mrf.mxu0
        %v1720 = vadd.f32 0.0, %v1719
        %1721 = vmatprep.mubr.bf16.mxu0 %v1209
        %1722 = vmatmul.mubr.bf16.gmra.mxu0 %v1208
        %v1723 = vpop.f32.mrf.mxu0
        %v1724 = vadd.f32 0.0, %v1723
        %v1725 = vpop.f32.mrf.mxu0
        %v1726 = vadd.f32 0.0, %v1725
        %v1727 = vpop.f32.mrf.mxu0
        %v1728 = vadd.f32 0.0, %v1727
        %v1729 = vpop.f32.mrf.mxu0
        %v1730 = vadd.f32 0.0, %v1729
        %1731 = vmatprep.mubr.bf16.mxu0 %v1211
        %1732 = vmatmul.mubr.bf16.gmra.mxu0 %v1210
        %v1733 = vpop.f32.mrf.mxu0
        %v1734 = vadd.f32 0.0, %v1733
        %v1735 = vpop.f32.mrf.mxu0
        %v1736 = vadd.f32 0.0, %v1735
        %v1737 = vpop.f32.mrf.mxu0
        %v1738 = vadd.f32 0.0, %v1737
        %v1739 = vpop.f32.mrf.mxu0
        %v1740 = vadd.f32 0.0, %v1739
        %1741 = vmatprep.mubr.bf16.mxu0 %v1213
        %1742 = vmatmul.mubr.bf16.gmra.mxu0 %v1212
        %v1743 = vpop.f32.mrf.mxu0
        %v1744 = vadd.f32 0.0, %v1743
        %v1745 = vpop.f32.mrf.mxu0
        %v1746 = vadd.f32 0.0, %v1745
        %v1747 = vpop.f32.mrf.mxu0
        %v1748 = vadd.f32 0.0, %v1747
        %v1749 = vpop.f32.mrf.mxu0
        %v1750 = vadd.f32 0.0, %v1749
        %1751 = vmatprep.mubr.bf16.mxu0 %v1215
        %1752 = vmatmul.mubr.bf16.gmra.mxu0 %v1214
        %v1753 = vpop.f32.mrf.mxu0
        %v1754 = vadd.f32 0.0, %v1753
        %v1755 = vpop.f32.mrf.mxu0
        %v1756 = vadd.f32 0.0, %v1755
        %v1757 = vpop.f32.mrf.mxu0
        %v1758 = vadd.f32 0.0, %v1757
        %v1759 = vpop.f32.mrf.mxu0
        %v1760 = vadd.f32 0.0, %v1759
        %1761 = vdwg.mxu0
        %v1762 = vpack.c.bf16 %v1032, %v1032
        %v1763 = vpack.c.bf16 %v1045, %v1045
        %v1764 = vpack.c.bf16 %v1058, %v1058
        %v1765 = vpack.c.bf16 %v1071, %v1071
        %v1766 = vld [vmem:[%s7] sm:$0xf]
        %v1768 = vlaneseq
        %v1769 = vshrl.u32 %v1768, 7
        %v1770 = vsub.s32 0, %v1769
        %v1771 = vrot.slane %v1766, %v1770
        %v1772 = vlaneseq
        %v1773 = vshrl.u32 %v1772, 7
        %v1774 = vsub.s32 1, %v1773
        %v1775 = vrot.slane %v1766, %v1774
        %v1776 = vlaneseq
        %v1777 = vshrl.u32 %v1776, 7
        %v1778 = vsub.s32 2, %v1777
        %v1779 = vrot.slane %v1766, %v1778
        %v1780 = vlaneseq
        %v1781 = vshrl.u32 %v1780, 7
        %v1782 = vsub.s32 3, %v1781
        %v1783 = vrot.slane %v1766, %v1782
        %v1792 = vunpack.c.l.b16 %v1762
        %v1793 = vunpack.c.l.b16 %v1763
        %v1794 = vunpack.c.l.b16 %v1764
        %v1795 = vunpack.c.l.b16 %v1765
        %vm1796 = vcmask 1041409
        %v1797 = vsel %vm1796, %v1794, %v1792
        %v1798 = vsel %vm1796, %v1795, %v1793
        %v1799 = vpack.c.b16 %v1797, %v1797
        %v1800 = vpack.c.b16 %v1798, %v1798
        %v1867 = vunpack.c.l.b16 %v1136
        %v1868 = vunpack.c.h.b16 %v1136
        %v1869 = vunpack.c.l.b16 %v1137
        %v1870 = vunpack.c.h.b16 %v1137
        %v1871 = vunpack.c.l.b16 %v1138
        %v1872 = vunpack.c.h.b16 %v1138
        %v1873 = vunpack.c.l.b16 %v1139
        %v1874 = vunpack.c.h.b16 %v1139
        %v1875 = vunpack.c.l.b16 %v1140
        %v1876 = vunpack.c.h.b16 %v1140
        %v1877 = vunpack.c.l.b16 %v1141
        %v1878 = vunpack.c.h.b16 %v1141
        %v1879 = vunpack.c.l.b16 %v1142
        %v1880 = vunpack.c.h.b16 %v1142
        %v1881 = vunpack.c.l.b16 %v1143
        %v1882 = vunpack.c.h.b16 %v1143
        %v1883 = vunpack.c.l.b16 %v1144
        %v1884 = vunpack.c.h.b16 %v1144
        %v1885 = vunpack.c.l.b16 %v1145
        %v1886 = vunpack.c.h.b16 %v1145
        %v1887 = vunpack.c.l.b16 %v1146
        %v1888 = vunpack.c.h.b16 %v1146
        %v1889 = vunpack.c.l.b16 %v1147
        %v1890 = vunpack.c.h.b16 %v1147
        %v1891 = vunpack.c.l.b16 %v1148
        %v1892 = vunpack.c.h.b16 %v1148
        %v1893 = vunpack.c.l.b16 %v1149
        %v1894 = vunpack.c.h.b16 %v1149
        %v1895 = vunpack.c.l.b16 %v1150
        %v1896 = vunpack.c.h.b16 %v1150
        %v1897 = vunpack.c.l.b16 %v1151
        %v1898 = vunpack.c.h.b16 %v1151
        %v1899 = vunpack.c.l.b16 %v1152
        %v1900 = vunpack.c.h.b16 %v1152
        %v1901 = vunpack.c.l.b16 %v1153
        %v1902 = vunpack.c.h.b16 %v1153
        %v1903 = vunpack.c.l.b16 %v1154
        %v1904 = vunpack.c.h.b16 %v1154
        %v1905 = vunpack.c.l.b16 %v1155
        %v1906 = vunpack.c.h.b16 %v1155
        %v1907 = vunpack.c.l.b16 %v1156
        %v1908 = vunpack.c.h.b16 %v1156
        %v1909 = vunpack.c.l.b16 %v1157
        %v1910 = vunpack.c.h.b16 %v1157
        %v1911 = vunpack.c.l.b16 %v1158
        %v1912 = vunpack.c.h.b16 %v1158
        %v1913 = vunpack.c.l.b16 %v1159
        %v1914 = vunpack.c.h.b16 %v1159
        %v1915 = vunpack.c.l.b16 %v1160
        %v1916 = vunpack.c.h.b16 %v1160
        %v1917 = vunpack.c.l.b16 %v1161
        %v1918 = vunpack.c.h.b16 %v1161
        %v1919 = vunpack.c.l.b16 %v1162
        %v1920 = vunpack.c.h.b16 %v1162
        %v1921 = vunpack.c.l.b16 %v1163
        %v1922 = vunpack.c.h.b16 %v1163
        %v1923 = vunpack.c.l.b16 %v1164
        %v1924 = vunpack.c.h.b16 %v1164
        %v1925 = vunpack.c.l.b16 %v1165
        %v1926 = vunpack.c.h.b16 %v1165
        %v1927 = vunpack.c.l.b16 %v1166
        %v1928 = vunpack.c.h.b16 %v1166
        %v1929 = vunpack.c.l.b16 %v1167
        %v1930 = vunpack.c.h.b16 %v1167
        %v1931 = vunpack.c.l.b16 %v1168
        %v1932 = vunpack.c.h.b16 %v1168
        %v1933 = vunpack.c.l.b16 %v1169
        %v1934 = vunpack.c.h.b16 %v1169
        %v1935 = vunpack.c.l.b16 %v1170
        %v1936 = vunpack.c.h.b16 %v1170
        %v1937 = vunpack.c.l.b16 %v1171
        %v1938 = vunpack.c.h.b16 %v1171
        %v1939 = vunpack.c.l.b16 %v1172
        %v1940 = vunpack.c.h.b16 %v1172
        %v1941 = vunpack.c.l.b16 %v1173
        %v1942 = vunpack.c.h.b16 %v1173
        %v1943 = vunpack.c.l.b16 %v1174
        %v1944 = vunpack.c.h.b16 %v1174
        %v1945 = vunpack.c.l.b16 %v1175
        %v1946 = vunpack.c.h.b16 %v1175
        %v1947 = vunpack.c.l.b16 %v1176
        %v1948 = vunpack.c.h.b16 %v1176
        %v1949 = vunpack.c.l.b16 %v1177
        %v1950 = vunpack.c.h.b16 %v1177
        %v1951 = vunpack.c.l.b16 %v1178
        %v1952 = vunpack.c.h.b16 %v1178
        %v1953 = vunpack.c.l.b16 %v1179
        %v1954 = vunpack.c.h.b16 %v1179
        %v1955 = vunpack.c.l.b16 %v1180
        %v1956 = vunpack.c.h.b16 %v1180
        %v1957 = vunpack.c.l.b16 %v1181
        %v1958 = vunpack.c.h.b16 %v1181
        %v1959 = vunpack.c.l.b16 %v1182
        %v1960 = vunpack.c.h.b16 %v1182
        %v1961 = vunpack.c.l.b16 %v1183
        %v1962 = vunpack.c.h.b16 %v1183
        %v1963 = vunpack.c.l.b16 %v1184
        %v1964 = vunpack.c.h.b16 %v1184
        %v1965 = vunpack.c.l.b16 %v1185
        %v1966 = vunpack.c.h.b16 %v1185
        %v1967 = vunpack.c.l.b16 %v1186
        %v1968 = vunpack.c.h.b16 %v1186
        %v1969 = vunpack.c.l.b16 %v1187
        %v1970 = vunpack.c.h.b16 %v1187
        %v1971 = vunpack.c.l.b16 %v1188
        %v1972 = vunpack.c.h.b16 %v1188
        %v1973 = vunpack.c.l.b16 %v1189
        %v1974 = vunpack.c.h.b16 %v1189
        %v1975 = vunpack.c.l.b16 %v1190
        %v1976 = vunpack.c.h.b16 %v1190
        %v1977 = vunpack.c.l.b16 %v1191
        %v1978 = vunpack.c.h.b16 %v1191
        %v1979 = vunpack.c.l.b16 %v1192
        %v1980 = vunpack.c.h.b16 %v1192
        %v1981 = vunpack.c.l.b16 %v1193
        %v1982 = vunpack.c.h.b16 %v1193
        %v1983 = vunpack.c.l.b16 %v1194
        %v1984 = vunpack.c.h.b16 %v1194
        %v1985 = vunpack.c.l.b16 %v1195
        %v1986 = vunpack.c.h.b16 %v1195
        %v1987 = vunpack.c.l.b16 %v1196
        %v1988 = vunpack.c.h.b16 %v1196
        %v1989 = vunpack.c.l.b16 %v1197
        %v1990 = vunpack.c.h.b16 %v1197
        %v1991 = vunpack.c.l.b16 %v1198
        %v1992 = vunpack.c.h.b16 %v1198
        %v1993 = vunpack.c.l.b16 %v1199
        %v1994 = vunpack.c.h.b16 %v1199
        %v1995 = vpack.c.b16 %v1871, %v1867
        %v1996 = vpack.c.b16 %v1872, %v1868
        %v1997 = vpack.c.b16 %v1873, %v1869
        %v1998 = vpack.c.b16 %v1874, %v1870
        %v1999 = vpack.c.b16 %v1879, %v1875
        %v2000 = vpack.c.b16 %v1880, %v1876
        %v2001 = vpack.c.b16 %v1881, %v1877
        %v2002 = vpack.c.b16 %v1882, %v1878
        %v2003 = vpack.c.b16 %v1887, %v1883
        %v2004 = vpack.c.b16 %v1888, %v1884
        %v2005 = vpack.c.b16 %v1889, %v1885
        %v2006 = vpack.c.b16 %v1890, %v1886
        %v2007 = vpack.c.b16 %v1895, %v1891
        %v2008 = vpack.c.b16 %v1896, %v1892
        %v2009 = vpack.c.b16 %v1897, %v1893
        %v2010 = vpack.c.b16 %v1898, %v1894
        %v2011 = vpack.c.b16 %v1903, %v1899
        %v2012 = vpack.c.b16 %v1904, %v1900
        %v2013 = vpack.c.b16 %v1905, %v1901
        %v2014 = vpack.c.b16 %v1906, %v1902
        %v2015 = vpack.c.b16 %v1911, %v1907
        %v2016 = vpack.c.b16 %v1912, %v1908
        %v2017 = vpack.c.b16 %v1913, %v1909
        %v2018 = vpack.c.b16 %v1914, %v1910
        %v2019 = vpack.c.b16 %v1919, %v1915
        %v2020 = vpack.c.b16 %v1920, %v1916
        %v2021 = vpack.c.b16 %v1921, %v1917
        %v2022 = vpack.c.b16 %v1922, %v1918
        %v2023 = vpack.c.b16 %v1927, %v1923
        %v2024 = vpack.c.b16 %v1928, %v1924
        %v2025 = vpack.c.b16 %v1929, %v1925
        %v2026 = vpack.c.b16 %v1930, %v1926
        %v2027 = vpack.c.b16 %v1935, %v1931
        %v2028 = vpack.c.b16 %v1936, %v1932
        %v2029 = vpack.c.b16 %v1937, %v1933
        %v2030 = vpack.c.b16 %v1938, %v1934
        %v2031 = vpack.c.b16 %v1943, %v1939
        %v2032 = vpack.c.b16 %v1944, %v1940
        %v2033 = vpack.c.b16 %v1945, %v1941
        %v2034 = vpack.c.b16 %v1946, %v1942
        %v2035 = vpack.c.b16 %v1951, %v1947
        %v2036 = vpack.c.b16 %v1952, %v1948
        %v2037 = vpack.c.b16 %v1953, %v1949
        %v2038 = vpack.c.b16 %v1954, %v1950
        %v2039 = vpack.c.b16 %v1959, %v1955
        %v2040 = vpack.c.b16 %v1960, %v1956
        %v2041 = vpack.c.b16 %v1961, %v1957
        %v2042 = vpack.c.b16 %v1962, %v1958
        %v2043 = vpack.c.b16 %v1967, %v1963
        %v2044 = vpack.c.b16 %v1968, %v1964
        %v2045 = vpack.c.b16 %v1969, %v1965
        %v2046 = vpack.c.b16 %v1970, %v1966
        %v2047 = vpack.c.b16 %v1975, %v1971
        %v2048 = vpack.c.b16 %v1976, %v1972
        %v2049 = vpack.c.b16 %v1977, %v1973
        %v2050 = vpack.c.b16 %v1978, %v1974
        %v2051 = vpack.c.b16 %v1983, %v1979
        %v2052 = vpack.c.b16 %v1984, %v1980
        %v2053 = vpack.c.b16 %v1985, %v1981
        %v2054 = vpack.c.b16 %v1986, %v1982
        %v2055 = vpack.c.b16 %v1991, %v1987
        %v2056 = vpack.c.b16 %v1992, %v1988
        %v2057 = vpack.c.b16 %v1993, %v1989
        %v2058 = vpack.c.b16 %v1994, %v1990
        %2123 = vmatprep.subr.bf16.mxu0 %v2024
        %2124 = vmatpush1.bf16.msra.mxu0 %v2023
        %2125 = vmatprep.subr.bf16.mxu0 %v2020
        %2126 = vmatpush1.bf16.msra.mxu0 %v2019
        %2127 = vmatprep.subr.bf16.mxu0 %v2016
        %2128 = vmatpush1.bf16.msra.mxu0 %v2015
        %2129 = vmatprep.subr.bf16.mxu0 %v2012
        %2130 = vmatpush1.bf16.msra.mxu0 %v2011
        %2131 = vmatprep.subr.bf16.mxu0 %v2008
        %2132 = vmatpush1.bf16.msra.mxu0 %v2007
        %2133 = vmatprep.subr.bf16.mxu0 %v2004
        %2134 = vmatpush1.bf16.msra.mxu0 %v2003
        %2135 = vmatprep.subr.bf16.mxu0 %v2000
        %2136 = vmatpush1.bf16.msra.mxu0 %v1999
        %2137 = vmatprep.subr.bf16.mxu0 %v1996
        %2138 = vmatpush1.bf16.msra.mxu0 %v1995
        %2139 = vmatprep.subr.bf16.mxu0 %v2056
        %2140 = vmatpush2.bf16.msra.mxu0 %v2055
        %2141 = vmatprep.subr.bf16.mxu0 %v2052
        %2142 = vmatpush2.bf16.msra.mxu0 %v2051
        %2143 = vmatprep.subr.bf16.mxu0 %v2048
        %2144 = vmatpush2.bf16.msra.mxu0 %v2047
        %2145 = vmatprep.subr.bf16.mxu0 %v2044
        %2146 = vmatpush2.bf16.msra.mxu0 %v2043
        %2147 = vmatprep.subr.bf16.mxu0 %v2040
        %2148 = vmatpush2.bf16.msra.mxu0 %v2039
        %2149 = vmatprep.subr.bf16.mxu0 %v2036
        %2150 = vmatpush2.bf16.msra.mxu0 %v2035
        %2151 = vmatprep.subr.bf16.mxu0 %v2032
        %2152 = vmatpush2.bf16.msra.mxu0 %v2031
        %2153 = vmatprep.subr.bf16.mxu0 %v2028
        %2154 = vmatpush2.bf16.msra.mxu0 %v2027
        %2155 = vmatprep.mubr.bf16.mxu0 %v1800
        %2156 = vmatmul.mubr.bf16.gmra.mxu0 %v1799
        %v2157 = vpop.f32.mrf.mxu0
        %v2158 = vadd.f32 %v1771, %v2157
        %v2159 = vpop.f32.mrf.mxu0
        %v2160 = vadd.f32 %v1775, %v2159
        %v2161 = vpop.f32.mrf.mxu0
        %v2162 = vpop.f32.mrf.mxu0
        %2163 = vdwg.mxu0
        %2164 = vmatprep.subr.bf16.mxu0 %v2026
        %2165 = vmatpush1.bf16.msra.mxu0 %v2025
        %2166 = vmatprep.subr.bf16.mxu0 %v2022
        %2167 = vmatpush1.bf16.msra.mxu0 %v2021
        %2168 = vmatprep.subr.bf16.mxu0 %v2018
        %2169 = vmatpush1.bf16.msra.mxu0 %v2017
        %2170 = vmatprep.subr.bf16.mxu0 %v2014
        %2171 = vmatpush1.bf16.msra.mxu0 %v2013
        %2172 = vmatprep.subr.bf16.mxu0 %v2010
        %2173 = vmatpush1.bf16.msra.mxu0 %v2009
        %2174 = vmatprep.subr.bf16.mxu0 %v2006
        %2175 = vmatpush1.bf16.msra.mxu0 %v2005
        %2176 = vmatprep.subr.bf16.mxu0 %v2002
        %2177 = vmatpush1.bf16.msra.mxu0 %v2001
        %2178 = vmatprep.subr.bf16.mxu0 %v1998
        %2179 = vmatpush1.bf16.msra.mxu0 %v1997
        %2180 = vmatprep.subr.bf16.mxu0 %v2058
        %2181 = vmatpush2.bf16.msra.mxu0 %v2057
        %2182 = vmatprep.subr.bf16.mxu0 %v2054
        %2183 = vmatpush2.bf16.msra.mxu0 %v2053
        %2184 = vmatprep.subr.bf16.mxu0 %v2050
        %2185 = vmatpush2.bf16.msra.mxu0 %v2049
        %2186 = vmatprep.subr.bf16.mxu0 %v2046
        %2187 = vmatpush2.bf16.msra.mxu0 %v2045
        %2188 = vmatprep.subr.bf16.mxu0 %v2042
        %2189 = vmatpush2.bf16.msra.mxu0 %v2041
        %2190 = vmatprep.subr.bf16.mxu0 %v2038
        %2191 = vmatpush2.bf16.msra.mxu0 %v2037
        %2192 = vmatprep.subr.bf16.mxu0 %v2034
        %2193 = vmatpush2.bf16.msra.mxu0 %v2033
        %2194 = vmatprep.subr.bf16.mxu0 %v2030
        %2195 = vmatpush2.bf16.msra.mxu0 %v2029
        %2196 = vmatprep.mubr.bf16.mxu0 %v1800
        %2197 = vmatmul.mubr.bf16.gmra.mxu0 %v1799
        %v2198 = vpop.f32.mrf.mxu0
        %v2199 = vadd.f32 %v1779, %v2198
        %v2200 = vpop.f32.mrf.mxu0
        %v2201 = vadd.f32 %v1783, %v2200
        %v2202 = vpop.f32.mrf.mxu0
        %v2203 = vpop.f32.mrf.mxu0
        %2204 = vdwg.mxu0
        %v2209 = vcombine.low %v2158, %v2160
        %v2210 = vcombine.low %v2199, %v2201
        %v2212 = vunpack.c.l.s4 1966171168
        %v2213 = vunpack.c.0.s8 %v2212
        %v2214 = vlaneseq
        %v2215 = vshrl.u32 %v2214, 7
        %v2216 = vsub.s32 %v2213, %v2215
        %v2217 = vrot.slane %v2209, %v2216
        %v2219 = vunpack.c.l.s4 1966171168
        %v2220 = vunpack.c.0.s8 %v2219
        %v2221 = vlaneseq
        %v2222 = vshrl.u32 %v2221, 7
        %v2223 = vsub.s32 %v2220, %v2222
        %v2224 = vrot.slane %v2210, %v2223
        %v2225 = vcombine.low %v2217, %v2224
        %v2226 = vcombine.high %v2217, %v2224
        %v2228 = vunpack.c.l.s4 1966171168
        %v2229 = vunpack.c.0.s8 %v2228
        %v2230 = vlaneseq
        %v2231 = vshrl.u32 %v2230, 7
        %v2232 = vsub.s32 %v2229, %v2231
        %v2233 = vrot.slane %v2225, %v2232
        %v2235 = vunpack.c.l.s4 1966171168
        %v2236 = vunpack.c.0.s8 %v2235
        %v2237 = vlaneseq
        %v2238 = vshrl.u32 %v2237, 7
        %v2239 = vsub.s32 %v2236, %v2238
        %v2240 = vrot.slane %v2226, %v2239
        %v2241 = vlaneseq
        %v2242 = vshrl.u32 %v2241, 7
        %v2243 = vsub.s32 0, %v2242
        %v2244 = vrot.slane %v2233, %v2243
        %v2245 = vlaneseq
        %v2246 = vshrl.u32 %v2245, 7
        %v2247 = vsub.s32 1, %v2246
        %v2248 = vrot.slane %v2233, %v2247
        %v2249 = vlaneseq
        %v2250 = vshrl.u32 %v2249, 7
        %v2251 = vsub.s32 2, %v2250
        %v2252 = vrot.slane %v2233, %v2251
        %v2253 = vlaneseq
        %v2254 = vshrl.u32 %v2253, 7
        %v2255 = vsub.s32 3, %v2254
        %v2256 = vrot.slane %v2233, %v2255
        %v2257 = vlaneseq
        %v2258 = vshrl.u32 %v2257, 7
        %v2259 = vsub.s32 0, %v2258
        %v2260 = vrot.slane %v2240, %v2259
        %v2261 = vlaneseq
        %v2262 = vshrl.u32 %v2261, 7
        %v2263 = vsub.s32 1, %v2262
        %v2264 = vrot.slane %v2240, %v2263
        %v2265 = vlaneseq
        %v2266 = vshrl.u32 %v2265, 7
        %v2267 = vsub.s32 2, %v2266
        %v2268 = vrot.slane %v2240, %v2267
        %v2269 = vlaneseq
        %v2270 = vshrl.u32 %v2269, 7
        %v2271 = vsub.s32 3, %v2270
        %v2272 = vrot.slane %v2240, %v2271
        %v2281 = vadd.f32 %v1571, %v2244
        %v2282 = vadd.f32 %v1573, %v2248
        %v2283 = vadd.f32 %v1684, %v2252
        %v2284 = vadd.f32 %v1686, %v2256
        %v2285 = vadd.f32 %v1575, %v2244
        %v2286 = vadd.f32 %v1577, %v2248
        %v2287 = vadd.f32 %v1688, %v2252
        %v2288 = vadd.f32 %v1690, %v2256
        %v2289 = vadd.f32 %v1581, %v2244
        %v2290 = vadd.f32 %v1583, %v2248
        %v2291 = vadd.f32 %v1694, %v2252
        %v2292 = vadd.f32 %v1696, %v2256
        %v2293 = vadd.f32 %v1585, %v2244
        %v2294 = vadd.f32 %v1587, %v2248
        %v2295 = vadd.f32 %v1698, %v2252
        %v2296 = vadd.f32 %v1700, %v2256
        %v2297 = vadd.f32 %v1591, %v2244
        %v2298 = vadd.f32 %v1593, %v2248
        %v2299 = vadd.f32 %v1704, %v2252
        %v2300 = vadd.f32 %v1706, %v2256
        %v2301 = vadd.f32 %v1595, %v2244
        %v2302 = vadd.f32 %v1597, %v2248
        %v2303 = vadd.f32 %v1708, %v2252
        %v2304 = vadd.f32 %v1710, %v2256
        %v2305 = vadd.f32 %v1601, %v2244
        %v2306 = vadd.f32 %v1603, %v2248
        %v2307 = vadd.f32 %v1714, %v2252
        %v2308 = vadd.f32 %v1716, %v2256
        %v2309 = vadd.f32 %v1605, %v2244
        %v2310 = vadd.f32 %v1607, %v2248
        %v2311 = vadd.f32 %v1718, %v2252
        %v2312 = vadd.f32 %v1720, %v2256
        %v2313 = vadd.f32 %v1611, %v2260
        %v2314 = vadd.f32 %v1613, %v2264
        %v2315 = vadd.f32 %v1724, %v2268
        %v2316 = vadd.f32 %v1726, %v2272
        %v2317 = vadd.f32 %v1615, %v2260
        %v2318 = vadd.f32 %v1617, %v2264
        %v2319 = vadd.f32 %v1728, %v2268
        %v2320 = vadd.f32 %v1730, %v2272
        %v2321 = vadd.f32 %v1621, %v2260
        %v2322 = vadd.f32 %v1623, %v2264
        %v2323 = vadd.f32 %v1734, %v2268
        %v2324 = vadd.f32 %v1736, %v2272
        %v2325 = vadd.f32 %v1625, %v2260
        %v2326 = vadd.f32 %v1627, %v2264
        %v2327 = vadd.f32 %v1738, %v2268
        %v2328 = vadd.f32 %v1740, %v2272
        %v2329 = vadd.f32 %v1631, %v2260
        %v2330 = vadd.f32 %v1633, %v2264
        %v2331 = vadd.f32 %v1744, %v2268
        %v2332 = vadd.f32 %v1746, %v2272
        %v2333 = vadd.f32 %v1635, %v2260
        %v2334 = vadd.f32 %v1637, %v2264
        %v2335 = vadd.f32 %v1748, %v2268
        %v2336 = vadd.f32 %v1750, %v2272
        %v2337 = vadd.f32 %v1641, %v2260
        %v2338 = vadd.f32 %v1643, %v2264
        %v2339 = vadd.f32 %v1754, %v2268
        %v2340 = vadd.f32 %v1756, %v2272
        %v2341 = vadd.f32 %v1645, %v2260
        %v2342 = vadd.f32 %v1647, %v2264
        %v2343 = vadd.f32 %v1758, %v2268
        %v2344 = vadd.f32 %v1760, %v2272
        %v2345 = vmax.f32 %v2281, 0.0
        %v2346 = vmax.f32 %v2282, 0.0
        %v2347 = vmax.f32 %v2283, 0.0
        %v2348 = vmax.f32 %v2284, 0.0
        %v2349 = vmax.f32 %v2285, 0.0
        %v2350 = vmax.f32 %v2286, 0.0
        %v2351 = vmax.f32 %v2287, 0.0
        %v2352 = vmax.f32 %v2288, 0.0
        %v2353 = vmax.f32 %v2289, 0.0
        %v2354 = vmax.f32 %v2290, 0.0
        %v2355 = vmax.f32 %v2291, 0.0
        %v2356 = vmax.f32 %v2292, 0.0
        %v2357 = vmax.f32 %v2293, 0.0
        %v2358 = vmax.f32 %v2294, 0.0
        %v2359 = vmax.f32 %v2295, 0.0
        %v2360 = vmax.f32 %v2296, 0.0
        %v2361 = vmax.f32 %v2297, 0.0
        %v2362 = vmax.f32 %v2298, 0.0
        %v2363 = vmax.f32 %v2299, 0.0
        %v2364 = vmax.f32 %v2300, 0.0
        %v2365 = vmax.f32 %v2301, 0.0
        %v2366 = vmax.f32 %v2302, 0.0
        %v2367 = vmax.f32 %v2303, 0.0
        %v2368 = vmax.f32 %v2304, 0.0
        %v2369 = vmax.f32 %v2305, 0.0
        %v2370 = vmax.f32 %v2306, 0.0
        %v2371 = vmax.f32 %v2307, 0.0
        %v2372 = vmax.f32 %v2308, 0.0
        %v2373 = vmax.f32 %v2309, 0.0
        %v2374 = vmax.f32 %v2310, 0.0
        %v2375 = vmax.f32 %v2311, 0.0
        %v2376 = vmax.f32 %v2312, 0.0
        %v2377 = vmax.f32 %v2313, 0.0
        %v2378 = vmax.f32 %v2314, 0.0
        %v2379 = vmax.f32 %v2315, 0.0
        %v2380 = vmax.f32 %v2316, 0.0
        %v2381 = vmax.f32 %v2317, 0.0
        %v2382 = vmax.f32 %v2318, 0.0
        %v2383 = vmax.f32 %v2319, 0.0
        %v2384 = vmax.f32 %v2320, 0.0
        %v2385 = vmax.f32 %v2321, 0.0
        %v2386 = vmax.f32 %v2322, 0.0
        %v2387 = vmax.f32 %v2323, 0.0
        %v2388 = vmax.f32 %v2324, 0.0
        %v2389 = vmax.f32 %v2325, 0.0
        %v2390 = vmax.f32 %v2326, 0.0
        %v2391 = vmax.f32 %v2327, 0.0
        %v2392 = vmax.f32 %v2328, 0.0
        %v2393 = vmax.f32 %v2329, 0.0
        %v2394 = vmax.f32 %v2330, 0.0
        %v2395 = vmax.f32 %v2331, 0.0
        %v2396 = vmax.f32 %v2332, 0.0
        %v2397 = vmax.f32 %v2333, 0.0
        %v2398 = vmax.f32 %v2334, 0.0
        %v2399 = vmax.f32 %v2335, 0.0
        %v2400 = vmax.f32 %v2336, 0.0
        %v2401 = vmax.f32 %v2337, 0.0
        %v2402 = vmax.f32 %v2338, 0.0
        %v2403 = vmax.f32 %v2339, 0.0
        %v2404 = vmax.f32 %v2340, 0.0
        %v2405 = vmax.f32 %v2341, 0.0
        %v2406 = vmax.f32 %v2342, 0.0
        %v2407 = vmax.f32 %v2343, 0.0
        %v2408 = vmax.f32 %v2344, 0.0
        %v2409 = vld [vmem:[%s8] sm:$0xf]
        %v2410 = vld [vmem:[%s8 + $0x4] sm:$0xf]
        %v2411 = vld [vmem:[%s8 + $0x8] sm:$0xf]
        %v2412 = vld [vmem:[%s8 + $0xc] sm:$0xf]
        %v2413 = vld [vmem:[%s8 + $0x10] sm:$0xf]
        %v2414 = vld [vmem:[%s8 + $0x14] sm:$0xf]
        %v2415 = vld [vmem:[%s8 + $0x18] sm:$0xf]
        %v2416 = vld [vmem:[%s8 + $0x1c] sm:$0xf]
        %v2417 = vld [vmem:[%s8 + $0x20] sm:$0xf]
        %v2418 = vld [vmem:[%s8 + $0x24] sm:$0xf]
        %v2419 = vld [vmem:[%s8 + $0x28] sm:$0xf]
        %v2420 = vld [vmem:[%s8 + $0x2c] sm:$0xf]
        %v2421 = vld [vmem:[%s8 + $0x30] sm:$0xf]
        %v2422 = vld [vmem:[%s8 + $0x34] sm:$0xf]
        %v2423 = vld [vmem:[%s8 + $0x38] sm:$0xf]
        %v2424 = vld [vmem:[%s8 + $0x3c] sm:$0xf]
        %v2425 = vld [vmem:[%s8 + $0x40] sm:$0xf]
        %v2426 = vld [vmem:[%s8 + $0x44] sm:$0xf]
        %v2427 = vld [vmem:[%s8 + $0x48] sm:$0xf]
        %v2428 = vld [vmem:[%s8 + $0x4c] sm:$0xf]
        %v2429 = vld [vmem:[%s8 + $0x50] sm:$0xf]
        %v2430 = vld [vmem:[%s8 + $0x54] sm:$0xf]
        %v2431 = vld [vmem:[%s8 + $0x58] sm:$0xf]
        %v2432 = vld [vmem:[%s8 + $0x5c] sm:$0xf]
        %v2433 = vld [vmem:[%s8 + $0x60] sm:$0xf]
        %v2434 = vld [vmem:[%s8 + $0x64] sm:$0xf]
        %v2435 = vld [vmem:[%s8 + $0x68] sm:$0xf]
        %v2436 = vld [vmem:[%s8 + $0x6c] sm:$0xf]
        %v2437 = vld [vmem:[%s8 + $0x70] sm:$0xf]
        %v2438 = vld [vmem:[%s8 + $0x74] sm:$0xf]
        %v2439 = vld [vmem:[%s8 + $0x78] sm:$0xf]
        %v2440 = vld [vmem:[%s8 + $0x7c] sm:$0xf]
        %v2441 = vld [vmem:[%s8 + $0x80] sm:$0xf]
        %v2442 = vld [vmem:[%s8 + $0x84] sm:$0xf]
        %v2443 = vld [vmem:[%s8 + $0x88] sm:$0xf]
        %v2444 = vld [vmem:[%s8 + $0x8c] sm:$0xf]
        %v2445 = vld [vmem:[%s8 + $0x90] sm:$0xf]
        %v2446 = vld [vmem:[%s8 + $0x94] sm:$0xf]
        %v2447 = vld [vmem:[%s8 + $0x98] sm:$0xf]
        %v2448 = vld [vmem:[%s8 + $0x9c] sm:$0xf]
        %v2449 = vld [vmem:[%s8 + $0xa0] sm:$0xf]
        %v2450 = vld [vmem:[%s8 + $0xa4] sm:$0xf]
        %v2451 = vld [vmem:[%s8 + $0xa8] sm:$0xf]
        %v2452 = vld [vmem:[%s8 + $0xac] sm:$0xf]
        %v2453 = vld [vmem:[%s8 + $0xb0] sm:$0xf]
        %v2454 = vld [vmem:[%s8 + $0xb4] sm:$0xf]
        %v2455 = vld [vmem:[%s8 + $0xb8] sm:$0xf]
        %v2456 = vld [vmem:[%s8 + $0xbc] sm:$0xf]
        %v2457 = vld [vmem:[%s8 + $0xc0] sm:$0xf]
        %v2458 = vld [vmem:[%s8 + $0xc4] sm:$0xf]
        %v2459 = vld [vmem:[%s8 + $0xc8] sm:$0xf]
        %v2460 = vld [vmem:[%s8 + $0xcc] sm:$0xf]
        %v2461 = vld [vmem:[%s8 + $0xd0] sm:$0xf]
        %v2462 = vld [vmem:[%s8 + $0xd4] sm:$0xf]
        %v2463 = vld [vmem:[%s8 + $0xd8] sm:$0xf]
        %v2464 = vld [vmem:[%s8 + $0xdc] sm:$0xf]
        %v2465 = vld [vmem:[%s8 + $0xe0] sm:$0xf]
        %v2466 = vld [vmem:[%s8 + $0xe4] sm:$0xf]
        %v2467 = vld [vmem:[%s8 + $0xe8] sm:$0xf]
        %v2468 = vld [vmem:[%s8 + $0xec] sm:$0xf]
        %v2469 = vld [vmem:[%s8 + $0xf0] sm:$0xf]
        %v2470 = vld [vmem:[%s8 + $0xf4] sm:$0xf]
        %v2471 = vld [vmem:[%s8 + $0xf8] sm:$0xf]
        %v2472 = vld [vmem:[%s8 + $0xfc] sm:$0xf]
        %v2473 = vpack.c.bf16 %v2349, %v2345
        %v2474 = vpack.c.bf16 %v2350, %v2346
        %v2475 = vpack.c.bf16 %v2351, %v2347
        %v2476 = vpack.c.bf16 %v2352, %v2348
        %v2477 = vpack.c.bf16 %v2357, %v2353
        %v2478 = vpack.c.bf16 %v2358, %v2354
        %v2479 = vpack.c.bf16 %v2359, %v2355
        %v2480 = vpack.c.bf16 %v2360, %v2356
        %v2481 = vpack.c.bf16 %v2365, %v2361
        %v2482 = vpack.c.bf16 %v2366, %v2362
        %v2483 = vpack.c.bf16 %v2367, %v2363
        %v2484 = vpack.c.bf16 %v2368, %v2364
        %v2485 = vpack.c.bf16 %v2373, %v2369
        %v2486 = vpack.c.bf16 %v2374, %v2370
        %v2487 = vpack.c.bf16 %v2375, %v2371
        %v2488 = vpack.c.bf16 %v2376, %v2372
        %v2489 = vpack.c.bf16 %v2381, %v2377
        %v2490 = vpack.c.bf16 %v2382, %v2378
        %v2491 = vpack.c.bf16 %v2383, %v2379
        %v2492 = vpack.c.bf16 %v2384, %v2380
        %v2493 = vpack.c.bf16 %v2389, %v2385
        %v2494 = vpack.c.bf16 %v2390, %v2386
        %v2495 = vpack.c.bf16 %v2391, %v2387
        %v2496 = vpack.c.bf16 %v2392, %v2388
        %v2497 = vpack.c.bf16 %v2397, %v2393
        %v2498 = vpack.c.bf16 %v2398, %v2394
        %v2499 = vpack.c.bf16 %v2399, %v2395
        %v2500 = vpack.c.bf16 %v2400, %v2396
        %v2501 = vpack.c.bf16 %v2405, %v2401
        %v2502 = vpack.c.bf16 %v2406, %v2402
        %v2503 = vpack.c.bf16 %v2407, %v2403
        %v2504 = vpack.c.bf16 %v2408, %v2404
        %v2569 = vunpack.c.l.b16 %v2409
        %v2570 = vunpack.c.l.b16 %v2410
        %v2571 = vunpack.c.l.b16 %v2411
        %v2572 = vunpack.c.l.b16 %v2412
        %v2573 = vunpack.c.l.b16 %v2413
        %v2574 = vunpack.c.l.b16 %v2414
        %v2575 = vunpack.c.l.b16 %v2415
        %v2576 = vunpack.c.l.b16 %v2416
        %v2577 = vunpack.c.l.b16 %v2417
        %v2578 = vunpack.c.l.b16 %v2418
        %v2579 = vunpack.c.l.b16 %v2419
        %v2580 = vunpack.c.l.b16 %v2420
        %v2581 = vunpack.c.l.b16 %v2421
        %v2582 = vunpack.c.l.b16 %v2422
        %v2583 = vunpack.c.l.b16 %v2423
        %v2584 = vunpack.c.l.b16 %v2424
        %v2585 = vunpack.c.l.b16 %v2425
        %v2586 = vunpack.c.l.b16 %v2426
        %v2587 = vunpack.c.l.b16 %v2427
        %v2588 = vunpack.c.l.b16 %v2428
        %v2589 = vunpack.c.l.b16 %v2429
        %v2590 = vunpack.c.l.b16 %v2430
        %v2591 = vunpack.c.l.b16 %v2431
        %v2592 = vunpack.c.l.b16 %v2432
        %v2593 = vunpack.c.l.b16 %v2433
        %v2594 = vunpack.c.l.b16 %v2434
        %v2595 = vunpack.c.l.b16 %v2435
        %v2596 = vunpack.c.l.b16 %v2436
        %v2597 = vunpack.c.l.b16 %v2437
        %v2598 = vunpack.c.l.b16 %v2438
        %v2599 = vunpack.c.l.b16 %v2439
        %v2600 = vunpack.c.l.b16 %v2440
        %v2601 = vunpack.c.l.b16 %v2441
        %v2602 = vunpack.c.l.b16 %v2442
        %v2603 = vunpack.c.l.b16 %v2443
        %v2604 = vunpack.c.l.b16 %v2444
        %v2605 = vunpack.c.l.b16 %v2445
        %v2606 = vunpack.c.l.b16 %v2446
        %v2607 = vunpack.c.l.b16 %v2447
        %v2608 = vunpack.c.l.b16 %v2448
        %v2609 = vunpack.c.l.b16 %v2449
        %v2610 = vunpack.c.l.b16 %v2450
        %v2611 = vunpack.c.l.b16 %v2451
        %v2612 = vunpack.c.l.b16 %v2452
        %v2613 = vunpack.c.l.b16 %v2453
        %v2614 = vunpack.c.l.b16 %v2454
        %v2615 = vunpack.c.l.b16 %v2455
        %v2616 = vunpack.c.l.b16 %v2456
        %v2617 = vunpack.c.l.b16 %v2457
        %v2618 = vunpack.c.l.b16 %v2458
        %v2619 = vunpack.c.l.b16 %v2459
        %v2620 = vunpack.c.l.b16 %v2460
        %v2621 = vunpack.c.l.b16 %v2461
        %v2622 = vunpack.c.l.b16 %v2462
        %v2623 = vunpack.c.l.b16 %v2463
        %v2624 = vunpack.c.l.b16 %v2464
        %v2625 = vunpack.c.l.b16 %v2465
        %v2626 = vunpack.c.l.b16 %v2466
        %v2627 = vunpack.c.l.b16 %v2467
        %v2628 = vunpack.c.l.b16 %v2468
        %v2629 = vunpack.c.l.b16 %v2469
        %v2630 = vunpack.c.l.b16 %v2470
        %v2631 = vunpack.c.l.b16 %v2471
        %v2632 = vunpack.c.l.b16 %v2472
        %v2633 = vpack.c.b16 %v2570, %v2569
        %v2634 = vpack.c.b16 %v2572, %v2571
        %v2635 = vpack.c.b16 %v2574, %v2573
        %v2636 = vpack.c.b16 %v2576, %v2575
        %v2637 = vpack.c.b16 %v2578, %v2577
        %v2638 = vpack.c.b16 %v2580, %v2579
        %v2639 = vpack.c.b16 %v2582, %v2581
        %v2640 = vpack.c.b16 %v2584, %v2583
        %v2641 = vpack.c.b16 %v2586, %v2585
        %v2642 = vpack.c.b16 %v2588, %v2587
        %v2643 = vpack.c.b16 %v2590, %v2589
        %v2644 = vpack.c.b16 %v2592, %v2591
        %v2645 = vpack.c.b16 %v2594, %v2593
        %v2646 = vpack.c.b16 %v2596, %v2595
        %v2647 = vpack.c.b16 %v2598, %v2597
        %v2648 = vpack.c.b16 %v2600, %v2599
        %v2649 = vpack.c.b16 %v2602, %v2601
        %v2650 = vpack.c.b16 %v2604, %v2603
        %v2651 = vpack.c.b16 %v2606, %v2605
        %v2652 = vpack.c.b16 %v2608, %v2607
        %v2653 = vpack.c.b16 %v2610, %v2609
        %v2654 = vpack.c.b16 %v2612, %v2611
        %v2655 = vpack.c.b16 %v2614, %v2613
        %v2656 = vpack.c.b16 %v2616, %v2615
        %v2657 = vpack.c.b16 %v2618, %v2617
        %v2658 = vpack.c.b16 %v2620, %v2619
        %v2659 = vpack.c.b16 %v2622, %v2621
        %v2660 = vpack.c.b16 %v2624, %v2623
        %v2661 = vpack.c.b16 %v2626, %v2625
        %v2662 = vpack.c.b16 %v2628, %v2627
        %v2663 = vpack.c.b16 %v2630, %v2629
        %v2664 = vpack.c.b16 %v2632, %v2631
        %2697 = vmatprep.subr.bf16.mxu0 0
        %2698 = vmatpush1.bf16.msra.mxu0 %v2640
        %2699 = vmatprep.subr.bf16.mxu0 0
        %2700 = vmatpush1.bf16.msra.mxu0 %v2639
        %2701 = vmatprep.subr.bf16.mxu0 0
        %2702 = vmatpush1.bf16.msra.mxu0 %v2638
        %2703 = vmatprep.subr.bf16.mxu0 0
        %2704 = vmatpush1.bf16.msra.mxu0 %v2637
        %2705 = vmatprep.subr.bf16.mxu0 0
        %2706 = vmatpush1.bf16.msra.mxu0 %v2636
        %2707 = vmatprep.subr.bf16.mxu0 0
        %2708 = vmatpush1.bf16.msra.mxu0 %v2635
        %2709 = vmatprep.subr.bf16.mxu0 0
        %2710 = vmatpush1.bf16.msra.mxu0 %v2634
        %2711 = vmatprep.subr.bf16.mxu0 0
        %2712 = vmatpush1.bf16.msra.mxu0 %v2633
        %2713 = vmatprep.subr.bf16.mxu0 0
        %2714 = vmatpush2.bf16.msra.mxu0 %v2648
        %2715 = vmatprep.subr.bf16.mxu0 0
        %2716 = vmatpush2.bf16.msra.mxu0 %v2647
        %2717 = vmatprep.subr.bf16.mxu0 0
        %2718 = vmatpush2.bf16.msra.mxu0 %v2646
        %2719 = vmatprep.subr.bf16.mxu0 0
        %2720 = vmatpush2.bf16.msra.mxu0 %v2645
        %2721 = vmatprep.subr.bf16.mxu0 0
        %2722 = vmatpush2.bf16.msra.mxu0 %v2644
        %2723 = vmatprep.subr.bf16.mxu0 0
        %2724 = vmatpush2.bf16.msra.mxu0 %v2643
        %2725 = vmatprep.subr.bf16.mxu0 0
        %2726 = vmatpush2.bf16.msra.mxu0 %v2642
        %2727 = vmatprep.subr.bf16.mxu0 0
        %2728 = vmatpush2.bf16.msra.mxu0 %v2641
        %2729 = vmatprep.mubr.bf16.mxu0 %v2474
        %2730 = vmatmul.mubr.bf16.gmra.mxu0 %v2473
        %v2731 = vpop.f32.mrf.mxu0
        %v2732 = vadd.f32 0.0, %v2731
        %v2733 = vpop.f32.mrf.mxu0
        %v2734 = vpop.f32.mrf.mxu0
        %v2735 = vadd.f32 0.0, %v2734
        %v2736 = vpop.f32.mrf.mxu0
        %2737 = vmatprep.mubr.bf16.mxu0 %v2478
        %2738 = vmatmul.mubr.bf16.gmra.mxu0 %v2477
        %v2739 = vpop.f32.mrf.mxu0
        %v2740 = vadd.f32 0.0, %v2739
        %v2741 = vpop.f32.mrf.mxu0
        %v2742 = vpop.f32.mrf.mxu0
        %v2743 = vadd.f32 0.0, %v2742
        %v2744 = vpop.f32.mrf.mxu0
        %2745 = vmatprep.mubr.bf16.mxu0 %v2482
        %2746 = vmatmul.mubr.bf16.gmra.mxu0 %v2481
        %v2747 = vpop.f32.mrf.mxu0
        %v2748 = vadd.f32 0.0, %v2747
        %v2749 = vpop.f32.mrf.mxu0
        %v2750 = vpop.f32.mrf.mxu0
        %v2751 = vadd.f32 0.0, %v2750
        %v2752 = vpop.f32.mrf.mxu0
        %2753 = vmatprep.mubr.bf16.mxu0 %v2486
        %2754 = vmatmul.mubr.bf16.gmra.mxu0 %v2485
        %v2755 = vpop.f32.mrf.mxu0
        %v2756 = vadd.f32 0.0, %v2755
        %v2757 = vpop.f32.mrf.mxu0
        %v2758 = vpop.f32.mrf.mxu0
        %v2759 = vadd.f32 0.0, %v2758
        %v2760 = vpop.f32.mrf.mxu0
        %2761 = vmatprep.mubr.bf16.mxu0 %v2490
        %2762 = vmatmul.mubr.bf16.gmra.mxu0 %v2489
        %v2763 = vpop.f32.mrf.mxu0
        %v2764 = vadd.f32 0.0, %v2763
        %v2765 = vpop.f32.mrf.mxu0
        %v2766 = vpop.f32.mrf.mxu0
        %v2767 = vadd.f32 0.0, %v2766
        %v2768 = vpop.f32.mrf.mxu0
        %2769 = vmatprep.mubr.bf16.mxu0 %v2494
        %2770 = vmatmul.mubr.bf16.gmra.mxu0 %v2493
        %v2771 = vpop.f32.mrf.mxu0
        %v2772 = vadd.f32 0.0, %v2771
        %v2773 = vpop.f32.mrf.mxu0
        %v2774 = vpop.f32.mrf.mxu0
        %v2775 = vadd.f32 0.0, %v2774
        %v2776 = vpop.f32.mrf.mxu0
        %2777 = vmatprep.mubr.bf16.mxu0 %v2498
        %2778 = vmatmul.mubr.bf16.gmra.mxu0 %v2497
        %v2779 = vpop.f32.mrf.mxu0
        %v2780 = vadd.f32 0.0, %v2779
        %v2781 = vpop.f32.mrf.mxu0
        %v2782 = vpop.f32.mrf.mxu0
        %v2783 = vadd.f32 0.0, %v2782
        %v2784 = vpop.f32.mrf.mxu0
        %2785 = vmatprep.mubr.bf16.mxu0 %v2502
        %2786 = vmatmul.mubr.bf16.gmra.mxu0 %v2501
        %v2787 = vpop.f32.mrf.mxu0
        %v2788 = vadd.f32 0.0, %v2787
        %v2789 = vpop.f32.mrf.mxu0
        %v2790 = vpop.f32.mrf.mxu0
        %v2791 = vadd.f32 0.0, %v2790
        %v2792 = vpop.f32.mrf.mxu0
        %2793 = vdwg.mxu0
        %2794 = vmatprep.subr.bf16.mxu0 0
        %2795 = vmatpush1.bf16.msra.mxu0 %v2656
        %2796 = vmatprep.subr.bf16.mxu0 0
        %2797 = vmatpush1.bf16.msra.mxu0 %v2655
        %2798 = vmatprep.subr.bf16.mxu0 0
        %2799 = vmatpush1.bf16.msra.mxu0 %v2654
        %2800 = vmatprep.subr.bf16.mxu0 0
        %2801 = vmatpush1.bf16.msra.mxu0 %v2653
        %2802 = vmatprep.subr.bf16.mxu0 0
        %2803 = vmatpush1.bf16.msra.mxu0 %v2652
        %2804 = vmatprep.subr.bf16.mxu0 0
        %2805 = vmatpush1.bf16.msra.mxu0 %v2651
        %2806 = vmatprep.subr.bf16.mxu0 0
        %2807 = vmatpush1.bf16.msra.mxu0 %v2650
        %2808 = vmatprep.subr.bf16.mxu0 0
        %2809 = vmatpush1.bf16.msra.mxu0 %v2649
        %2810 = vmatprep.subr.bf16.mxu0 0
        %2811 = vmatpush2.bf16.msra.mxu0 %v2664
        %2812 = vmatprep.subr.bf16.mxu0 0
        %2813 = vmatpush2.bf16.msra.mxu0 %v2663
        %2814 = vmatprep.subr.bf16.mxu0 0
        %2815 = vmatpush2.bf16.msra.mxu0 %v2662
        %2816 = vmatprep.subr.bf16.mxu0 0
        %2817 = vmatpush2.bf16.msra.mxu0 %v2661
        %2818 = vmatprep.subr.bf16.mxu0 0
        %2819 = vmatpush2.bf16.msra.mxu0 %v2660
        %2820 = vmatprep.subr.bf16.mxu0 0
        %2821 = vmatpush2.bf16.msra.mxu0 %v2659
        %2822 = vmatprep.subr.bf16.mxu0 0
        %2823 = vmatpush2.bf16.msra.mxu0 %v2658
        %2824 = vmatprep.subr.bf16.mxu0 0
        %2825 = vmatpush2.bf16.msra.mxu0 %v2657
        %2826 = vmatprep.mubr.bf16.mxu0 %v2476
        %2827 = vmatmul.mubr.bf16.gmra.mxu0 %v2475
        %v2828 = vpop.f32.mrf.mxu0
        %v2829 = vadd.f32 %v2732, %v2828
        %v2830 = vpop.f32.mrf.mxu0
        %v2831 = vpop.f32.mrf.mxu0
        %v2832 = vadd.f32 %v2735, %v2831
        %v2833 = vpop.f32.mrf.mxu0
        %2834 = vmatprep.mubr.bf16.mxu0 %v2480
        %2835 = vmatmul.mubr.bf16.gmra.mxu0 %v2479
        %v2836 = vpop.f32.mrf.mxu0
        %v2837 = vadd.f32 %v2740, %v2836
        %v2838 = vpop.f32.mrf.mxu0
        %v2839 = vpop.f32.mrf.mxu0
        %v2840 = vadd.f32 %v2743, %v2839
        %v2841 = vpop.f32.mrf.mxu0
        %2842 = vmatprep.mubr.bf16.mxu0 %v2484
        %2843 = vmatmul.mubr.bf16.gmra.mxu0 %v2483
        %v2844 = vpop.f32.mrf.mxu0
        %v2845 = vadd.f32 %v2748, %v2844
        %v2846 = vpop.f32.mrf.mxu0
        %v2847 = vpop.f32.mrf.mxu0
        %v2848 = vadd.f32 %v2751, %v2847
        %v2849 = vpop.f32.mrf.mxu0
        %2850 = vmatprep.mubr.bf16.mxu0 %v2488
        %2851 = vmatmul.mubr.bf16.gmra.mxu0 %v2487
        %v2852 = vpop.f32.mrf.mxu0
        %v2853 = vadd.f32 %v2756, %v2852
        %v2854 = vpop.f32.mrf.mxu0
        %v2855 = vpop.f32.mrf.mxu0
        %v2856 = vadd.f32 %v2759, %v2855
        %v2857 = vpop.f32.mrf.mxu0
        %2858 = vmatprep.mubr.bf16.mxu0 %v2492
        %2859 = vmatmul.mubr.bf16.gmra.mxu0 %v2491
        %v2860 = vpop.f32.mrf.mxu0
        %v2861 = vadd.f32 %v2764, %v2860
        %v2862 = vpop.f32.mrf.mxu0
        %v2863 = vpop.f32.mrf.mxu0
        %v2864 = vadd.f32 %v2767, %v2863
        %v2865 = vpop.f32.mrf.mxu0
        %2866 = vmatprep.mubr.bf16.mxu0 %v2496
        %2867 = vmatmul.mubr.bf16.gmra.mxu0 %v2495
        %v2868 = vpop.f32.mrf.mxu0
        %v2869 = vadd.f32 %v2772, %v2868
        %v2870 = vpop.f32.mrf.mxu0
        %v2871 = vpop.f32.mrf.mxu0
        %v2872 = vadd.f32 %v2775, %v2871
        %v2873 = vpop.f32.mrf.mxu0
        %2874 = vmatprep.mubr.bf16.mxu0 %v2500
        %2875 = vmatmul.mubr.bf16.gmra.mxu0 %v2499
        %v2876 = vpop.f32.mrf.mxu0
        %v2877 = vadd.f32 %v2780, %v2876
        %v2878 = vpop.f32.mrf.mxu0
        %v2879 = vpop.f32.mrf.mxu0
        %v2880 = vadd.f32 %v2783, %v2879
        %v2881 = vpop.f32.mrf.mxu0
        %2882 = vmatprep.mubr.bf16.mxu0 %v2504
        %2883 = vmatmul.mubr.bf16.gmra.mxu0 %v2503
        %v2884 = vpop.f32.mrf.mxu0
        %v2885 = vadd.f32 %v2788, %v2884
        %v2886 = vpop.f32.mrf.mxu0
        %v2887 = vpop.f32.mrf.mxu0
        %v2888 = vadd.f32 %v2791, %v2887
        %v2889 = vpop.f32.mrf.mxu0
        %2890 = vdwg.mxu0
        %v2891 = vmax.f32 %v2829, %v2837
        %v2892 = vmax.f32 %v2832, %v2840
        %v2893 = vmax.f32 %v2891, %v2845
        %v2894 = vmax.f32 %v2892, %v2848
        %v2895 = vmax.f32 %v2893, %v2853
        %v2896 = vmax.f32 %v2894, %v2856
        %v2897 = vmax.f32 %v2895, %v2896
        %v2898 = vrot.slane %v2897, 4
        %v2899 = vmax.f32 %v2897, %v2898
        %v2900 = vrot.slane %v2899, 2
        %v2901 = vmax.f32 %v2899, %v2900
        %v2902 = vrot.slane %v2901, 1
        %v2903 = vmax.f32 %v2901, %v2902
        %v2904 = vmax.f32 %v2861, %v2869
        %v2905 = vmax.f32 %v2864, %v2872
        %v2906 = vmax.f32 %v2904, %v2877
        %v2907 = vmax.f32 %v2905, %v2880
        %v2908 = vmax.f32 %v2906, %v2885
        %v2909 = vmax.f32 %v2907, %v2888
        %v2910 = vmax.f32 %v2908, %v2909
        %v2911 = vrot.slane %v2910, 4
        %v2912 = vmax.f32 %v2910, %v2911
        %v2913 = vrot.slane %v2912, 2
        %v2914 = vmax.f32 %v2912, %v2913
        %v2915 = vrot.slane %v2914, 1
        %v2916 = vmax.f32 %v2914, %v2915
        %v2917 = vld [vmem:[%s9] sm:$0x1]
        %v2919 = vlaneseq
        %v2920 = vshrl.u32 %v2919, 7
        %v2921 = vsub.s32 0, %v2920
        %v2922 = vrot.slane %v2917, %v2921
        %v2924 = vadd.f32 %v2903, %v2922
        %v2925 = vadd.f32 %v2916, %v2922
        %v2928 = vrot.slane %v2925, 7
        %v2929 = vsel %vm1796, %v2928, %v2924
        %2931 = vst [vmem:[%s401] sm:$0x3] %v2929
        %p2932 = scmp.lt.s32.totalorder %s23, 1
        %s2933 = scalar_select %p2932, %s23, 1
        %s2934 = smul.addr %s2933, 2
        %s2935 = scalar_lea.vmem %s10, %s2934
        // Predicated region
        $region73: #{_lambda_.2} parent=59 // pred_check
          %p2936 = pneg %p256
        $region74: #{_lambda_.2} parent=59 // pred_check_branch
          %2938 = sbr.rel (%p2936) target = $region76
        $region75: #{_lambda_.2} parent=59 // pred_region
          _
        $region76: #{_lambda_.2} parent=59 // pred_fallthru
          _
      $region60: #{_lambda_.2} parent=5 // pred_fallthru
        _
      %p2939 = scmp.le.s32.totalorder 2, %s18
      // Predicated region
      $region77: #{_lambda_.2} parent=5 // pred_check
        %p2940 = pneg %p2939
      $region78: #{_lambda_.2} parent=5 // pred_check_branch
        %2942 = sbr.rel (%p2940) target = $region80
      $region79: #{_lambda_.2} parent=5 // pred_region
        %s2943 = ssub.s32 %s18, 2
        // Predicated region
        $region81: #{_lambda_.2} parent=79 // pred_check
          %p2944 = pneg %p262
        $region82: #{_lambda_.2} parent=79 // pred_check_branch
          %2946 = sbr.rel (%p2944) target = $region84
        $region83: #{_lambda_.2} parent=79 // pred_region
          %p2947 = scmp.lt.s32.totalorder %s24, 1
          %s2948 = scalar_select %p2947, %s24, 1
          %s2949 = smul.addr %s2948, 2
          %s2950 = scalar_lea.vmem %s10, %s2949
        $region84: #{_lambda_.2} parent=79 // pred_fallthru
          _
      $region80: #{_lambda_.2} parent=5 // pred_fallthru
        _
    $region6: #{_lambda_.2} parent=1 // loop_footer
      %s22 = sadd.s32 1, %s18
    $region7: #{_lambda_.2} parent=1 // loop_footer_branch
      %17 = sbr.rel target = $region3
    $region8: #{_lambda_.2} parent=1 // loop_exit
      _
    %2951 = vsyncpa [#allocation3], 1
    %s2952 = scalar_lea.sflag [#allocation3], 1
    %2953 = vsyncpa %s2952, 1
    %2954 = vsyncpa [#allocation5], 1

</llo_original>
